<compile_context>
chip_gen: v6e
topology: v6e:2x2x1
jax: 0.10.0
libtpu: 0.0.40
codegen_flags: <defaults>
</compile_context>

<pallas_src>
import jax
import jax.numpy as jnp
from jax.experimental import pallas as pl
from jax.experimental.pallas import tpu as pltpu


# ----------------------------------------------------------------------------
# Helpers
# ----------------------------------------------------------------------------
def bn_fold(gamma, beta, mean, var, eps=1e-5):
    scale = gamma / jnp.sqrt(var + eps)
    bias = beta - mean * scale
    return scale, bias


def _round_up(x, m):
    return ((x + m - 1) // m) * m


def _vmem_capacity_bytes():
    # Device-aware budget; defensive fallback to the smallest generation (v7x).
    try:
        return int(pltpu.get_tpu_info().vmem_capacity_bytes)
    except Exception:
        return 64 * 1024 * 1024


def _tap_geometry(dilations, H, W):
    """Static tap bookkeeping for the dilated 3x3 convs.

    Returns (pad, offsets, has_off, live) where offsets[b] lists the 8
    off-centre (dy, dx) shifts of branch b (k = 0..8, k != 4, in k order).
    A tap whose shifted window cannot intersect the valid image (|dy| >= H or
    |dx| >= W) contributes exactly zero: its offset is clamped to (0, 0) and
    its weight block is zeroed at pack time.  `pad` is the effective halo,
    rounded up to a sublane multiple so the centre tap stays 8-aligned.
    """
    pad_eff = 0
    offsets, has_off, live = [], [], []
    for d in dilations:
        offs, mask = [], []
        for k in range(9):
            if k == 4:
                continue
            ky, kx = divmod(k, 3)
            dy, dx = (ky - 1) * d, (kx - 1) * d
            alive = (abs(dy) < H) and (abs(dx) < W)
            if alive:
                pad_eff = max(pad_eff, abs(dy), abs(dx))
                offs.append((dy, dx))
            else:
                offs.append((0, 0))
            mask.append(alive)
        offsets.append(offs)
        live.append(mask)
        has_off.append(any(mask))
    pad = _round_up(pad_eff, 8) if pad_eff else 0
    return pad, offsets, has_off, live


def _pick_row_tile(H, W, Cin, inner, proj_dim, n_dil, Hp, Wp, weight_bytes, budget):
    c_out = (n_dil + 2) * inner
    p_out = n_dil * proj_dim

    def est(th):
        m = th * W
        resident_x = 2 * Hp * Wp * Cin * 2                      # padded image (bf16, dbl-buf)
        outs = 2 * m * (c_out + p_out) * 2                       # bf16 outputs (dbl-buf)
        temps = m * (8 * Cin * 2 + c_out * 4 + c_out * 2)        # stacked taps + f32 temporaries
        return resident_x + outs + temps + weight_bytes

    cands = [c for c in (256, 128, 64, 32, 16, 8, 4, 2, 1)
             if c <= H and H % c == 0 and (c == H or (c * W) % 8 == 0)]
    if not cands:
        return H
    for c in cands:
        if est(c) <= budget:
            return c
    return cands[-1]


# ----------------------------------------------------------------------------
# Fused MEP kernel: one (image, row-band) step computes
#   branch2 1x1 conv  +  centre taps of all dilated convs      (1 fused matmul)
#   off-centre taps of every live dilated branch                (1 matmul each)
#   the 3 projections                                           (1 matmul each)
# and writes one concatenated aspp slab + one concatenated proj slab (bf16).
# ----------------------------------------------------------------------------
def _make_mep_kernel(*, th, W, Cin, inner, proj_dim, n_dil, pad, offsets, has_off):
    M = th * W

    def kernel(xpad_ref, f1_ref, wc_ref, woff_ref, bcat_ref, wproj_ref,
               bpcat_ref, aspp_ref, proj_ref):
        t = pl.program_id(1)
        r0 = pl.multiple_of(t * th, th)        # top row of this band (unpadded coords)

        def tap(dy, dx):
            v = xpad_ref[pl.ds(r0 + pad + dy, th), pl.ds(pad + dx, W), :]
            return v.reshape(M, Cin)

        # Branch-2 (1x1 conv) and the centre tap of every dilated branch share
        # the identical LHS: one wide matmul, N = (1 + n_dil) * inner.
        xc = tap(0, 0)
        center = jnp.dot(xc, wc_ref[...], preferred_element_type=jnp.float32)

        pre = [center[:, 0:inner]]                                    # branch 2
        for b in range(n_dil):
            c_b = center[:, (1 + b) * inner:(2 + b) * inner]
            if has_off[b]:
                # Stack the 8 off-centre taps along K -> single matmul; the MXU
                # accumulates internally (no chained f32 VPU adds).
                taps = jnp.concatenate([tap(dy, dx) for dy, dx in offsets[b]],
                                       axis=-1)                        # (M, 8*Cin)
                c_b = c_b + jnp.dot(taps, woff_ref[b],
                                    preferred_element_type=jnp.float32)
            pre.append(c_b)
        feats = jnp.maximum(jnp.concatenate(pre, axis=-1) + bcat_ref[...], 0.0)

        # Branch 1 (global pool -> 1x1 conv -> ReLU; bilinear-from-1x1 with
        # align_corners=True is an exact broadcast) is computed per image in
        # the wrapper; placed here so aspp is one lane-contiguous store.
        f1 = jnp.broadcast_to(f1_ref[...], (M, inner))
        aspp_ref[...] = jnp.concatenate([f1, feats], axis=-1).astype(aspp_ref.dtype)

        # 1x1 projections of the dilated-branch features, one fused slab store.
        pjs = []
        for b in range(n_dil):
            fb = feats[:, (1 + b) * inner:(2 + b) * inner].astype(jnp.bfloat16)
            pjs.append(jnp.dot(fb, wproj_ref[b], preferred_element_type=jnp.float32))
        pj = jnp.maximum(jnp.concatenate(pjs, axis=-1) + bpcat_ref[...], 0.0)
        proj_ref[...] = pj.astype(proj_ref.dtype)

    return kernel


# ----------------------------------------------------------------------------
# MEP forward
# ----------------------------------------------------------------------------
def mep_forward(x_nchw, params):
    dilations = params["dilations"]
    n_dil = len(dilations)
    assert n_dil == 3, "MEP returns exactly (aspp_out, proj3, proj4, proj5)"
    N, Cin, H, W = x_nchw.shape
    inner = params["w2"].shape[1]
    proj_dim = params["wproj"].shape[2]
    c_out = (n_dil + 2) * inner

    x = jnp.transpose(x_nchw, (0, 2, 3, 1)).astype(jnp.float32)       # NHWC

    # Branch 1: AdaptiveAvgPool(1,1) -> 1x1 conv -> BN -> ReLU.  A tiny (N, Cin)
    # matmul: plain JAX, no kernel launch.
    pooled = jnp.mean(x, axis=(1, 2))
    f1 = jnp.maximum(pooled @ params["w1"] + params["b1"], 0.0).reshape(N, 1, inner)

    # Static tap geometry: effective halo + pruned zero-contribution taps.
    pad, offsets, has_off, live = _tap_geometry(dilations, H, W)
    Hp, Wp = H + 2 * pad, W + 2 * pad
    x_pad = x if pad == 0 else jnp.pad(x, ((0, 0), (pad, pad), (pad, pad), (0, 0)))
    x_pad = x_pad.astype(jnp.bfloat16)

    # Weight packing (BN scale already folded, bf16):
    #   wc    : centre-tap fusion [w2 | wdil_b[1,1] ...]   -> (Cin, (1+nd)*inner)
    #   woff  : 8 off-centre taps stacked along K per branch -> (nd, 8*Cin, inner)
    wdil = params["wdil"]                                    # (nd, 3, 3, Cin, inner)
    wc = jnp.concatenate([params["w2"]] + [wdil[b, 1, 1] for b in range(n_dil)],
                         axis=1)
    woff_blocks = []
    for b in range(n_dil):
        blocks, i = [], 0
        for k in range(9):
            if k == 4:
                continue
            ky, kx = divmod(k, 3)
            wk = wdil[b, ky, kx]
            blocks.append(wk if live[b][i] else jnp.zeros_like(wk))
            i += 1
        woff_blocks.append(jnp.concatenate(blocks, axis=0))   # (8*Cin, inner)
    woff = jnp.stack(woff_blocks)                              # (nd, 8*Cin, inner)
    b_cat = jnp.concatenate([params["b2"].reshape(1, inner),
                             params["bdil"].reshape(1, n_dil * inner)], axis=1)
    wproj = params["wproj"]                                    # (nd, inner, proj)
    bproj_cat = params["bproj"].reshape(1, n_dil * proj_dim)

    # Device-aware VMEM budgeting.
    vmem_cap = _vmem_capacity_bytes()
    vmem_limit = int(min(vmem_cap, 128 * 1024 * 1024)) * 3 // 4
    weight_bytes = (2 * (wc.size + woff.size + wproj.size) * 2
                    + 2 * (b_cat.size + bproj_cat.size + inner) * 4)
    th = _pick_row_tile(H, W, Cin, inner, proj_dim, n_dil, Hp, Wp,
                        weight_bytes, int(vmem_limit * 0.8))
    num_t = H // th

    kernel = _make_mep_kernel(th=th, W=W, Cin=Cin, inner=inner,
                              proj_dim=proj_dim, n_dil=n_dil, pad=pad,
                              offsets=offsets, has_off=has_off)

    grid_spec = pltpu.PrefetchScalarGridSpec(
        num_scalar_prefetch=0,
        grid=(N, num_t),
        in_specs=[
            # Full padded image per n; the block index does not change with t,
            # so it is fetched once per image and stays VMEM resident.
            pl.BlockSpec((None, Hp, Wp, Cin), lambda n, t: (n, 0, 0, 0)),
            pl.BlockSpec((None, 1, inner), lambda n, t: (n, 0, 0)),
            pl.BlockSpec((Cin, (1 + n_dil) * inner), lambda n, t: (0, 0)),
            pl.BlockSpec((n_dil, 8 * Cin, inner), lambda n, t: (0, 0, 0)),
            pl.BlockSpec((1, (1 + n_dil) * inner), lambda n, t: (0, 0)),
            pl.BlockSpec((n_dil, inner, proj_dim), lambda n, t: (0, 0, 0)),
            pl.BlockSpec((1, n_dil * proj_dim), lambda n, t: (0, 0)),
        ],
        out_specs=(
            pl.BlockSpec((None, th * W, c_out), lambda n, t: (n, t, 0)),
            pl.BlockSpec((None, th * W, n_dil * proj_dim), lambda n, t: (n, t, 0)),
        ),
    )

    aspp_flat, proj_flat = pl.pallas_call(
        kernel,
        out_shape=(
            jax.ShapeDtypeStruct((N, H * W, c_out), jnp.bfloat16),
            jax.ShapeDtypeStruct((N, H * W, n_dil * proj_dim), jnp.bfloat16),
        ),
        grid_spec=grid_spec,
        compiler_params=pltpu.CompilerParams(
            # Both axes are fully independent (no cross-step state): parallel
            # so a multi-TensorCore chip can shard either axis.
            dimension_semantics=("parallel", "parallel"),
            vmem_limit_bytes=vmem_limit,
        ),
    )(x_pad, f1, wc, woff, b_cat, wproj, bproj_cat)

    def to_nchw(flat, c):
        return jnp.transpose(flat.reshape(N, H, W, c), (0, 3, 1, 2))

    aspp = to_nchw(aspp_flat, c_out)
    proj = to_nchw(proj_flat, n_dil * proj_dim)
    # Outputs stay bf16 (halved store traffic); cast downstream only if needed.
    return (aspp,
            proj[:, 0:proj_dim],
            proj[:, proj_dim:2 * proj_dim],
            proj[:, 2 * proj_dim:3 * proj_dim])


# ----------------------------------------------------------------------------
# Plain-JAX reference (same folded bf16 params, same math) for verification.
# ----------------------------------------------------------------------------
def mep_reference(x_nchw, params):
    dilations = params["dilations"]
    dmax = max(dilations)
    N, Cin, H, W = x_nchw.shape
    inner = params["w2"].shape[1]
    proj_dim = params["wproj"].shape[2]
    M = N * H * W

    x = jnp.transpose(x_nchw, (0, 2, 3, 1)).astype(jnp.float32)
    pooled = jnp.mean(x, axis=(1, 2))
    f1 = jnp.maximum(pooled @ params["w1"] + params["b1"], 0.0)
    feat1 = jnp.broadcast_to(f1[:, None, None, :], (N, H, W, inner))

    xb = x.astype(jnp.bfloat16)
    feat2 = jnp.maximum(
        jnp.dot(xb.reshape(M, Cin), params["w2"],
                preferred_element_type=jnp.float32) + params["b2"], 0.0
    ).reshape(N, H, W, inner)

    xpad = jnp.pad(x, ((0, 0), (dmax, dmax), (dmax, dmax), (0, 0))).astype(jnp.bfloat16)
    feats, projs = [], []
    for b, d in enumerate(dilations):
        acc = jnp.zeros((N, H, W, inner), jnp.float32)
        for ky in range(3):
            for kx in range(3):
                ry = dmax + (ky - 1) * d
                cx = dmax + (kx - 1) * d
                tap = xpad[:, ry:ry + H, cx:cx + W, :]
                acc = acc + jnp.dot(tap.reshape(M, Cin), params["wdil"][b, ky, kx],
                                    preferred_element_type=jnp.float32
                                    ).reshape(N, H, W, inner)
        feat = jnp.maximum(acc + params["bdil"][b], 0.0)
        pj = jnp.maximum(
            jnp.dot(feat.reshape(M, inner).astype(jnp.bfloat16),
                    params["wproj"][b], preferred_element_type=jnp.float32)
            + params["bproj"][b], 0.0).reshape(N, H, W, proj_dim)
        feats.append(feat)
        projs.append(pj)

    aspp = jnp.concatenate([feat1, feat2] + feats, axis=-1)
    to_nchw = lambda tln: jnp.transpose(tln, (0, 3, 1, 2))
    return to_nchw(aspp), to_nchw(projs[0]), to_nchw(projs[1]), to_nchw(projs[2])


# ----------------------------------------------------------------------------
# Deterministic parameters (BN folded in eval mode, bf16 matmul weights)
# ----------------------------------------------------------------------------
def make_params(key, in_planes, inner_planes, proj_dim, dilations):
    keys = iter(jax.random.split(key, 16))

    def conv_w(shape):
        return 0.1 * jax.random.normal(next(keys), shape, jnp.float32)

    def bn(c):
        k = next(keys)
        g = 1.0 + 0.05 * jax.random.normal(jax.random.fold_in(k, 0), (c,), jnp.float32)
        b = 0.05 * jax.random.normal(jax.random.fold_in(k, 1), (c,), jnp.float32)
        m = 0.05 * jax.random.normal(jax.random.fold_in(k, 2), (c,), jnp.float32)
        v = 1.0 + 0.1 * jnp.abs(jax.random.normal(jax.random.fold_in(k, 3), (c,), jnp.float32))
        return bn_fold(g, b, m, v)

    w1 = conv_w((in_planes, inner_planes)); s1, b1 = bn(inner_planes)
    w2 = conv_w((in_planes, inner_planes)); s2, b2 = bn(inner_planes)

    wdil, bdil, wproj, bproj = [], [], [], []
    for _ in dilations:
        wcv = conv_w((3, 3, in_planes, inner_planes))      # HWIO
        sc, bc = bn(inner_planes)
        wp = conv_w((inner_planes, proj_dim))
        sp, bp = bn(proj_dim)
        wdil.append(wcv * sc)                              # BN scale folded (out channels)
        bdil.append(bc)
        wproj.append(wp * sp)
        bproj.append(bp)

    return {
        "dilations": tuple(dilations),
        "w1": w1 * s1, "b1": b1,                                   # f32 (tiny branch)
        "w2": (w2 * s2).astype(jnp.bfloat16), "b2": b2,
        "wdil": jnp.stack(wdil).astype(jnp.bfloat16),              # (nd, 3, 3, Cin, inner)
        "bdil": jnp.stack(bdil),                                   # (nd, inner)
        "wproj": jnp.stack(wproj).astype(jnp.bfloat16),            # (nd, inner, proj)
        "bproj": jnp.stack(bproj),                                 # (nd, proj)
    }


if __name__ == "__main__":
    key = jax.random.PRNGKey(0)
    N, Cin, H, W = 2, 4, 16, 16
    inner_planes, proj_dim = 32, 16
    dilations = (12, 24, 36)

    k_x, k_p = jax.random.split(key)
    x = jax.random.normal(k_x, (N, Cin, H, W), jnp.float32)     # NCHW, as in PyTorch
    params = make_params(k_p, Cin, inner_planes, proj_dim, dilations)

    outs = mep_forward(x, params)
    jax.block_until_ready(outs)
    aspp_out, proj3, proj4, proj5 = outs

    assert aspp_out.shape == (N, 5 * inner_planes, H, W)
    assert proj3.shape == (N, proj_dim, H, W)
    assert proj4.shape == (N, proj_dim, H, W)
    assert proj5.shape == (N, proj_dim, H, W)

    refs = mep_reference(x, params)
    for name, got, want in zip(("aspp", "proj3", "proj4", "proj5"), outs, refs):
        err = float(jnp.max(jnp.abs(got.astype(jnp.float32) - want)))
        assert err < 3e-2, f"{name} mismatch: max abs err {err}"

    print("KERNEL_OK")
</pallas_src>

<mosaic_0001>
module attributes {stable_mosaic.version = 11 : i64} {
  func.func @kernel(%arg0: i32, %arg1: i32, %arg2: memref<1x48x48x4xbf16, #tpu.memory_space<vmem>>, %arg3: memref<1x1x32xf32, #tpu.memory_space<vmem>>, %arg4: memref<4x128xbf16, #tpu.memory_space<vmem>>, %arg5: memref<3x32x32xbf16, #tpu.memory_space<vmem>>, %arg6: memref<1x128xf32, #tpu.memory_space<vmem>>, %arg7: memref<3x32x16xbf16, #tpu.memory_space<vmem>>, %arg8: memref<1x48xf32, #tpu.memory_space<vmem>>, %arg9: memref<1x256x160xbf16, #tpu.memory_space<vmem>>, %arg10: memref<1x256x48xbf16, #tpu.memory_space<vmem>>) attributes {dimension_semantics = [#tpu.dimension_semantics<parallel>, #tpu.dimension_semantics<parallel>], iteration_bounds = array<i64: 2, 1>, scalar_prefetch = 0 : i64, scratch_operands = 0 : i64, tpu.core_type = #tpu.core_type<tc>, window_params = [{transform_indices = @transform_0, window_bounds = array<i64: 1, 48, 48, 4>}, {transform_indices = @transform_1, window_bounds = array<i64: 1, 1, 32>}, {pipeline_mode = #tpu.pipeline_mode<synchronous>, transform_indices = @transform_2, window_bounds = array<i64: 4, 128>}, {pipeline_mode = #tpu.pipeline_mode<synchronous>, transform_indices = @transform_3, window_bounds = array<i64: 3, 32, 32>}, {pipeline_mode = #tpu.pipeline_mode<synchronous>, transform_indices = @transform_4, window_bounds = array<i64: 1, 128>}, {pipeline_mode = #tpu.pipeline_mode<synchronous>, transform_indices = @transform_5, window_bounds = array<i64: 3, 32, 16>}, {pipeline_mode = #tpu.pipeline_mode<synchronous>, transform_indices = @transform_6, window_bounds = array<i64: 1, 48>}, {transform_indices = @transform_7, window_bounds = array<i64: 1, 256, 160>}, {transform_indices = @transform_8, window_bounds = array<i64: 1, 256, 48>}]} {
    %c16_i32 = arith.constant 16 : i32
    %0 = arith.muli %arg1, %c16_i32 : i32
    %1 = tpu.assume_multiple %0, 16 : i32
    %c16_i32_0 = arith.constant 16 : i32
    %2 = arith.addi %1, %c16_i32_0 : i32
    %c0_i32 = arith.constant 0 : i32
    %3 = arith.addi %2, %c0_i32 : i32
    %c0 = arith.constant 0 : index
    %4 = arith.index_cast %3 : i32 to index
    %c16 = arith.constant 16 : index
    %c0_1 = arith.constant 0 : index
    %5 = vector.load %arg2[%c0, %4, %c16, %c0_1] : memref<1x48x48x4xbf16, #tpu.memory_space<vmem>>, vector<1x16x16x4xbf16>
    %6 = vector.shape_cast %5 : vector<1x16x16x4xbf16> to vector<16x16x4xbf16>
    %7 = vector.shape_cast %6 : vector<16x16x4xbf16> to vector<256x4xbf16>
    %c0_2 = arith.constant 0 : index
    %c0_3 = arith.constant 0 : index
    %8 = vector.load %arg4[%c0_2, %c0_3] : memref<4x128xbf16, #tpu.memory_space<vmem>>, vector<4x128xbf16>
    %cst = arith.constant dense<0.000000e+00> : vector<256x128xf32>
    %9 = tpu.matmul %7, %8, %cst {dimension_numbers = #tpu.dot_dimension_numbers<[1], [0], [0], [1], [0, 0, 1, 1], [], []>} : vector<256x4xbf16>, vector<4x128xbf16>, vector<256x128xf32> -> vector<256x128xf32>
    %10 = vector.extract_strided_slice %9 {offsets = [0, 0], sizes = [256, 32], strides = [1, 1]} : vector<256x128xf32> to vector<256x32xf32>
    %11 = vector.extract_strided_slice %9 {offsets = [0, 32], sizes = [256, 32], strides = [1, 1]} : vector<256x128xf32> to vector<256x32xf32>
    %c16_i32_4 = arith.constant 16 : i32
    %12 = arith.addi %1, %c16_i32_4 : i32
    %c-12_i32 = arith.constant -12 : i32
    %13 = arith.addi %12, %c-12_i32 : i32
    %c0_5 = arith.constant 0 : index
    %14 = arith.index_cast %13 : i32 to index
    %c4 = arith.constant 4 : index
    %c0_6 = arith.constant 0 : index
    %15 = vector.load %arg2[%c0_5, %14, %c4, %c0_6] : memref<1x48x48x4xbf16, #tpu.memory_space<vmem>>, vector<1x16x16x4xbf16>
    %16 = vector.shape_cast %15 : vector<1x16x16x4xbf16> to vector<16x16x4xbf16>
    %17 = vector.shape_cast %16 : vector<16x16x4xbf16> to vector<256x4xbf16>
    %c16_i32_7 = arith.constant 16 : i32
    %18 = arith.addi %1, %c16_i32_7 : i32
    %c-12_i32_8 = arith.constant -12 : i32
    %19 = arith.addi %18, %c-12_i32_8 : i32
    %c0_9 = arith.constant 0 : index
    %20 = arith.index_cast %19 : i32 to index
    %c16_10 = arith.constant 16 : index
    %c0_11 = arith.constant 0 : index
    %21 = vector.load %arg2[%c0_9, %20, %c16_10, %c0_11] : memref<1x48x48x4xbf16, #tpu.memory_space<vmem>>, vector<1x16x16x4xbf16>
    %22 = vector.shape_cast %21 : vector<1x16x16x4xbf16> to vector<16x16x4xbf16>
    %23 = vector.shape_cast %22 : vector<16x16x4xbf16> to vector<256x4xbf16>
    %c16_i32_12 = arith.constant 16 : i32
    %24 = arith.addi %1, %c16_i32_12 : i32
    %c-12_i32_13 = arith.constant -12 : i32
    %25 = arith.addi %24, %c-12_i32_13 : i32
    %c0_14 = arith.constant 0 : index
    %26 = arith.index_cast %25 : i32 to index
    %c28 = arith.constant 28 : index
    %c0_15 = arith.constant 0 : index
    %27 = vector.load %arg2[%c0_14, %26, %c28, %c0_15] : memref<1x48x48x4xbf16, #tpu.memory_space<vmem>>, vector<1x16x16x4xbf16>
    %28 = vector.shape_cast %27 : vector<1x16x16x4xbf16> to vector<16x16x4xbf16>
    %29 = vector.shape_cast %28 : vector<16x16x4xbf16> to vector<256x4xbf16>
    %c16_i32_16 = arith.constant 16 : i32
    %30 = arith.addi %1, %c16_i32_16 : i32
    %c0_i32_17 = arith.constant 0 : i32
    %31 = arith.addi %30, %c0_i32_17 : i32
    %c0_18 = arith.constant 0 : index
    %32 = arith.index_cast %31 : i32 to index
    %c4_19 = arith.constant 4 : index
    %c0_20 = arith.constant 0 : index
    %33 = vector.load %arg2[%c0_18, %32, %c4_19, %c0_20] : memref<1x48x48x4xbf16, #tpu.memory_space<vmem>>, vector<1x16x16x4xbf16>
    %34 = vector.shape_cast %33 : vector<1x16x16x4xbf16> to vector<16x16x4xbf16>
    %35 = vector.shape_cast %34 : vector<16x16x4xbf16> to vector<256x4xbf16>
    %c16_i32_21 = arith.constant 16 : i32
    %36 = arith.addi %1, %c16_i32_21 : i32
    %c0_i32_22 = arith.constant 0 : i32
    %37 = arith.addi %36, %c0_i32_22 : i32
    %c0_23 = arith.constant 0 : index
    %38 = arith.index_cast %37 : i32 to index
    %c28_24 = arith.constant 28 : index
    %c0_25 = arith.constant 0 : index
    %39 = vector.load %arg2[%c0_23, %38, %c28_24, %c0_25] : memref<1x48x48x4xbf16, #tpu.memory_space<vmem>>, vector<1x16x16x4xbf16>
    %40 = vector.shape_cast %39 : vector<1x16x16x4xbf16> to vector<16x16x4xbf16>
    %41 = vector.shape_cast %40 : vector<16x16x4xbf16> to vector<256x4xbf16>
    %c16_i32_26 = arith.constant 16 : i32
    %42 = arith.addi %1, %c16_i32_26 : i32
    %c12_i32 = arith.constant 12 : i32
    %43 = arith.addi %42, %c12_i32 : i32
    %c0_27 = arith.constant 0 : index
    %44 = arith.index_cast %43 : i32 to index
    %c4_28 = arith.constant 4 : index
    %c0_29 = arith.constant 0 : index
    %45 = vector.load %arg2[%c0_27, %44, %c4_28, %c0_29] : memref<1x48x48x4xbf16, #tpu.memory_space<vmem>>, vector<1x16x16x4xbf16>
    %46 = vector.shape_cast %45 : vector<1x16x16x4xbf16> to vector<16x16x4xbf16>
    %47 = vector.shape_cast %46 : vector<16x16x4xbf16> to vector<256x4xbf16>
    %c16_i32_30 = arith.constant 16 : i32
    %48 = arith.addi %1, %c16_i32_30 : i32
    %c12_i32_31 = arith.constant 12 : i32
    %49 = arith.addi %48, %c12_i32_31 : i32
    %c0_32 = arith.constant 0 : index
    %50 = arith.index_cast %49 : i32 to index
    %c16_33 = arith.constant 16 : index
    %c0_34 = arith.constant 0 : index
    %51 = vector.load %arg2[%c0_32, %50, %c16_33, %c0_34] : memref<1x48x48x4xbf16, #tpu.memory_space<vmem>>, vector<1x16x16x4xbf16>
    %52 = vector.shape_cast %51 : vector<1x16x16x4xbf16> to vector<16x16x4xbf16>
    %53 = vector.shape_cast %52 : vector<16x16x4xbf16> to vector<256x4xbf16>
    %c16_i32_35 = arith.constant 16 : i32
    %54 = arith.addi %1, %c16_i32_35 : i32
    %c12_i32_36 = arith.constant 12 : i32
    %55 = arith.addi %54, %c12_i32_36 : i32
    %c0_37 = arith.constant 0 : index
    %56 = arith.index_cast %55 : i32 to index
    %c28_38 = arith.constant 28 : index
    %c0_39 = arith.constant 0 : index
    %57 = vector.load %arg2[%c0_37, %56, %c28_38, %c0_39] : memref<1x48x48x4xbf16, #tpu.memory_space<vmem>>, vector<1x16x16x4xbf16>
    %58 = vector.shape_cast %57 : vector<1x16x16x4xbf16> to vector<16x16x4xbf16>
    %59 = vector.shape_cast %58 : vector<16x16x4xbf16> to vector<256x4xbf16>
    %60 = tpu.concatenate %17, %23, %29, %35, %41, %47, %53, %59 in 1 : vector<256x4xbf16>, vector<256x4xbf16>, vector<256x4xbf16>, vector<256x4xbf16>, vector<256x4xbf16>, vector<256x4xbf16>, vector<256x4xbf16>, vector<256x4xbf16> -> vector<256x32xbf16>
    %c0_40 = arith.constant 0 : index
    %c0_41 = arith.constant 0 : index
    %c0_42 = arith.constant 0 : index
    %61 = vector.load %arg5[%c0_40, %c0_41, %c0_42] : memref<3x32x32xbf16, #tpu.memory_space<vmem>>, vector<1x32x32xbf16>
    %62 = vector.shape_cast %61 : vector<1x32x32xbf16> to vector<32x32xbf16>
    %cst_43 = arith.constant dense<0.000000e+00> : vector<256x32xf32>
    %63 = tpu.matmul %60, %62, %cst_43 {dimension_numbers = #tpu.dot_dimension_numbers<[1], [0], [0], [1], [0, 0, 1, 1], [], []>} : vector<256x32xbf16>, vector<32x32xbf16>, vector<256x32xf32> -> vector<256x32xf32>
    %64 = arith.addf %11, %63 : vector<256x32xf32>
    %65 = vector.extract_strided_slice %9 {offsets = [0, 64], sizes = [256, 32], strides = [1, 1]} : vector<256x128xf32> to vector<256x32xf32>
    %66 = vector.extract_strided_slice %9 {offsets = [0, 96], sizes = [256, 32], strides = [1, 1]} : vector<256x128xf32> to vector<256x32xf32>
    %67 = tpu.concatenate %10, %64, %65, %66 in 1 : vector<256x32xf32>, vector<256x32xf32>, vector<256x32xf32>, vector<256x32xf32> -> vector<256x128xf32>
    %c0_44 = arith.constant 0 : index
    %c0_45 = arith.constant 0 : index
    %68 = vector.load %arg6[%c0_44, %c0_45] : memref<1x128xf32, #tpu.memory_space<vmem>>, vector<1x128xf32>
    %69 = vector.broadcast %68 : vector<1x128xf32> to vector<256x128xf32>
    %70 = arith.addf %67, %69 : vector<256x128xf32>
    %cst_46 = arith.constant 0.000000e+00 : f32
    %71 = vector.broadcast %cst_46 : f32 to vector<256x128xf32>
    %72 = arith.maximumf %70, %71 : vector<256x128xf32>
    %c0_47 = arith.constant 0 : index
    %c0_48 = arith.constant 0 : index
    %c0_49 = arith.constant 0 : index
    %73 = vector.load %arg3[%c0_47, %c0_48, %c0_49] : memref<1x1x32xf32, #tpu.memory_space<vmem>>, vector<1x1x32xf32>
    %74 = vector.shape_cast %73 : vector<1x1x32xf32> to vector<1x32xf32>
    %75 = vector.shape_cast %74 : vector<1x32xf32> to vector<1x32xf32>
    %76 = vector.broadcast %75 : vector<1x32xf32> to vector<256x32xf32>
    %77 = tpu.concatenate %76, %72 in 1 : vector<256x32xf32>, vector<256x128xf32> -> vector<256x160xf32>
    %78 = arith.truncf %77 : vector<256x160xf32> to vector<256x160xbf16>
    %c0_50 = arith.constant 0 : index
    %c0_51 = arith.constant 0 : index
    %c0_52 = arith.constant 0 : index
    %79 = vector.load %arg9[%c0_50, %c0_51, %c0_52] : memref<1x256x160xbf16, #tpu.memory_space<vmem>>, vector<1x256x160xbf16>
    %80 = vector.shape_cast %79 : vector<1x256x160xbf16> to vector<256x160xbf16>
    %81 = vector.shape_cast %78 : vector<256x160xbf16> to vector<1x256x160xbf16>
    tpu.vector_store %arg9[%c0_50, %c0_51, %c0_52], %81 {strides = array<i32>} : memref<1x256x160xbf16, #tpu.memory_space<vmem>>, vector<1x256x160xbf16>,
    %82 = vector.extract_strided_slice %72 {offsets = [0, 32], sizes = [256, 32], strides = [1, 1]} : vector<256x128xf32> to vector<256x32xf32>
    %83 = arith.truncf %82 : vector<256x32xf32> to vector<256x32xbf16>
    %c0_53 = arith.constant 0 : index
    %c0_54 = arith.constant 0 : index
    %c0_55 = arith.constant 0 : index
    %84 = vector.load %arg7[%c0_53, %c0_54, %c0_55] : memref<3x32x16xbf16, #tpu.memory_space<vmem>>, vector<1x32x16xbf16>
    %85 = vector.shape_cast %84 : vector<1x32x16xbf16> to vector<32x16xbf16>
    %cst_56 = arith.constant dense<0.000000e+00> : vector<256x16xf32>
    %86 = tpu.matmul %83, %85, %cst_56 {dimension_numbers = #tpu.dot_dimension_numbers<[1], [0], [0], [1], [0, 0, 1, 1], [], []>} : vector<256x32xbf16>, vector<32x16xbf16>, vector<256x16xf32> -> vector<256x16xf32>
    %87 = vector.extract_strided_slice %72 {offsets = [0, 64], sizes = [256, 32], strides = [1, 1]} : vector<256x128xf32> to vector<256x32xf32>
    %88 = arith.truncf %87 : vector<256x32xf32> to vector<256x32xbf16>
    %c1 = arith.constant 1 : index
    %c0_57 = arith.constant 0 : index
    %c0_58 = arith.constant 0 : index
    %89 = vector.load %arg7[%c1, %c0_57, %c0_58] : memref<3x32x16xbf16, #tpu.memory_space<vmem>>, vector<1x32x16xbf16>
    %90 = vector.shape_cast %89 : vector<1x32x16xbf16> to vector<32x16xbf16>
    %cst_59 = arith.constant dense<0.000000e+00> : vector<256x16xf32>
    %91 = tpu.matmul %88, %90, %cst_59 {dimension_numbers = #tpu.dot_dimension_numbers<[1], [0], [0], [1], [0, 0, 1, 1], [], []>} : vector<256x32xbf16>, vector<32x16xbf16>, vector<256x16xf32> -> vector<256x16xf32>
    %92 = vector.extract_strided_slice %72 {offsets = [0, 96], sizes = [256, 32], strides = [1, 1]} : vector<256x128xf32> to vector<256x32xf32>
    %93 = arith.truncf %92 : vector<256x32xf32> to vector<256x32xbf16>
    %c2 = arith.constant 2 : index
    %c0_60 = arith.constant 0 : index
    %c0_61 = arith.constant 0 : index
    %94 = vector.load %arg7[%c2, %c0_60, %c0_61] : memref<3x32x16xbf16, #tpu.memory_space<vmem>>, vector<1x32x16xbf16>
    %95 = vector.shape_cast %94 : vector<1x32x16xbf16> to vector<32x16xbf16>
    %cst_62 = arith.constant dense<0.000000e+00> : vector<256x16xf32>
    %96 = tpu.matmul %93, %95, %cst_62 {dimension_numbers = #tpu.dot_dimension_numbers<[1], [0], [0], [1], [0, 0, 1, 1], [], []>} : vector<256x32xbf16>, vector<32x16xbf16>, vector<256x16xf32> -> vector<256x16xf32>
    %97 = tpu.concatenate %86, %91, %96 in 1 : vector<256x16xf32>, vector<256x16xf32>, vector<256x16xf32> -> vector<256x48xf32>
    %c0_63 = arith.constant 0 : index
    %c0_64 = arith.constant 0 : index
    %98 = vector.load %arg8[%c0_63, %c0_64] : memref<1x48xf32, #tpu.memory_space<vmem>>, vector<1x48xf32>
    %99 = vector.broadcast %98 : vector<1x48xf32> to vector<256x48xf32>
    %100 = arith.addf %97, %99 : vector<256x48xf32>
    %cst_65 = arith.constant 0.000000e+00 : f32
    %101 = vector.broadcast %cst_65 : f32 to vector<256x48xf32>
    %102 = arith.maximumf %100, %101 : vector<256x48xf32>
    %103 = arith.truncf %102 : vector<256x48xf32> to vector<256x48xbf16>
    %c0_66 = arith.constant 0 : index
    %c0_67 = arith.constant 0 : index
    %c0_68 = arith.constant 0 : index
    %104 = vector.load %arg10[%c0_66, %c0_67, %c0_68] : memref<1x256x48xbf16, #tpu.memory_space<vmem>>, vector<1x256x48xbf16>
    %105 = vector.shape_cast %104 : vector<1x256x48xbf16> to vector<256x48xbf16>
    %106 = vector.shape_cast %103 : vector<256x48xbf16> to vector<1x256x48xbf16>
    tpu.vector_store %arg10[%c0_66, %c0_67, %c0_68], %106 {strides = array<i32>} : memref<1x256x48xbf16, #tpu.memory_space<vmem>>, vector<1x256x48xbf16>,
    return
  }
  func.func @transform_0(%arg0: i32, %arg1: i32) -> (i32, i32, i32, i32) {
    %c0_i32 = arith.constant 0 : i32
    %c0_i32_0 = arith.constant 0 : i32
    %c0_i32_1 = arith.constant 0 : i32
    %c0_i32_2 = arith.constant 0 : i32
    return %arg0, %c0_i32, %c0_i32_0, %c0_i32_1 : i32, i32, i32, i32
  }
  func.func @transform_1(%arg0: i32, %arg1: i32) -> (i32, i32, i32) {
    %c0_i32 = arith.constant 0 : i32
    %c0_i32_0 = arith.constant 0 : i32
    %c0_i32_1 = arith.constant 0 : i32
    return %arg0, %c0_i32, %c0_i32_0 : i32, i32, i32
  }
  func.func @transform_2(%arg0: i32, %arg1: i32) -> (i32, i32) {
    %c0_i32 = arith.constant 0 : i32
    %c0_i32_0 = arith.constant 0 : i32
    %c0_i32_1 = arith.constant 0 : i32
    return %c0_i32, %c0_i32_0 : i32, i32
  }
  func.func @transform_3(%arg0: i32, %arg1: i32) -> (i32, i32, i32) {
    %c0_i32 = arith.constant 0 : i32
    %c0_i32_0 = arith.constant 0 : i32
    %c0_i32_1 = arith.constant 0 : i32
    %c0_i32_2 = arith.constant 0 : i32
    return %c0_i32, %c0_i32_0, %c0_i32_1 : i32, i32, i32
  }
  func.func @transform_4(%arg0: i32, %arg1: i32) -> (i32, i32) {
    %c0_i32 = arith.constant 0 : i32
    %c0_i32_0 = arith.constant 0 : i32
    %c0_i32_1 = arith.constant 0 : i32
    return %c0_i32, %c0_i32_0 : i32, i32
  }
  func.func @transform_5(%arg0: i32, %arg1: i32) -> (i32, i32, i32) {
    %c0_i32 = arith.constant 0 : i32
    %c0_i32_0 = arith.constant 0 : i32
    %c0_i32_1 = arith.constant 0 : i32
    %c0_i32_2 = arith.constant 0 : i32
    return %c0_i32, %c0_i32_0, %c0_i32_1 : i32, i32, i32
  }
  func.func @transform_6(%arg0: i32, %arg1: i32) -> (i32, i32) {
    %c0_i32 = arith.constant 0 : i32
    %c0_i32_0 = arith.constant 0 : i32
    %c0_i32_1 = arith.constant 0 : i32
    return %c0_i32, %c0_i32_0 : i32, i32
  }
  func.func @transform_7(%arg0: i32, %arg1: i32) -> (i32, i32, i32) {
    %c0_i32 = arith.constant 0 : i32
    %c0_i32_0 = arith.constant 0 : i32
    return %arg0, %arg1, %c0_i32 : i32, i32, i32
  }
  func.func @transform_8(%arg0: i32, %arg1: i32) -> (i32, i32, i32) {
    %c0_i32 = arith.constant 0 : i32
    %c0_i32_0 = arith.constant 0 : i32
    return %arg0, %arg1, %c0_i32 : i32, i32, i32
  }
}

</mosaic_0001>

<llo_original>
// kernel: tpu_custom_call.1
$region0: #{tpu_custom_call.1}
  #allocation0 [shape = 'u32[]', space=smem, size = 0x4, offset = 0x4, fixed_abs, tag = 'smem constant byte address 0x4 - core index']
  #allocation1 [shape = 'u32[144,128]{1,0:T(1,128)}', space=vmem, size = 0x12000, scoped, tag = 'internal scratch']
  %s0 = inlined_call_operand.vmem [shape: bf16[2,48,48,4], index: 0, kind: input, shape index: {}]
  %s1 = inlined_call_operand.vmem [shape: f32[2,1,32], index: 1, kind: input, shape index: {}]
  %s2 = inlined_call_operand.vmem [shape: bf16[4,128], index: 2, kind: input, shape index: {}]
  %s3 = inlined_call_operand.vmem [shape: bf16[3,32,32], index: 3, kind: input, shape index: {}]
  %s4 = inlined_call_operand.vmem [shape: f32[1,128], index: 4, kind: input, shape index: {}]
  %s5 = inlined_call_operand.vmem [shape: bf16[3,32,16], index: 5, kind: input, shape index: {}]
  %s6 = inlined_call_operand.vmem [shape: f32[1,48], index: 6, kind: input, shape index: {}]
  %s7 = inlined_call_operand.vmem [shape: bf16[2,256,160], index: 7, kind: output, shape index: {0}]
  %s8 = inlined_call_operand.vmem [shape: bf16[2,256,48], index: 8, kind: output, shape index: {1}]
  %9 = xla_tuple %s7, %s8
  %s10 = sld [smem:[#allocation0]]
  $region69: #{tpu_custom_call.1} parent=0
    _
  %s12 = ssub.s32 1, %s10
  %s13 = scalar_select 0, %s12, %s10
  loop: start=0, step=1, limit=4
  $region2: #{tpu_custom_call.1} parent=0 // loop_pre_header
    _
  $region3: #{tpu_custom_call.1} parent=0 // loop_header
    %s15 = sphi 0, %s19
    %p16 = scmp.ge.s32.totalorder %s15, 4
    %s22 = sphi 0, %s34
    %s23 = sphi 0, %s30
    %s24 = sphi 0, %s22
    %s25 = sphi 0, %s23
    %s26 = sphi 0, %s24
    %s27 = sphi 0, %s25
    %s37 = sphi 0, %s39
    %s40 = sphi 0, %s37
    %s41 = sphi 0, %s40
    %s57 = sphi 0, %s41
    %s63 = sphi 0, %s65
    %s66 = sphi 0, %s63
    %s67 = sphi 0, %s66
    %s83 = sphi 0, %s67
    %s87 = sphi 0, %s87
    %s89 = sphi 0, %s87
    %s90 = sphi 0, %s89
    %s104 = sphi 0, %s90
    %s108 = sphi 0, %s108
    %s110 = sphi 0, %s108
    %s111 = sphi 0, %s110
    %s125 = sphi 0, %s111
    %s129 = sphi 0, %s129
    %s131 = sphi 0, %s129
    %s132 = sphi 0, %s131
    %s146 = sphi 0, %s132
    %s150 = sphi 0, %s150
    %s152 = sphi 0, %s150
    %s153 = sphi 0, %s152
    %s167 = sphi 0, %s153
    %s171 = sphi 0, %s171
    %s173 = sphi 0, %s171
    %s174 = sphi 0, %s173
    %s188 = sphi 0, %s174
    %s196 = sphi 0, %s198
    %s199 = sphi 0, %s196
    %s200 = sphi 0, %s199
    %s216 = sphi 0, %s200
    %s224 = sphi 0, %s226
    %s227 = sphi 0, %s224
    %s228 = sphi 0, %s227
    %s244 = sphi 0, %s228
  $region4: #{tpu_custom_call.1} parent=0 // loop_header_branch
    %18 = sbr.rel (%p16) target = $region8
  $region5: #{tpu_custom_call.1} parent=0 // loop_body
    %s20 = ssub.s32 %s15, 1
    %s21 = ssub.s32 %s15, 2
    %s28 = sadd.s32 1, %s23
    %p29 = scmp.ge.s32.totalorder %s28, 1
    %s30 = scalar_select %p29, 0, %s28
    %s31 = sadd.s32 1, %s22
    %s32 = scalar_select %p29, %s31, %s22
    %p33 = scmp.ge.s32.totalorder %s32, 2
    %s34 = scalar_select %p33, 0, %s32
    %s35 = ssub.s32 %s22, %s34
    %p36 = scmp.eq.s32.totalorder %s35, 0
    %s38 = sadd.s32 %s37, 1
    %s39 = scalar_select %p36, %s37, %s38
    %p42 = pneg %p36
    %p43 = scmp.eq.s32.totalorder %s15, 1
    %p44 = por %p42, %p43
    %p45 = scmp.ne.s32.totalorder %s37, %s40
    %p46 = scmp.eq.s32.totalorder %s15, 0
    %p47 = por %p45, %p46
    %p48 = scmp.ne.s32.totalorder %s37, %s40
    %p49 = scmp.eq.s32.totalorder %s20, 1
    %p50 = por %p48, %p49
    %p51 = scmp.ne.s32.totalorder %s40, %s41
    %p52 = scmp.eq.s32.totalorder %s20, 0
    %p53 = por %p51, %p52
    %p54 = scmp.ne.s32.totalorder %s40, %s41
    %p55 = scmp.eq.s32.totalorder %s21, 1
    %p56 = por %p54, %p55
    %p58 = scmp.ne.s32.totalorder %s41, %s57
    %p59 = scmp.eq.s32.totalorder %s21, 0
    %p60 = por %p58, %p59
    %s61 = ssub.s32 %s22, %s34
    %p62 = scmp.eq.s32.totalorder %s61, 0
    %s64 = sadd.s32 %s63, 1
    %s65 = scalar_select %p62, %s63, %s64
    %p68 = pneg %p62
    %p69 = scmp.eq.s32.totalorder %s15, 1
    %p70 = por %p68, %p69
    %p71 = scmp.ne.s32.totalorder %s63, %s66
    %p72 = scmp.eq.s32.totalorder %s15, 0
    %p73 = por %p71, %p72
    %p74 = scmp.ne.s32.totalorder %s63, %s66
    %p75 = scmp.eq.s32.totalorder %s20, 1
    %p76 = por %p74, %p75
    %p77 = scmp.ne.s32.totalorder %s66, %s67
    %p78 = scmp.eq.s32.totalorder %s20, 0
    %p79 = por %p77, %p78
    %p80 = scmp.ne.s32.totalorder %s66, %s67
    %p81 = scmp.eq.s32.totalorder %s21, 1
    %p82 = por %p80, %p81
    %p84 = scmp.ne.s32.totalorder %s67, %s83
    %p85 = scmp.eq.s32.totalorder %s21, 0
    %p86 = por %p84, %p85
    %s88 = sadd.s32 %s87, 1
    %p91 = scmp.eq.s32.totalorder %s15, 1
    %p92 = scmp.ne.s32.totalorder %s87, %s89
    %p93 = scmp.eq.s32.totalorder %s15, 0
    %p94 = por %p92, %p93
    %p95 = scmp.ne.s32.totalorder %s87, %s89
    %p96 = scmp.eq.s32.totalorder %s20, 1
    %p97 = por %p95, %p96
    %p98 = scmp.ne.s32.totalorder %s89, %s90
    %p99 = scmp.eq.s32.totalorder %s20, 0
    %p100 = por %p98, %p99
    %p101 = scmp.ne.s32.totalorder %s89, %s90
    %p102 = scmp.eq.s32.totalorder %s21, 1
    %p103 = por %p101, %p102
    %p105 = scmp.ne.s32.totalorder %s90, %s104
    %p106 = scmp.eq.s32.totalorder %s21, 0
    %p107 = por %p105, %p106
    %s109 = sadd.s32 %s108, 1
    %p112 = scmp.eq.s32.totalorder %s15, 1
    %p113 = scmp.ne.s32.totalorder %s108, %s110
    %p114 = scmp.eq.s32.totalorder %s15, 0
    %p115 = por %p113, %p114
    %p116 = scmp.ne.s32.totalorder %s108, %s110
    %p117 = scmp.eq.s32.totalorder %s20, 1
    %p118 = por %p116, %p117
    %p119 = scmp.ne.s32.totalorder %s110, %s111
    %p120 = scmp.eq.s32.totalorder %s20, 0
    %p121 = por %p119, %p120
    %p122 = scmp.ne.s32.totalorder %s110, %s111
    %p123 = scmp.eq.s32.totalorder %s21, 1
    %p124 = por %p122, %p123
    %p126 = scmp.ne.s32.totalorder %s111, %s125
    %p127 = scmp.eq.s32.totalorder %s21, 0
    %p128 = por %p126, %p127
    %s130 = sadd.s32 %s129, 1
    %p133 = scmp.eq.s32.totalorder %s15, 1
    %p134 = scmp.ne.s32.totalorder %s129, %s131
    %p135 = scmp.eq.s32.totalorder %s15, 0
    %p136 = por %p134, %p135
    %p137 = scmp.ne.s32.totalorder %s129, %s131
    %p138 = scmp.eq.s32.totalorder %s20, 1
    %p139 = por %p137, %p138
    %p140 = scmp.ne.s32.totalorder %s131, %s132
    %p141 = scmp.eq.s32.totalorder %s20, 0
    %p142 = por %p140, %p141
    %p143 = scmp.ne.s32.totalorder %s131, %s132
    %p144 = scmp.eq.s32.totalorder %s21, 1
    %p145 = por %p143, %p144
    %p147 = scmp.ne.s32.totalorder %s132, %s146
    %p148 = scmp.eq.s32.totalorder %s21, 0
    %p149 = por %p147, %p148
    %s151 = sadd.s32 %s150, 1
    %p154 = scmp.eq.s32.totalorder %s15, 1
    %p155 = scmp.ne.s32.totalorder %s150, %s152
    %p156 = scmp.eq.s32.totalorder %s15, 0
    %p157 = por %p155, %p156
    %p158 = scmp.ne.s32.totalorder %s150, %s152
    %p159 = scmp.eq.s32.totalorder %s20, 1
    %p160 = por %p158, %p159
    %p161 = scmp.ne.s32.totalorder %s152, %s153
    %p162 = scmp.eq.s32.totalorder %s20, 0
    %p163 = por %p161, %p162
    %p164 = scmp.ne.s32.totalorder %s152, %s153
    %p165 = scmp.eq.s32.totalorder %s21, 1
    %p166 = por %p164, %p165
    %p168 = scmp.ne.s32.totalorder %s153, %s167
    %p169 = scmp.eq.s32.totalorder %s21, 0
    %p170 = por %p168, %p169
    %s172 = sadd.s32 %s171, 1
    %p175 = scmp.eq.s32.totalorder %s15, 1
    %p176 = scmp.ne.s32.totalorder %s171, %s173
    %p177 = scmp.eq.s32.totalorder %s15, 0
    %p178 = por %p176, %p177
    %p179 = scmp.ne.s32.totalorder %s171, %s173
    %p180 = scmp.eq.s32.totalorder %s20, 1
    %p181 = por %p179, %p180
    %p182 = scmp.ne.s32.totalorder %s173, %s174
    %p183 = scmp.eq.s32.totalorder %s20, 0
    %p184 = por %p182, %p183
    %p185 = scmp.ne.s32.totalorder %s173, %s174
    %p186 = scmp.eq.s32.totalorder %s21, 1
    %p187 = por %p185, %p186
    %p189 = scmp.ne.s32.totalorder %s174, %s188
    %p190 = scmp.eq.s32.totalorder %s21, 0
    %p191 = por %p189, %p190
    %s192 = ssub.s32 %s22, %s34
    %s193 = ssub.s32 %s23, %s30
    %s194 = sor.u32 %s192, %s193
    %p195 = scmp.eq.s32.totalorder %s194, 0
    %s197 = sadd.s32 %s196, 1
    %s198 = scalar_select %p195, %s196, %s197
    %p201 = pneg %p195
    %p202 = scmp.eq.s32.totalorder %s15, 1
    %p203 = por %p201, %p202
    %p204 = scmp.ne.s32.totalorder %s196, %s199
    %p205 = scmp.eq.s32.totalorder %s15, 0
    %p206 = por %p204, %p205
    %p207 = scmp.ne.s32.totalorder %s196, %s199
    %p208 = scmp.eq.s32.totalorder %s20, 1
    %p209 = por %p207, %p208
    %p210 = scmp.ne.s32.totalorder %s199, %s200
    %p211 = scmp.eq.s32.totalorder %s20, 0
    %p212 = por %p210, %p211
    %p213 = scmp.ne.s32.totalorder %s199, %s200
    %p214 = scmp.eq.s32.totalorder %s21, 1
    %p215 = por %p213, %p214
    %p217 = scmp.ne.s32.totalorder %s200, %s216
    %p218 = scmp.eq.s32.totalorder %s21, 0
    %p219 = por %p217, %p218
    %s220 = ssub.s32 %s22, %s34
    %s221 = ssub.s32 %s23, %s30
    %s222 = sor.u32 %s220, %s221
    %p223 = scmp.eq.s32.totalorder %s222, 0
    %s225 = sadd.s32 %s224, 1
    %s226 = scalar_select %p223, %s224, %s225
    %p229 = pneg %p223
    %p230 = scmp.eq.s32.totalorder %s15, 1
    %p231 = por %p229, %p230
    %p232 = scmp.ne.s32.totalorder %s224, %s227
    %p233 = scmp.eq.s32.totalorder %s15, 0
    %p234 = por %p232, %p233
    %p235 = scmp.ne.s32.totalorder %s224, %s227
    %p236 = scmp.eq.s32.totalorder %s20, 1
    %p237 = por %p235, %p236
    %p238 = scmp.ne.s32.totalorder %s227, %s228
    %p239 = scmp.eq.s32.totalorder %s20, 0
    %p240 = por %p238, %p239
    %p241 = scmp.ne.s32.totalorder %s227, %s228
    %p242 = scmp.eq.s32.totalorder %s21, 1
    %p243 = por %p241, %p242
    %p245 = scmp.ne.s32.totalorder %s228, %s244
    %p246 = scmp.eq.s32.totalorder %s21, 0
    %p247 = por %p245, %p246
    %p248 = scmp.le.s32.totalorder 1, %s15
    %p249 = scmp.lt.s32.totalorder %s15, 3
    %p250 = pnand %p248, %p249
    %p251 = pneg %p250
    // Predicated region
    $region9: #{tpu_custom_call.1} parent=5 // pred_check
      _
    $region10: #{tpu_custom_call.1} parent=5 // pred_check_branch
      %253 = sbr.rel (%p250) target = $region12
    $region11: #{tpu_custom_call.1} parent=5 // pred_region
      %s254 = ssub.s32 %s15, 1
      // Predicated region
      $region13: #{tpu_custom_call.1} parent=11 // pred_check
        %p255 = pneg %p100
      $region14: #{tpu_custom_call.1} parent=11 // pred_check_branch
        %257 = sbr.rel (%p255) target = $region16
      $region15: #{tpu_custom_call.1} parent=11 // pred_region
        _
      $region16: #{tpu_custom_call.1} parent=11 // pred_fallthru
        _
      // Predicated region
      $region17: #{tpu_custom_call.1} parent=11 // pred_check
        %p258 = pneg %p121
      $region18: #{tpu_custom_call.1} parent=11 // pred_check_branch
        %260 = sbr.rel (%p258) target = $region20
      $region19: #{tpu_custom_call.1} parent=11 // pred_region
        _
      $region20: #{tpu_custom_call.1} parent=11 // pred_fallthru
        _
      // Predicated region
      $region21: #{tpu_custom_call.1} parent=11 // pred_check
        %p261 = pneg %p142
      $region22: #{tpu_custom_call.1} parent=11 // pred_check_branch
        %263 = sbr.rel (%p261) target = $region24
      $region23: #{tpu_custom_call.1} parent=11 // pred_region
        _
      $region24: #{tpu_custom_call.1} parent=11 // pred_fallthru
        _
      // Predicated region
      $region25: #{tpu_custom_call.1} parent=11 // pred_check
        %p264 = pneg %p163
      $region26: #{tpu_custom_call.1} parent=11 // pred_check_branch
        %266 = sbr.rel (%p264) target = $region28
      $region27: #{tpu_custom_call.1} parent=11 // pred_region
        _
      $region28: #{tpu_custom_call.1} parent=11 // pred_fallthru
        _
      // Predicated region
      $region29: #{tpu_custom_call.1} parent=11 // pred_check
        %p267 = pneg %p184
      $region30: #{tpu_custom_call.1} parent=11 // pred_check_branch
        %269 = sbr.rel (%p267) target = $region32
      $region31: #{tpu_custom_call.1} parent=11 // pred_region
        _
      $region32: #{tpu_custom_call.1} parent=11 // pred_fallthru
        _
    $region12: #{tpu_custom_call.1} parent=5 // pred_fallthru
      _
    %p270 = scmp.lt.s32.totalorder %s15, 2
    // Predicated region
    $region33: #{tpu_custom_call.1} parent=5 // pred_check
      %p271 = pneg %p270
    $region34: #{tpu_custom_call.1} parent=5 // pred_check_branch
      %273 = sbr.rel (%p271) target = $region36
    $region35: #{tpu_custom_call.1} parent=5 // pred_region
      // Predicated region
      $region37: #{tpu_custom_call.1} parent=35 // pred_check
        %p274 = pneg %p47
      $region38: #{tpu_custom_call.1} parent=35 // pred_check_branch
        %276 = sbr.rel (%p274) target = $region40
      $region39: #{tpu_custom_call.1} parent=35 // pred_region
        %p277 = scmp.lt.s32.totalorder %s22, 1
        %s278 = scalar_select %p277, %s22, 1
        %s279 = smul.addr %s278, 288
        %s280 = smul.addr %s279, 4
        %s281 = scalar_lea.vmem %s0, %s280
      $region40: #{tpu_custom_call.1} parent=35 // pred_fallthru
        _
      // Predicated region
      $region41: #{tpu_custom_call.1} parent=35 // pred_check
        %p282 = pneg %p73
      $region42: #{tpu_custom_call.1} parent=35 // pred_check_branch
        %284 = sbr.rel (%p282) target = $region44
      $region43: #{tpu_custom_call.1} parent=35 // pred_region
        %p285 = scmp.lt.s32.totalorder %s22, 1
        %s286 = scalar_select %p285, %s22, 1
        %s287 = scalar_lea.vmem %s1, %s286
      $region44: #{tpu_custom_call.1} parent=35 // pred_fallthru
        _
    $region36: #{tpu_custom_call.1} parent=5 // pred_fallthru
      _
    %p288 = scmp.le.s32.totalorder 1, %s15
    %p289 = scmp.lt.s32.totalorder %s15, 3
    %p290 = pnand %p288, %p289
    %p291 = pneg %p290
    // Predicated region
    $region45: #{tpu_custom_call.1} parent=5 // pred_check
      _
    $region46: #{tpu_custom_call.1} parent=5 // pred_check_branch
      %293 = sbr.rel (%p290) target = $region48
    $region47: #{tpu_custom_call.1} parent=5 // pred_region
      %s294 = ssub.s32 %s15, 1
      %p295 = scmp.lt.s32.totalorder %s24, 1
      %s296 = scalar_select %p295, %s24, 1
      %s297 = smul.addr %s296, 288
      %s298 = smul.addr %s297, 4
      %s299 = scalar_lea.vmem %s0, %s298
      %p300 = pneg %p53
      %p301 = pneg %p50
      %p302 = scmp.lt.s32.totalorder %s24, 1
      %s303 = scalar_select %p302, %s24, 1
      %s304 = scalar_lea.vmem %s1, %s303
      %p305 = pneg %p79
      %p306 = pneg %p76
      %p307 = pneg %p100
      %p308 = pneg %p97
      %p309 = pneg %p121
      %p310 = pneg %p118
      %p311 = pneg %p142
      %p312 = pneg %p139
      %p313 = pneg %p163
      %p314 = pneg %p160
      %p315 = pneg %p184
      %p316 = pneg %p181
      %p317 = pneg %p212
      %p318 = pneg %p209
      %s319 = smul.u32 32, %s25
      %p320 = scmp.lt.s32.totalorder %s24, 1
      %s321 = scalar_select %p320, %s24, 1
      %p322 = scmp.lt.s32.totalorder %s319, 31
      %s323 = scalar_select %p322, %s319, 31
      %s324 = smul.addr %s323, 2
      %s325 = smul.addr %s321, 64
      %s326 = sadd.s32 %s324, %s325
      %s327 = smul.addr %s326, 4
      %s328 = scalar_lea.vmem %s7, %s327
      %p329 = pneg %p240
      %p330 = pneg %p237
      %s331 = smul.u32 32, %s25
      %p332 = scmp.lt.s32.totalorder %s24, 1
      %s333 = scalar_select %p332, %s24, 1
      %p334 = scmp.lt.s32.totalorder %s331, 31
      %s335 = scalar_select %p334, %s331, 31
      %s336 = smul.addr %s333, 32
      %s337 = sadd.s32 %s335, %s336
      %s338 = smul.addr %s337, 4
      %s339 = scalar_lea.vmem %s8, %s338
      %p340 = scmp.lt.s32.totalorder %s24, 1
      %s341 = scalar_select %p340, %s24, 1
      %s342 = smul.addr %s341, 288
      %s343 = smul.addr %s342, 4
      %s344 = scalar_lea.vmem %s0, %s343
      %p345 = scmp.lt.s32.totalorder %s24, 1
      %s346 = scalar_select %p345, %s24, 1
      %s347 = scalar_lea.vmem %s1, %s346
      %s348 = smul.u32 32, %s25
      %p349 = scmp.lt.s32.totalorder %s24, 1
      %s350 = scalar_select %p349, %s24, 1
      %p351 = scmp.lt.s32.totalorder %s348, 31
      %s352 = scalar_select %p351, %s348, 31
      %s353 = smul.addr %s352, 2
      %s354 = smul.addr %s350, 64
      %s355 = sadd.s32 %s353, %s354
      %s356 = smul.addr %s355, 4
      %s357 = scalar_lea.vmem %s7, %s356
      %s358 = smul.u32 32, %s25
      %s359 = smul.u32 32, %s25
      %p360 = scmp.lt.s32.totalorder %s24, 1
      %s361 = scalar_select %p360, %s24, 1
      %p362 = scmp.lt.s32.totalorder %s359, 31
      %s363 = scalar_select %p362, %s359, 31
      %s364 = smul.addr %s361, 32
      %s365 = sadd.s32 %s363, %s364
      %s366 = smul.addr %s365, 4
      %s367 = scalar_lea.vmem %s8, %s366
      %s368 = smul.u32 32, %s25
      %s370 = smul.u32 %s25, 16
      %s371 = sadd.s32 %s370, 16
      %s372 = smul.u32 %s371, 6
      %s373 = smul.addr %s372, 4
      %s374 = scalar_lea.vmem %s344, %s373
      %v375 = vld [vmem:[%s374 + $0x8] sm:$0xf]
      %v376 = vld [vmem:[%s374 + $0xc] sm:$0xf]
      %v377 = vld [vmem:[%s374 + $0x20] sm:$0xf]
      %v378 = vld [vmem:[%s374 + $0x24] sm:$0xf]
      %v379 = vld [vmem:[%s374 + $0x38] sm:$0xf]
      %v380 = vld [vmem:[%s374 + $0x3c] sm:$0xf]
      %v381 = vld [vmem:[%s374 + $0x50] sm:$0xf]
      %v382 = vld [vmem:[%s374 + $0x54] sm:$0xf]
      %v383 = vld [vmem:[%s374 + $0x68] sm:$0xf]
      %v384 = vld [vmem:[%s374 + $0x6c] sm:$0xf]
      %v385 = vld [vmem:[%s374 + $0x80] sm:$0xf]
      %v386 = vld [vmem:[%s374 + $0x84] sm:$0xf]
      %v387 = vld [vmem:[%s374 + $0x98] sm:$0xf]
      %v388 = vld [vmem:[%s374 + $0x9c] sm:$0xf]
      %v389 = vld [vmem:[%s374 + $0xb0] sm:$0xf]
      %v390 = vld [vmem:[%s374 + $0xb4] sm:$0xf]
      %v391 = vld [vmem:[%s374 + $0xc8] sm:$0xf]
      %v392 = vld [vmem:[%s374 + $0xcc] sm:$0xf]
      %v393 = vld [vmem:[%s374 + $0xe0] sm:$0xf]
      %v394 = vld [vmem:[%s374 + $0xe4] sm:$0xf]
      %v395 = vld [vmem:[%s374 + $0xf8] sm:$0xf]
      %v396 = vld [vmem:[%s374 + $0xfc] sm:$0xf]
      %v397 = vld [vmem:[%s374 + $0x110] sm:$0xf]
      %v398 = vld [vmem:[%s374 + $0x114] sm:$0xf]
      %v399 = vld [vmem:[%s374 + $0x128] sm:$0xf]
      %v400 = vld [vmem:[%s374 + $0x12c] sm:$0xf]
      %v401 = vld [vmem:[%s374 + $0x140] sm:$0xf]
      %v402 = vld [vmem:[%s374 + $0x144] sm:$0xf]
      %v403 = vld [vmem:[%s374 + $0x158] sm:$0xf]
      %v404 = vld [vmem:[%s374 + $0x15c] sm:$0xf]
      %v405 = vld [vmem:[%s374 + $0x170] sm:$0xf]
      %v406 = vld [vmem:[%s374 + $0x174] sm:$0xf]
      %v407 = vld [vmem:[%s2] sm:$0x3]
      %v440 = vunpack.c.l.b16 %v375
      %v441 = vunpack.c.l.b16 %v376
      %v442 = vunpack.c.l.b16 %v377
      %v443 = vunpack.c.l.b16 %v378
      %v444 = vunpack.c.l.b16 %v379
      %v445 = vunpack.c.l.b16 %v380
      %v446 = vunpack.c.l.b16 %v381
      %v447 = vunpack.c.l.b16 %v382
      %v448 = vunpack.c.l.b16 %v383
      %v449 = vunpack.c.l.b16 %v384
      %v450 = vunpack.c.l.b16 %v385
      %v451 = vunpack.c.l.b16 %v386
      %v452 = vunpack.c.l.b16 %v387
      %v453 = vunpack.c.l.b16 %v388
      %v454 = vunpack.c.l.b16 %v389
      %v455 = vunpack.c.l.b16 %v390
      %v456 = vunpack.c.l.b16 %v391
      %v457 = vunpack.c.l.b16 %v392
      %v458 = vunpack.c.l.b16 %v393
      %v459 = vunpack.c.l.b16 %v394
      %v460 = vunpack.c.l.b16 %v395
      %v461 = vunpack.c.l.b16 %v396
      %v462 = vunpack.c.l.b16 %v397
      %v463 = vunpack.c.l.b16 %v398
      %v464 = vunpack.c.l.b16 %v399
      %v465 = vunpack.c.l.b16 %v400
      %v466 = vunpack.c.l.b16 %v401
      %v467 = vunpack.c.l.b16 %v402
      %v468 = vunpack.c.l.b16 %v403
      %v469 = vunpack.c.l.b16 %v404
      %v470 = vunpack.c.l.b16 %v405
      %v471 = vunpack.c.l.b16 %v406
      %v472 = vpack.c.b16 %v441, %v440
      %v473 = vpack.c.b16 %v443, %v442
      %v474 = vpack.c.b16 %v445, %v444
      %v475 = vpack.c.b16 %v447, %v446
      %v476 = vpack.c.b16 %v449, %v448
      %v477 = vpack.c.b16 %v451, %v450
      %v478 = vpack.c.b16 %v453, %v452
      %v479 = vpack.c.b16 %v455, %v454
      %v480 = vpack.c.b16 %v457, %v456
      %v481 = vpack.c.b16 %v459, %v458
      %v482 = vpack.c.b16 %v461, %v460
      %v483 = vpack.c.b16 %v463, %v462
      %v484 = vpack.c.b16 %v465, %v464
      %v485 = vpack.c.b16 %v467, %v466
      %v486 = vpack.c.b16 %v469, %v468
      %v487 = vpack.c.b16 %v471, %v470
      %vm488 = vcmask 31744
      %v490 = vsel %vm488, %v472, 0
      %v493 = vsel %vm488, %v473, 0
      %v496 = vsel %vm488, %v474, 0
      %v499 = vsel %vm488, %v475, 0
      %v502 = vsel %vm488, %v476, 0
      %v505 = vsel %vm488, %v477, 0
      %v508 = vsel %vm488, %v478, 0
      %v511 = vsel %vm488, %v479, 0
      %v514 = vsel %vm488, %v480, 0
      %v517 = vsel %vm488, %v481, 0
      %v520 = vsel %vm488, %v482, 0
      %v523 = vsel %vm488, %v483, 0
      %v526 = vsel %vm488, %v484, 0
      %v529 = vsel %vm488, %v485, 0
      %v532 = vsel %vm488, %v486, 0
      %v535 = vsel %vm488, %v487, 0
      %vm537 = vcmask 1041408
      %v539 = vsel %vm537, %v407, 0
      %541 = vmatprep.subr.bf16.mxu0 0
      %542 = vmatpush1.bf16.msra.mxu0 0
      %543 = vmatprep.subr.bf16.mxu0 0
      %544 = vmatpush1.bf16.msra.mxu0 0
      %545 = vmatprep.subr.bf16.mxu0 0
      %546 = vmatpush1.bf16.msra.mxu0 0
      %547 = vmatprep.subr.bf16.mxu0 0
      %548 = vmatpush1.bf16.msra.mxu0 0
      %549 = vmatprep.subr.bf16.mxu0 0
      %550 = vmatpush1.bf16.msra.mxu0 0
      %551 = vmatprep.subr.bf16.mxu0 0
      %552 = vmatpush1.bf16.msra.mxu0 0
      %553 = vmatprep.subr.bf16.mxu0 0
      %554 = vmatpush1.bf16.msra.mxu0 0
      %555 = vmatprep.subr.bf16.mxu0 0
      %556 = vmatpush1.bf16.msra.mxu0 %v539
      %557 = vmatprep.subr.bf16.mxu0 0
      %558 = vmatpush2.bf16.msra.mxu0 0
      %559 = vmatprep.subr.bf16.mxu0 0
      %560 = vmatpush2.bf16.msra.mxu0 0
      %561 = vmatprep.subr.bf16.mxu0 0
      %562 = vmatpush2.bf16.msra.mxu0 0
      %563 = vmatprep.subr.bf16.mxu0 0
      %564 = vmatpush2.bf16.msra.mxu0 0
      %565 = vmatprep.subr.bf16.mxu0 0
      %566 = vmatpush2.bf16.msra.mxu0 0
      %567 = vmatprep.subr.bf16.mxu0 0
      %568 = vmatpush2.bf16.msra.mxu0 0
      %569 = vmatprep.subr.bf16.mxu0 0
      %570 = vmatpush2.bf16.msra.mxu0 0
      %571 = vmatprep.subr.bf16.mxu0 0
      %572 = vmatpush2.bf16.msra.mxu0 0
      %573 = vmatprep.mubr.bf16.mxu0 0
      %574 = vmatmul.mubr.bf16.gmra.mxu0 %v490
      %v575 = vpop.f32.mrf.mxu0
      %v576 = vadd.f32 0.0, %v575
      %v577 = vpop.f32.mrf.mxu0
      %v578 = vpop.f32.mrf.mxu0
      %v579 = vadd.f32 0.0, %v578
      %v580 = vpop.f32.mrf.mxu0
      %581 = vmatprep.mubr.bf16.mxu0 0
      %582 = vmatmul.mubr.bf16.gmra.mxu0 %v493
      %v583 = vpop.f32.mrf.mxu0
      %v584 = vadd.f32 0.0, %v583
      %v585 = vpop.f32.mrf.mxu0
      %v586 = vpop.f32.mrf.mxu0
      %v587 = vadd.f32 0.0, %v586
      %v588 = vpop.f32.mrf.mxu0
      %589 = vmatprep.mubr.bf16.mxu0 0
      %590 = vmatmul.mubr.bf16.gmra.mxu0 %v496
      %v591 = vpop.f32.mrf.mxu0
      %v592 = vadd.f32 0.0, %v591
      %v593 = vpop.f32.mrf.mxu0
      %v594 = vpop.f32.mrf.mxu0
      %v595 = vadd.f32 0.0, %v594
      %v596 = vpop.f32.mrf.mxu0
      %597 = vmatprep.mubr.bf16.mxu0 0
      %598 = vmatmul.mubr.bf16.gmra.mxu0 %v499
      %v599 = vpop.f32.mrf.mxu0
      %v600 = vadd.f32 0.0, %v599
      %v601 = vpop.f32.mrf.mxu0
      %v602 = vpop.f32.mrf.mxu0
      %v603 = vadd.f32 0.0, %v602
      %v604 = vpop.f32.mrf.mxu0
      %605 = vmatprep.mubr.bf16.mxu0 0
      %606 = vmatmul.mubr.bf16.gmra.mxu0 %v502
      %v607 = vpop.f32.mrf.mxu0
      %v608 = vadd.f32 0.0, %v607
      %v609 = vpop.f32.mrf.mxu0
      %v610 = vpop.f32.mrf.mxu0
      %v611 = vadd.f32 0.0, %v610
      %v612 = vpop.f32.mrf.mxu0
      %613 = vmatprep.mubr.bf16.mxu0 0
      %614 = vmatmul.mubr.bf16.gmra.mxu0 %v505
      %v615 = vpop.f32.mrf.mxu0
      %v616 = vadd.f32 0.0, %v615
      %v617 = vpop.f32.mrf.mxu0
      %v618 = vpop.f32.mrf.mxu0
      %v619 = vadd.f32 0.0, %v618
      %v620 = vpop.f32.mrf.mxu0
      %621 = vmatprep.mubr.bf16.mxu0 0
      %622 = vmatmul.mubr.bf16.gmra.mxu0 %v508
      %v623 = vpop.f32.mrf.mxu0
      %v624 = vadd.f32 0.0, %v623
      %v625 = vpop.f32.mrf.mxu0
      %v626 = vpop.f32.mrf.mxu0
      %v627 = vadd.f32 0.0, %v626
      %v628 = vpop.f32.mrf.mxu0
      %629 = vmatprep.mubr.bf16.mxu0 0
      %630 = vmatmul.mubr.bf16.gmra.mxu0 %v511
      %v631 = vpop.f32.mrf.mxu0
      %v632 = vadd.f32 0.0, %v631
      %v633 = vpop.f32.mrf.mxu0
      %v634 = vpop.f32.mrf.mxu0
      %v635 = vadd.f32 0.0, %v634
      %v636 = vpop.f32.mrf.mxu0
      %637 = vmatprep.mubr.bf16.mxu0 0
      %638 = vmatmul.mubr.bf16.gmra.mxu0 %v514
      %v639 = vpop.f32.mrf.mxu0
      %v640 = vadd.f32 0.0, %v639
      %v641 = vpop.f32.mrf.mxu0
      %v642 = vpop.f32.mrf.mxu0
      %v643 = vadd.f32 0.0, %v642
      %v644 = vpop.f32.mrf.mxu0
      %645 = vmatprep.mubr.bf16.mxu0 0
      %646 = vmatmul.mubr.bf16.gmra.mxu0 %v517
      %v647 = vpop.f32.mrf.mxu0
      %v648 = vadd.f32 0.0, %v647
      %v649 = vpop.f32.mrf.mxu0
      %v650 = vpop.f32.mrf.mxu0
      %v651 = vadd.f32 0.0, %v650
      %v652 = vpop.f32.mrf.mxu0
      %653 = vmatprep.mubr.bf16.mxu0 0
      %654 = vmatmul.mubr.bf16.gmra.mxu0 %v520
      %v655 = vpop.f32.mrf.mxu0
      %v656 = vadd.f32 0.0, %v655
      %v657 = vpop.f32.mrf.mxu0
      %v658 = vpop.f32.mrf.mxu0
      %v659 = vadd.f32 0.0, %v658
      %v660 = vpop.f32.mrf.mxu0
      %661 = vmatprep.mubr.bf16.mxu0 0
      %662 = vmatmul.mubr.bf16.gmra.mxu0 %v523
      %v663 = vpop.f32.mrf.mxu0
      %v664 = vadd.f32 0.0, %v663
      %v665 = vpop.f32.mrf.mxu0
      %v666 = vpop.f32.mrf.mxu0
      %v667 = vadd.f32 0.0, %v666
      %v668 = vpop.f32.mrf.mxu0
      %669 = vmatprep.mubr.bf16.mxu0 0
      %670 = vmatmul.mubr.bf16.gmra.mxu0 %v526
      %v671 = vpop.f32.mrf.mxu0
      %v672 = vadd.f32 0.0, %v671
      %v673 = vpop.f32.mrf.mxu0
      %v674 = vpop.f32.mrf.mxu0
      %v675 = vadd.f32 0.0, %v674
      %v676 = vpop.f32.mrf.mxu0
      %677 = vmatprep.mubr.bf16.mxu0 0
      %678 = vmatmul.mubr.bf16.gmra.mxu0 %v529
      %v679 = vpop.f32.mrf.mxu0
      %v680 = vadd.f32 0.0, %v679
      %v681 = vpop.f32.mrf.mxu0
      %v682 = vpop.f32.mrf.mxu0
      %v683 = vadd.f32 0.0, %v682
      %v684 = vpop.f32.mrf.mxu0
      %685 = vmatprep.mubr.bf16.mxu0 0
      %686 = vmatmul.mubr.bf16.gmra.mxu0 %v532
      %v687 = vpop.f32.mrf.mxu0
      %v688 = vadd.f32 0.0, %v687
      %v689 = vpop.f32.mrf.mxu0
      %v690 = vpop.f32.mrf.mxu0
      %v691 = vadd.f32 0.0, %v690
      %v692 = vpop.f32.mrf.mxu0
      %693 = vmatprep.mubr.bf16.mxu0 0
      %694 = vmatmul.mubr.bf16.gmra.mxu0 %v535
      %v695 = vpop.f32.mrf.mxu0
      %v696 = vadd.f32 0.0, %v695
      %v697 = vpop.f32.mrf.mxu0
      %v698 = vpop.f32.mrf.mxu0
      %v699 = vadd.f32 0.0, %v698
      %v700 = vpop.f32.mrf.mxu0
      %701 = vdwg.mxu0
      %s702 = sadd.s32 %s370, 4
      %s703 = smul.u32 %s702, 6
      %s704 = smul.addr %s703, 4
      %s705 = scalar_lea.vmem %s344, %s704
      %v706 = vld [vmem:[%s705] sm:$0xc]
      %v707 = vld [vmem:[%s705 + $0x4] sm:$0xf]
      %v708 = vld [vmem:[%s705 + $0x8] sm:$0x3]
      %v709 = vld [vmem:[%s705 + $0x18] sm:$0xc]
      %v710 = vld [vmem:[%s705 + $0x1c] sm:$0xf]
      %v711 = vld [vmem:[%s705 + $0x20] sm:$0x3]
      %v712 = vld [vmem:[%s705 + $0x30] sm:$0xc]
      %v713 = vld [vmem:[%s705 + $0x34] sm:$0xf]
      %v714 = vld [vmem:[%s705 + $0x38] sm:$0x3]
      %v715 = vld [vmem:[%s705 + $0x48] sm:$0xc]
      %v716 = vld [vmem:[%s705 + $0x4c] sm:$0xf]
      %v717 = vld [vmem:[%s705 + $0x50] sm:$0x3]
      %v718 = vld [vmem:[%s705 + $0x60] sm:$0xc]
      %v719 = vld [vmem:[%s705 + $0x64] sm:$0xf]
      %v720 = vld [vmem:[%s705 + $0x68] sm:$0x3]
      %v721 = vld [vmem:[%s705 + $0x78] sm:$0xc]
      %v722 = vld [vmem:[%s705 + $0x7c] sm:$0xf]
      %v723 = vld [vmem:[%s705 + $0x80] sm:$0x3]
      %v724 = vld [vmem:[%s705 + $0x90] sm:$0xc]
      %v725 = vld [vmem:[%s705 + $0x94] sm:$0xf]
      %v726 = vld [vmem:[%s705 + $0x98] sm:$0x3]
      %v727 = vld [vmem:[%s705 + $0xa8] sm:$0xc]
      %v728 = vld [vmem:[%s705 + $0xac] sm:$0xf]
      %v729 = vld [vmem:[%s705 + $0xb0] sm:$0x3]
      %v730 = vld [vmem:[%s705 + $0xc0] sm:$0xc]
      %v731 = vld [vmem:[%s705 + $0xc4] sm:$0xf]
      %v732 = vld [vmem:[%s705 + $0xc8] sm:$0x3]
      %v733 = vld [vmem:[%s705 + $0xd8] sm:$0xc]
      %v734 = vld [vmem:[%s705 + $0xdc] sm:$0xf]
      %v735 = vld [vmem:[%s705 + $0xe0] sm:$0x3]
      %v736 = vld [vmem:[%s705 + $0xf0] sm:$0xc]
      %v737 = vld [vmem:[%s705 + $0xf4] sm:$0xf]
      %v738 = vld [vmem:[%s705 + $0xf8] sm:$0x3]
      %v739 = vld [vmem:[%s705 + $0x108] sm:$0xc]
      %v740 = vld [vmem:[%s705 + $0x10c] sm:$0xf]
      %v741 = vld [vmem:[%s705 + $0x110] sm:$0x3]
      %v742 = vld [vmem:[%s705 + $0x120] sm:$0xc]
      %v743 = vld [vmem:[%s705 + $0x124] sm:$0xf]
      %v744 = vld [vmem:[%s705 + $0x128] sm:$0x3]
      %v745 = vld [vmem:[%s705 + $0x138] sm:$0xc]
      %v746 = vld [vmem:[%s705 + $0x13c] sm:$0xf]
      %v747 = vld [vmem:[%s705 + $0x140] sm:$0x3]
      %v748 = vld [vmem:[%s705 + $0x150] sm:$0xc]
      %v749 = vld [vmem:[%s705 + $0x154] sm:$0xf]
      %v750 = vld [vmem:[%s705 + $0x158] sm:$0x3]
      %v751 = vld [vmem:[%s705 + $0x168] sm:$0xc]
      %v752 = vld [vmem:[%s705 + $0x16c] sm:$0xf]
      %v753 = vld [vmem:[%s705 + $0x170] sm:$0x3]
      %vm802 = vcmask 1041408
      %vm803 = vcmask 1045508
      %vm804 = vmor %vm802, %vm803
      %v805 = vrot.slane %v706, 6
      %v806 = vrot.slane %v805, 4
      %v807 = vrot.slane %v707, 6
      %v808 = vsel %vm804, %v806, %v807
      %v809 = vrot.slane %v807, 4
      %v810 = vrot.slane %v708, 6
      %v811 = vsel %vm804, %v809, %v810
      %v812 = vrot.slane %v709, 6
      %v813 = vrot.slane %v812, 4
      %v814 = vrot.slane %v710, 6
      %v815 = vsel %vm804, %v813, %v814
      %v816 = vrot.slane %v814, 4
      %v817 = vrot.slane %v711, 6
      %v818 = vsel %vm804, %v816, %v817
      %v819 = vrot.slane %v712, 6
      %v820 = vrot.slane %v819, 4
      %v821 = vrot.slane %v713, 6
      %v822 = vsel %vm804, %v820, %v821
      %v823 = vrot.slane %v821, 4
      %v824 = vrot.slane %v714, 6
      %v825 = vsel %vm804, %v823, %v824
      %v826 = vrot.slane %v715, 6
      %v827 = vrot.slane %v826, 4
      %v828 = vrot.slane %v716, 6
      %v829 = vsel %vm804, %v827, %v828
      %v830 = vrot.slane %v828, 4
      %v831 = vrot.slane %v717, 6
      %v832 = vsel %vm804, %v830, %v831
      %v833 = vrot.slane %v718, 6
      %v834 = vrot.slane %v833, 4
      %v835 = vrot.slane %v719, 6
      %v836 = vsel %vm804, %v834, %v835
      %v837 = vrot.slane %v835, 4
      %v838 = vrot.slane %v720, 6
      %v839 = vsel %vm804, %v837, %v838
      %v840 = vrot.slane %v721, 6
      %v841 = vrot.slane %v840, 4
      %v842 = vrot.slane %v722, 6
      %v843 = vsel %vm804, %v841, %v842
      %v844 = vrot.slane %v842, 4
      %v845 = vrot.slane %v723, 6
      %v846 = vsel %vm804, %v844, %v845
      %v847 = vrot.slane %v724, 6
      %v848 = vrot.slane %v847, 4
      %v849 = vrot.slane %v725, 6
      %v850 = vsel %vm804, %v848, %v849
      %v851 = vrot.slane %v849, 4
      %v852 = vrot.slane %v726, 6
      %v853 = vsel %vm804, %v851, %v852
      %v854 = vrot.slane %v727, 6
      %v855 = vrot.slane %v854, 4
      %v856 = vrot.slane %v728, 6
      %v857 = vsel %vm804, %v855, %v856
      %v858 = vrot.slane %v856, 4
      %v859 = vrot.slane %v729, 6
      %v860 = vsel %vm804, %v858, %v859
      %v861 = vrot.slane %v730, 6
      %v862 = vrot.slane %v861, 4
      %v863 = vrot.slane %v731, 6
      %v864 = vsel %vm804, %v862, %v863
      %v865 = vrot.slane %v863, 4
      %v866 = vrot.slane %v732, 6
      %v867 = vsel %vm804, %v865, %v866
      %v868 = vrot.slane %v733, 6
      %v869 = vrot.slane %v868, 4
      %v870 = vrot.slane %v734, 6
      %v871 = vsel %vm804, %v869, %v870
      %v872 = vrot.slane %v870, 4
      %v873 = vrot.slane %v735, 6
      %v874 = vsel %vm804, %v872, %v873
      %v875 = vrot.slane %v736, 6
      %v876 = vrot.slane %v875, 4
      %v877 = vrot.slane %v737, 6
      %v878 = vsel %vm804, %v876, %v877
      %v879 = vrot.slane %v877, 4
      %v880 = vrot.slane %v738, 6
      %v881 = vsel %vm804, %v879, %v880
      %v882 = vrot.slane %v739, 6
      %v883 = vrot.slane %v882, 4
      %v884 = vrot.slane %v740, 6
      %v885 = vsel %vm804, %v883, %v884
      %v886 = vrot.slane %v884, 4
      %v887 = vrot.slane %v741, 6
      %v888 = vsel %vm804, %v886, %v887
      %v889 = vrot.slane %v742, 6
      %v890 = vrot.slane %v889, 4
      %v891 = vrot.slane %v743, 6
      %v892 = vsel %vm804, %v890, %v891
      %v893 = vrot.slane %v891, 4
      %v894 = vrot.slane %v744, 6
      %v895 = vsel %vm804, %v893, %v894
      %v896 = vrot.slane %v745, 6
      %v897 = vrot.slane %v896, 4
      %v898 = vrot.slane %v746, 6
      %v899 = vsel %vm804, %v897, %v898
      %v900 = vrot.slane %v898, 4
      %v901 = vrot.slane %v747, 6
      %v902 = vsel %vm804, %v900, %v901
      %v903 = vrot.slane %v748, 6
      %v904 = vrot.slane %v903, 4
      %v905 = vrot.slane %v749, 6
      %v906 = vsel %vm804, %v904, %v905
      %v907 = vrot.slane %v905, 4
      %v908 = vrot.slane %v750, 6
      %v909 = vsel %vm804, %v907, %v908
      %v910 = vrot.slane %v751, 6
      %v911 = vrot.slane %v910, 4
      %v912 = vrot.slane %v752, 6
      %v913 = vsel %vm804, %v911, %v912
      %v914 = vrot.slane %v912, 4
      %v915 = vrot.slane %v753, 6
      %v916 = vsel %vm804, %v914, %v915
      %v917 = vld [vmem:[%s705 + $0x8] sm:$0xf]
      %v918 = vld [vmem:[%s705 + $0xc] sm:$0xf]
      %v919 = vld [vmem:[%s705 + $0x20] sm:$0xf]
      %v920 = vld [vmem:[%s705 + $0x24] sm:$0xf]
      %v921 = vld [vmem:[%s705 + $0x38] sm:$0xf]
      %v922 = vld [vmem:[%s705 + $0x3c] sm:$0xf]
      %v923 = vld [vmem:[%s705 + $0x50] sm:$0xf]
      %v924 = vld [vmem:[%s705 + $0x54] sm:$0xf]
      %v925 = vld [vmem:[%s705 + $0x68] sm:$0xf]
      %v926 = vld [vmem:[%s705 + $0x6c] sm:$0xf]
      %v927 = vld [vmem:[%s705 + $0x80] sm:$0xf]
      %v928 = vld [vmem:[%s705 + $0x84] sm:$0xf]
      %v929 = vld [vmem:[%s705 + $0x98] sm:$0xf]
      %v930 = vld [vmem:[%s705 + $0x9c] sm:$0xf]
      %v931 = vld [vmem:[%s705 + $0xb0] sm:$0xf]
      %v932 = vld [vmem:[%s705 + $0xb4] sm:$0xf]
      %v933 = vld [vmem:[%s705 + $0xc8] sm:$0xf]
      %v934 = vld [vmem:[%s705 + $0xcc] sm:$0xf]
      %v935 = vld [vmem:[%s705 + $0xe0] sm:$0xf]
      %v936 = vld [vmem:[%s705 + $0xe4] sm:$0xf]
      %v937 = vld [vmem:[%s705 + $0xf8] sm:$0xf]
      %v938 = vld [vmem:[%s705 + $0xfc] sm:$0xf]
      %v939 = vld [vmem:[%s705 + $0x110] sm:$0xf]
      %v940 = vld [vmem:[%s705 + $0x114] sm:$0xf]
      %v941 = vld [vmem:[%s705 + $0x128] sm:$0xf]
      %v942 = vld [vmem:[%s705 + $0x12c] sm:$0xf]
      %v943 = vld [vmem:[%s705 + $0x140] sm:$0xf]
      %v944 = vld [vmem:[%s705 + $0x144] sm:$0xf]
      %v945 = vld [vmem:[%s705 + $0x158] sm:$0xf]
      %v946 = vld [vmem:[%s705 + $0x15c] sm:$0xf]
      %v947 = vld [vmem:[%s705 + $0x170] sm:$0xf]
      %v948 = vld [vmem:[%s705 + $0x174] sm:$0xf]
      %v949 = vld [vmem:[%s705 + $0xc] sm:$0xc]
      %v950 = vld [vmem:[%s705 + $0x10] sm:$0xf]
      %v951 = vld [vmem:[%s705 + $0x14] sm:$0x3]
      %v952 = vld [vmem:[%s705 + $0x24] sm:$0xc]
      %v953 = vld [vmem:[%s705 + $0x28] sm:$0xf]
      %v954 = vld [vmem:[%s705 + $0x2c] sm:$0x3]
      %v955 = vld [vmem:[%s705 + $0x3c] sm:$0xc]
      %v956 = vld [vmem:[%s705 + $0x40] sm:$0xf]
      %v957 = vld [vmem:[%s705 + $0x44] sm:$0x3]
      %v958 = vld [vmem:[%s705 + $0x54] sm:$0xc]
      %v959 = vld [vmem:[%s705 + $0x58] sm:$0xf]
      %v960 = vld [vmem:[%s705 + $0x5c] sm:$0x3]
      %v961 = vld [vmem:[%s705 + $0x6c] sm:$0xc]
      %v962 = vld [vmem:[%s705 + $0x70] sm:$0xf]
      %v963 = vld [vmem:[%s705 + $0x74] sm:$0x3]
      %v964 = vld [vmem:[%s705 + $0x84] sm:$0xc]
      %v965 = vld [vmem:[%s705 + $0x88] sm:$0xf]
      %v966 = vld [vmem:[%s705 + $0x8c] sm:$0x3]
      %v967 = vld [vmem:[%s705 + $0x9c] sm:$0xc]
      %v968 = vld [vmem:[%s705 + $0xa0] sm:$0xf]
      %v969 = vld [vmem:[%s705 + $0xa4] sm:$0x3]
      %v970 = vld [vmem:[%s705 + $0xb4] sm:$0xc]
      %v971 = vld [vmem:[%s705 + $0xb8] sm:$0xf]
      %v972 = vld [vmem:[%s705 + $0xbc] sm:$0x3]
      %v973 = vld [vmem:[%s705 + $0xcc] sm:$0xc]
      %v974 = vld [vmem:[%s705 + $0xd0] sm:$0xf]
      %v975 = vld [vmem:[%s705 + $0xd4] sm:$0x3]
      %v976 = vld [vmem:[%s705 + $0xe4] sm:$0xc]
      %v977 = vld [vmem:[%s705 + $0xe8] sm:$0xf]
      %v978 = vld [vmem:[%s705 + $0xec] sm:$0x3]
      %v979 = vld [vmem:[%s705 + $0xfc] sm:$0xc]
      %v980 = vld [vmem:[%s705 + $0x100] sm:$0xf]
      %v981 = vld [vmem:[%s705 + $0x104] sm:$0x3]
      %v982 = vld [vmem:[%s705 + $0x114] sm:$0xc]
      %v983 = vld [vmem:[%s705 + $0x118] sm:$0xf]
      %v984 = vld [vmem:[%s705 + $0x11c] sm:$0x3]
      %v985 = vld [vmem:[%s705 + $0x12c] sm:$0xc]
      %v986 = vld [vmem:[%s705 + $0x130] sm:$0xf]
      %v987 = vld [vmem:[%s705 + $0x134] sm:$0x3]
      %v988 = vld [vmem:[%s705 + $0x144] sm:$0xc]
      %v989 = vld [vmem:[%s705 + $0x148] sm:$0xf]
      %v990 = vld [vmem:[%s705 + $0x14c] sm:$0x3]
      %v991 = vld [vmem:[%s705 + $0x15c] sm:$0xc]
      %v992 = vld [vmem:[%s705 + $0x160] sm:$0xf]
      %v993 = vld [vmem:[%s705 + $0x164] sm:$0x3]
      %v994 = vld [vmem:[%s705 + $0x174] sm:$0xc]
      %v995 = vld [vmem:[%s705 + $0x178] sm:$0xf]
      %v996 = vld [vmem:[%s705 + $0x17c] sm:$0x3]
      %v1045 = vrot.slane %v949, 6
      %v1046 = vrot.slane %v1045, 4
      %v1047 = vrot.slane %v950, 6
      %v1048 = vsel %vm804, %v1046, %v1047
      %v1049 = vrot.slane %v1047, 4
      %v1050 = vrot.slane %v951, 6
      %v1051 = vsel %vm804, %v1049, %v1050
      %v1052 = vrot.slane %v952, 6
      %v1053 = vrot.slane %v1052, 4
      %v1054 = vrot.slane %v953, 6
      %v1055 = vsel %vm804, %v1053, %v1054
      %v1056 = vrot.slane %v1054, 4
      %v1057 = vrot.slane %v954, 6
      %v1058 = vsel %vm804, %v1056, %v1057
      %v1059 = vrot.slane %v955, 6
      %v1060 = vrot.slane %v1059, 4
      %v1061 = vrot.slane %v956, 6
      %v1062 = vsel %vm804, %v1060, %v1061
      %v1063 = vrot.slane %v1061, 4
      %v1064 = vrot.slane %v957, 6
      %v1065 = vsel %vm804, %v1063, %v1064
      %v1066 = vrot.slane %v958, 6
      %v1067 = vrot.slane %v1066, 4
      %v1068 = vrot.slane %v959, 6
      %v1069 = vsel %vm804, %v1067, %v1068
      %v1070 = vrot.slane %v1068, 4
      %v1071 = vrot.slane %v960, 6
      %v1072 = vsel %vm804, %v1070, %v1071
      %v1073 = vrot.slane %v961, 6
      %v1074 = vrot.slane %v1073, 4
      %v1075 = vrot.slane %v962, 6
      %v1076 = vsel %vm804, %v1074, %v1075
      %v1077 = vrot.slane %v1075, 4
      %v1078 = vrot.slane %v963, 6
      %v1079 = vsel %vm804, %v1077, %v1078
      %v1080 = vrot.slane %v964, 6
      %v1081 = vrot.slane %v1080, 4
      %v1082 = vrot.slane %v965, 6
      %v1083 = vsel %vm804, %v1081, %v1082
      %v1084 = vrot.slane %v1082, 4
      %v1085 = vrot.slane %v966, 6
      %v1086 = vsel %vm804, %v1084, %v1085
      %v1087 = vrot.slane %v967, 6
      %v1088 = vrot.slane %v1087, 4
      %v1089 = vrot.slane %v968, 6
      %v1090 = vsel %vm804, %v1088, %v1089
      %v1091 = vrot.slane %v1089, 4
      %v1092 = vrot.slane %v969, 6
      %v1093 = vsel %vm804, %v1091, %v1092
      %v1094 = vrot.slane %v970, 6
      %v1095 = vrot.slane %v1094, 4
      %v1096 = vrot.slane %v971, 6
      %v1097 = vsel %vm804, %v1095, %v1096
      %v1098 = vrot.slane %v1096, 4
      %v1099 = vrot.slane %v972, 6
      %v1100 = vsel %vm804, %v1098, %v1099
      %v1101 = vrot.slane %v973, 6
      %v1102 = vrot.slane %v1101, 4
      %v1103 = vrot.slane %v974, 6
      %v1104 = vsel %vm804, %v1102, %v1103
      %v1105 = vrot.slane %v1103, 4
      %v1106 = vrot.slane %v975, 6
      %v1107 = vsel %vm804, %v1105, %v1106
      %v1108 = vrot.slane %v976, 6
      %v1109 = vrot.slane %v1108, 4
      %v1110 = vrot.slane %v977, 6
      %v1111 = vsel %vm804, %v1109, %v1110
      %v1112 = vrot.slane %v1110, 4
      %v1113 = vrot.slane %v978, 6
      %v1114 = vsel %vm804, %v1112, %v1113
      %v1115 = vrot.slane %v979, 6
      %v1116 = vrot.slane %v1115, 4
      %v1117 = vrot.slane %v980, 6
      %v1118 = vsel %vm804, %v1116, %v1117
      %v1119 = vrot.slane %v1117, 4
      %v1120 = vrot.slane %v981, 6
      %v1121 = vsel %vm804, %v1119, %v1120
      %v1122 = vrot.slane %v982, 6
      %v1123 = vrot.slane %v1122, 4
      %v1124 = vrot.slane %v983, 6
      %v1125 = vsel %vm804, %v1123, %v1124
      %v1126 = vrot.slane %v1124, 4
      %v1127 = vrot.slane %v984, 6
      %v1128 = vsel %vm804, %v1126, %v1127
      %v1129 = vrot.slane %v985, 6
      %v1130 = vrot.slane %v1129, 4
      %v1131 = vrot.slane %v986, 6
      %v1132 = vsel %vm804, %v1130, %v1131
      %v1133 = vrot.slane %v1131, 4
      %v1134 = vrot.slane %v987, 6
      %v1135 = vsel %vm804, %v1133, %v1134
      %v1136 = vrot.slane %v988, 6
      %v1137 = vrot.slane %v1136, 4
      %v1138 = vrot.slane %v989, 6
      %v1139 = vsel %vm804, %v1137, %v1138
      %v1140 = vrot.slane %v1138, 4
      %v1141 = vrot.slane %v990, 6
      %v1142 = vsel %vm804, %v1140, %v1141
      %v1143 = vrot.slane %v991, 6
      %v1144 = vrot.slane %v1143, 4
      %v1145 = vrot.slane %v992, 6
      %v1146 = vsel %vm804, %v1144, %v1145
      %v1147 = vrot.slane %v1145, 4
      %v1148 = vrot.slane %v993, 6
      %v1149 = vsel %vm804, %v1147, %v1148
      %v1150 = vrot.slane %v994, 6
      %v1151 = vrot.slane %v1150, 4
      %v1152 = vrot.slane %v995, 6
      %v1153 = vsel %vm804, %v1151, %v1152
      %v1154 = vrot.slane %v1152, 4
      %v1155 = vrot.slane %v996, 6
      %v1156 = vsel %vm804, %v1154, %v1155
      %v1157 = vld [vmem:[%s374] sm:$0xc]
      %v1158 = vld [vmem:[%s374 + $0x4] sm:$0xf]
      %v1159 = vld [vmem:[%s374 + $0x8] sm:$0x3]
      %v1160 = vld [vmem:[%s374 + $0x18] sm:$0xc]
      %v1161 = vld [vmem:[%s374 + $0x1c] sm:$0xf]
      %v1162 = vld [vmem:[%s374 + $0x20] sm:$0x3]
      %v1163 = vld [vmem:[%s374 + $0x30] sm:$0xc]
      %v1164 = vld [vmem:[%s374 + $0x34] sm:$0xf]
      %v1165 = vld [vmem:[%s374 + $0x38] sm:$0x3]
      %v1166 = vld [vmem:[%s374 + $0x48] sm:$0xc]
      %v1167 = vld [vmem:[%s374 + $0x4c] sm:$0xf]
      %v1168 = vld [vmem:[%s374 + $0x50] sm:$0x3]
      %v1169 = vld [vmem:[%s374 + $0x60] sm:$0xc]
      %v1170 = vld [vmem:[%s374 + $0x64] sm:$0xf]
      %v1171 = vld [vmem:[%s374 + $0x68] sm:$0x3]
      %v1172 = vld [vmem:[%s374 + $0x78] sm:$0xc]
      %v1173 = vld [vmem:[%s374 + $0x7c] sm:$0xf]
      %v1174 = vld [vmem:[%s374 + $0x80] sm:$0x3]
      %v1175 = vld [vmem:[%s374 + $0x90] sm:$0xc]
      %v1176 = vld [vmem:[%s374 + $0x94] sm:$0xf]
      %v1177 = vld [vmem:[%s374 + $0x98] sm:$0x3]
      %v1178 = vld [vmem:[%s374 + $0xa8] sm:$0xc]
      %v1179 = vld [vmem:[%s374 + $0xac] sm:$0xf]
      %v1180 = vld [vmem:[%s374 + $0xb0] sm:$0x3]
      %v1181 = vld [vmem:[%s374 + $0xc0] sm:$0xc]
      %v1182 = vld [vmem:[%s374 + $0xc4] sm:$0xf]
      %v1183 = vld [vmem:[%s374 + $0xc8] sm:$0x3]
      %v1184 = vld [vmem:[%s374 + $0xd8] sm:$0xc]
      %v1185 = vld [vmem:[%s374 + $0xdc] sm:$0xf]
      %v1186 = vld [vmem:[%s374 + $0xe0] sm:$0x3]
      %v1187 = vld [vmem:[%s374 + $0xf0] sm:$0xc]
      %v1188 = vld [vmem:[%s374 + $0xf4] sm:$0xf]
      %v1189 = vld [vmem:[%s374 + $0xf8] sm:$0x3]
      %v1190 = vld [vmem:[%s374 + $0x108] sm:$0xc]
      %v1191 = vld [vmem:[%s374 + $0x10c] sm:$0xf]
      %v1192 = vld [vmem:[%s374 + $0x110] sm:$0x3]
      %v1193 = vld [vmem:[%s374 + $0x120] sm:$0xc]
      %v1194 = vld [vmem:[%s374 + $0x124] sm:$0xf]
      %v1195 = vld [vmem:[%s374 + $0x128] sm:$0x3]
      %v1196 = vld [vmem:[%s374 + $0x138] sm:$0xc]
      %v1197 = vld [vmem:[%s374 + $0x13c] sm:$0xf]
      %v1198 = vld [vmem:[%s374 + $0x140] sm:$0x3]
      %v1199 = vld [vmem:[%s374 + $0x150] sm:$0xc]
      %v1200 = vld [vmem:[%s374 + $0x154] sm:$0xf]
      %v1201 = vld [vmem:[%s374 + $0x158] sm:$0x3]
      %v1202 = vld [vmem:[%s374 + $0x168] sm:$0xc]
      %v1203 = vld [vmem:[%s374 + $0x16c] sm:$0xf]
      %v1204 = vld [vmem:[%s374 + $0x170] sm:$0x3]
      %v1253 = vrot.slane %v1157, 6
      %v1254 = vrot.slane %v1253, 4
      %v1255 = vrot.slane %v1158, 6
      %v1256 = vsel %vm804, %v1254, %v1255
      %v1257 = vrot.slane %v1255, 4
      %v1258 = vrot.slane %v1159, 6
      %v1259 = vsel %vm804, %v1257, %v1258
      %v1260 = vrot.slane %v1160, 6
      %v1261 = vrot.slane %v1260, 4
      %v1262 = vrot.slane %v1161, 6
      %v1263 = vsel %vm804, %v1261, %v1262
      %v1264 = vrot.slane %v1262, 4
      %v1265 = vrot.slane %v1162, 6
      %v1266 = vsel %vm804, %v1264, %v1265
      %v1267 = vrot.slane %v1163, 6
      %v1268 = vrot.slane %v1267, 4
      %v1269 = vrot.slane %v1164, 6
      %v1270 = vsel %vm804, %v1268, %v1269
      %v1271 = vrot.slane %v1269, 4
      %v1272 = vrot.slane %v1165, 6
      %v1273 = vsel %vm804, %v1271, %v1272
      %v1274 = vrot.slane %v1166, 6
      %v1275 = vrot.slane %v1274, 4
      %v1276 = vrot.slane %v1167, 6
      %v1277 = vsel %vm804, %v1275, %v1276
      %v1278 = vrot.slane %v1276, 4
      %v1279 = vrot.slane %v1168, 6
      %v1280 = vsel %vm804, %v1278, %v1279
      %v1281 = vrot.slane %v1169, 6
      %v1282 = vrot.slane %v1281, 4
      %v1283 = vrot.slane %v1170, 6
      %v1284 = vsel %vm804, %v1282, %v1283
      %v1285 = vrot.slane %v1283, 4
      %v1286 = vrot.slane %v1171, 6
      %v1287 = vsel %vm804, %v1285, %v1286
      %v1288 = vrot.slane %v1172, 6
      %v1289 = vrot.slane %v1288, 4
      %v1290 = vrot.slane %v1173, 6
      %v1291 = vsel %vm804, %v1289, %v1290
      %v1292 = vrot.slane %v1290, 4
      %v1293 = vrot.slane %v1174, 6
      %v1294 = vsel %vm804, %v1292, %v1293
      %v1295 = vrot.slane %v1175, 6
      %v1296 = vrot.slane %v1295, 4
      %v1297 = vrot.slane %v1176, 6
      %v1298 = vsel %vm804, %v1296, %v1297
      %v1299 = vrot.slane %v1297, 4
      %v1300 = vrot.slane %v1177, 6
      %v1301 = vsel %vm804, %v1299, %v1300
      %v1302 = vrot.slane %v1178, 6
      %v1303 = vrot.slane %v1302, 4
      %v1304 = vrot.slane %v1179, 6
      %v1305 = vsel %vm804, %v1303, %v1304
      %v1306 = vrot.slane %v1304, 4
      %v1307 = vrot.slane %v1180, 6
      %v1308 = vsel %vm804, %v1306, %v1307
      %v1309 = vrot.slane %v1181, 6
      %v1310 = vrot.slane %v1309, 4
      %v1311 = vrot.slane %v1182, 6
      %v1312 = vsel %vm804, %v1310, %v1311
      %v1313 = vrot.slane %v1311, 4
      %v1314 = vrot.slane %v1183, 6
      %v1315 = vsel %vm804, %v1313, %v1314
      %v1316 = vrot.slane %v1184, 6
      %v1317 = vrot.slane %v1316, 4
      %v1318 = vrot.slane %v1185, 6
      %v1319 = vsel %vm804, %v1317, %v1318
      %v1320 = vrot.slane %v1318, 4
      %v1321 = vrot.slane %v1186, 6
      %v1322 = vsel %vm804, %v1320, %v1321
      %v1323 = vrot.slane %v1187, 6
      %v1324 = vrot.slane %v1323, 4
      %v1325 = vrot.slane %v1188, 6
      %v1326 = vsel %vm804, %v1324, %v1325
      %v1327 = vrot.slane %v1325, 4
      %v1328 = vrot.slane %v1189, 6
      %v1329 = vsel %vm804, %v1327, %v1328
      %v1330 = vrot.slane %v1190, 6
      %v1331 = vrot.slane %v1330, 4
      %v1332 = vrot.slane %v1191, 6
      %v1333 = vsel %vm804, %v1331, %v1332
      %v1334 = vrot.slane %v1332, 4
      %v1335 = vrot.slane %v1192, 6
      %v1336 = vsel %vm804, %v1334, %v1335
      %v1337 = vrot.slane %v1193, 6
      %v1338 = vrot.slane %v1337, 4
      %v1339 = vrot.slane %v1194, 6
      %v1340 = vsel %vm804, %v1338, %v1339
      %v1341 = vrot.slane %v1339, 4
      %v1342 = vrot.slane %v1195, 6
      %v1343 = vsel %vm804, %v1341, %v1342
      %v1344 = vrot.slane %v1196, 6
      %v1345 = vrot.slane %v1344, 4
      %v1346 = vrot.slane %v1197, 6
      %v1347 = vsel %vm804, %v1345, %v1346
      %v1348 = vrot.slane %v1346, 4
      %v1349 = vrot.slane %v1198, 6
      %v1350 = vsel %vm804, %v1348, %v1349
      %v1351 = vrot.slane %v1199, 6
      %v1352 = vrot.slane %v1351, 4
      %v1353 = vrot.slane %v1200, 6
      %v1354 = vsel %vm804, %v1352, %v1353
      %v1355 = vrot.slane %v1353, 4
      %v1356 = vrot.slane %v1201, 6
      %v1357 = vsel %vm804, %v1355, %v1356
      %v1358 = vrot.slane %v1202, 6
      %v1359 = vrot.slane %v1358, 4
      %v1360 = vrot.slane %v1203, 6
      %v1361 = vsel %vm804, %v1359, %v1360
      %v1362 = vrot.slane %v1360, 4
      %v1363 = vrot.slane %v1204, 6
      %v1364 = vsel %vm804, %v1362, %v1363
      %v1365 = vld [vmem:[%s374 + $0xc] sm:$0xc]
      %v1366 = vld [vmem:[%s374 + $0x10] sm:$0xf]
      %v1367 = vld [vmem:[%s374 + $0x14] sm:$0x3]
      %v1368 = vld [vmem:[%s374 + $0x24] sm:$0xc]
      %v1369 = vld [vmem:[%s374 + $0x28] sm:$0xf]
      %v1370 = vld [vmem:[%s374 + $0x2c] sm:$0x3]
      %v1371 = vld [vmem:[%s374 + $0x3c] sm:$0xc]
      %v1372 = vld [vmem:[%s374 + $0x40] sm:$0xf]
      %v1373 = vld [vmem:[%s374 + $0x44] sm:$0x3]
      %v1374 = vld [vmem:[%s374 + $0x54] sm:$0xc]
      %v1375 = vld [vmem:[%s374 + $0x58] sm:$0xf]
      %v1376 = vld [vmem:[%s374 + $0x5c] sm:$0x3]
      %v1377 = vld [vmem:[%s374 + $0x6c] sm:$0xc]
      %v1378 = vld [vmem:[%s374 + $0x70] sm:$0xf]
      %v1379 = vld [vmem:[%s374 + $0x74] sm:$0x3]
      %v1380 = vld [vmem:[%s374 + $0x84] sm:$0xc]
      %v1381 = vld [vmem:[%s374 + $0x88] sm:$0xf]
      %v1382 = vld [vmem:[%s374 + $0x8c] sm:$0x3]
      %v1383 = vld [vmem:[%s374 + $0x9c] sm:$0xc]
      %v1384 = vld [vmem:[%s374 + $0xa0] sm:$0xf]
      %v1385 = vld [vmem:[%s374 + $0xa4] sm:$0x3]
      %v1386 = vld [vmem:[%s374 + $0xb4] sm:$0xc]
      %v1387 = vld [vmem:[%s374 + $0xb8] sm:$0xf]
      %v1388 = vld [vmem:[%s374 + $0xbc] sm:$0x3]
      %v1389 = vld [vmem:[%s374 + $0xcc] sm:$0xc]
      %v1390 = vld [vmem:[%s374 + $0xd0] sm:$0xf]
      %v1391 = vld [vmem:[%s374 + $0xd4] sm:$0x3]
      %v1392 = vld [vmem:[%s374 + $0xe4] sm:$0xc]
      %v1393 = vld [vmem:[%s374 + $0xe8] sm:$0xf]
      %v1394 = vld [vmem:[%s374 + $0xec] sm:$0x3]
      %v1395 = vld [vmem:[%s374 + $0xfc] sm:$0xc]
      %v1396 = vld [vmem:[%s374 + $0x100] sm:$0xf]
      %v1397 = vld [vmem:[%s374 + $0x104] sm:$0x3]
      %v1398 = vld [vmem:[%s374 + $0x114] sm:$0xc]
      %v1399 = vld [vmem:[%s374 + $0x118] sm:$0xf]
      %v1400 = vld [vmem:[%s374 + $0x11c] sm:$0x3]
      %v1401 = vld [vmem:[%s374 + $0x12c] sm:$0xc]
      %v1402 = vld [vmem:[%s374 + $0x130] sm:$0xf]
      %v1403 = vld [vmem:[%s374 + $0x134] sm:$0x3]
      %v1404 = vld [vmem:[%s374 + $0x144] sm:$0xc]
      %v1405 = vld [vmem:[%s374 + $0x148] sm:$0xf]
      %v1406 = vld [vmem:[%s374 + $0x14c] sm:$0x3]
      %v1407 = vld [vmem:[%s374 + $0x15c] sm:$0xc]
      %v1408 = vld [vmem:[%s374 + $0x160] sm:$0xf]
      %v1409 = vld [vmem:[%s374 + $0x164] sm:$0x3]
      %v1410 = vld [vmem:[%s374 + $0x174] sm:$0xc]
      %v1411 = vld [vmem:[%s374 + $0x178] sm:$0xf]
      %v1412 = vld [vmem:[%s374 + $0x17c] sm:$0x3]
      %v1461 = vrot.slane %v1365, 6
      %v1462 = vrot.slane %v1461, 4
      %v1463 = vrot.slane %v1366, 6
      %v1464 = vsel %vm804, %v1462, %v1463
      %v1465 = vrot.slane %v1463, 4
      %v1466 = vrot.slane %v1367, 6
      %v1467 = vsel %vm804, %v1465, %v1466
      %v1468 = vrot.slane %v1368, 6
      %v1469 = vrot.slane %v1468, 4
      %v1470 = vrot.slane %v1369, 6
      %v1471 = vsel %vm804, %v1469, %v1470
      %v1472 = vrot.slane %v1470, 4
      %v1473 = vrot.slane %v1370, 6
      %v1474 = vsel %vm804, %v1472, %v1473
      %v1475 = vrot.slane %v1371, 6
      %v1476 = vrot.slane %v1475, 4
      %v1477 = vrot.slane %v1372, 6
      %v1478 = vsel %vm804, %v1476, %v1477
      %v1479 = vrot.slane %v1477, 4
      %v1480 = vrot.slane %v1373, 6
      %v1481 = vsel %vm804, %v1479, %v1480
      %v1482 = vrot.slane %v1374, 6
      %v1483 = vrot.slane %v1482, 4
      %v1484 = vrot.slane %v1375, 6
      %v1485 = vsel %vm804, %v1483, %v1484
      %v1486 = vrot.slane %v1484, 4
      %v1487 = vrot.slane %v1376, 6
      %v1488 = vsel %vm804, %v1486, %v1487
      %v1489 = vrot.slane %v1377, 6
      %v1490 = vrot.slane %v1489, 4
      %v1491 = vrot.slane %v1378, 6
      %v1492 = vsel %vm804, %v1490, %v1491
      %v1493 = vrot.slane %v1491, 4
      %v1494 = vrot.slane %v1379, 6
      %v1495 = vsel %vm804, %v1493, %v1494
      %v1496 = vrot.slane %v1380, 6
      %v1497 = vrot.slane %v1496, 4
      %v1498 = vrot.slane %v1381, 6
      %v1499 = vsel %vm804, %v1497, %v1498
      %v1500 = vrot.slane %v1498, 4
      %v1501 = vrot.slane %v1382, 6
      %v1502 = vsel %vm804, %v1500, %v1501
      %v1503 = vrot.slane %v1383, 6
      %v1504 = vrot.slane %v1503, 4
      %v1505 = vrot.slane %v1384, 6
      %v1506 = vsel %vm804, %v1504, %v1505
      %v1507 = vrot.slane %v1505, 4
      %v1508 = vrot.slane %v1385, 6
      %v1509 = vsel %vm804, %v1507, %v1508
      %v1510 = vrot.slane %v1386, 6
      %v1511 = vrot.slane %v1510, 4
      %v1512 = vrot.slane %v1387, 6
      %v1513 = vsel %vm804, %v1511, %v1512
      %v1514 = vrot.slane %v1512, 4
      %v1515 = vrot.slane %v1388, 6
      %v1516 = vsel %vm804, %v1514, %v1515
      %v1517 = vrot.slane %v1389, 6
      %v1518 = vrot.slane %v1517, 4
      %v1519 = vrot.slane %v1390, 6
      %v1520 = vsel %vm804, %v1518, %v1519
      %v1521 = vrot.slane %v1519, 4
      %v1522 = vrot.slane %v1391, 6
      %v1523 = vsel %vm804, %v1521, %v1522
      %v1524 = vrot.slane %v1392, 6
      %v1525 = vrot.slane %v1524, 4
      %v1526 = vrot.slane %v1393, 6
      %v1527 = vsel %vm804, %v1525, %v1526
      %v1528 = vrot.slane %v1526, 4
      %v1529 = vrot.slane %v1394, 6
      %v1530 = vsel %vm804, %v1528, %v1529
      %v1531 = vrot.slane %v1395, 6
      %v1532 = vrot.slane %v1531, 4
      %v1533 = vrot.slane %v1396, 6
      %v1534 = vsel %vm804, %v1532, %v1533
      %v1535 = vrot.slane %v1533, 4
      %v1536 = vrot.slane %v1397, 6
      %v1537 = vsel %vm804, %v1535, %v1536
      %v1538 = vrot.slane %v1398, 6
      %v1539 = vrot.slane %v1538, 4
      %v1540 = vrot.slane %v1399, 6
      %v1541 = vsel %vm804, %v1539, %v1540
      %v1542 = vrot.slane %v1540, 4
      %v1543 = vrot.slane %v1400, 6
      %v1544 = vsel %vm804, %v1542, %v1543
      %v1545 = vrot.slane %v1401, 6
      %v1546 = vrot.slane %v1545, 4
      %v1547 = vrot.slane %v1402, 6
      %v1548 = vsel %vm804, %v1546, %v1547
      %v1549 = vrot.slane %v1547, 4
      %v1550 = vrot.slane %v1403, 6
      %v1551 = vsel %vm804, %v1549, %v1550
      %v1552 = vrot.slane %v1404, 6
      %v1553 = vrot.slane %v1552, 4
      %v1554 = vrot.slane %v1405, 6
      %v1555 = vsel %vm804, %v1553, %v1554
      %v1556 = vrot.slane %v1554, 4
      %v1557 = vrot.slane %v1406, 6
      %v1558 = vsel %vm804, %v1556, %v1557
      %v1559 = vrot.slane %v1407, 6
      %v1560 = vrot.slane %v1559, 4
      %v1561 = vrot.slane %v1408, 6
      %v1562 = vsel %vm804, %v1560, %v1561
      %v1563 = vrot.slane %v1561, 4
      %v1564 = vrot.slane %v1409, 6
      %v1565 = vsel %vm804, %v1563, %v1564
      %v1566 = vrot.slane %v1410, 6
      %v1567 = vrot.slane %v1566, 4
      %v1568 = vrot.slane %v1411, 6
      %v1569 = vsel %vm804, %v1567, %v1568
      %v1570 = vrot.slane %v1568, 4
      %v1571 = vrot.slane %v1412, 6
      %v1572 = vsel %vm804, %v1570, %v1571
      %s1573 = sadd.s32 %s370, 28
      %s1574 = smul.u32 %s1573, 6
      %s1575 = smul.addr %s1574, 4
      %s1576 = scalar_lea.vmem %s344, %s1575
      %v1577 = vld [vmem:[%s1576] sm:$0xc]
      %v1578 = vld [vmem:[%s1576 + $0x4] sm:$0xf]
      %v1579 = vld [vmem:[%s1576 + $0x8] sm:$0x3]
      %v1580 = vld [vmem:[%s1576 + $0x18] sm:$0xc]
      %v1581 = vld [vmem:[%s1576 + $0x1c] sm:$0xf]
      %v1582 = vld [vmem:[%s1576 + $0x20] sm:$0x3]
      %v1583 = vld [vmem:[%s1576 + $0x30] sm:$0xc]
      %v1584 = vld [vmem:[%s1576 + $0x34] sm:$0xf]
      %v1585 = vld [vmem:[%s1576 + $0x38] sm:$0x3]
      %v1586 = vld [vmem:[%s1576 + $0x48] sm:$0xc]
      %v1587 = vld [vmem:[%s1576 + $0x4c] sm:$0xf]
      %v1588 = vld [vmem:[%s1576 + $0x50] sm:$0x3]
      %v1589 = vld [vmem:[%s1576 + $0x60] sm:$0xc]
      %v1590 = vld [vmem:[%s1576 + $0x64] sm:$0xf]
      %v1591 = vld [vmem:[%s1576 + $0x68] sm:$0x3]
      %v1592 = vld [vmem:[%s1576 + $0x78] sm:$0xc]
      %v1593 = vld [vmem:[%s1576 + $0x7c] sm:$0xf]
      %v1594 = vld [vmem:[%s1576 + $0x80] sm:$0x3]
      %v1595 = vld [vmem:[%s1576 + $0x90] sm:$0xc]
      %v1596 = vld [vmem:[%s1576 + $0x94] sm:$0xf]
      %v1597 = vld [vmem:[%s1576 + $0x98] sm:$0x3]
      %v1598 = vld [vmem:[%s1576 + $0xa8] sm:$0xc]
      %v1599 = vld [vmem:[%s1576 + $0xac] sm:$0xf]
      %v1600 = vld [vmem:[%s1576 + $0xb0] sm:$0x3]
      %v1601 = vld [vmem:[%s1576 + $0xc0] sm:$0xc]
      %v1602 = vld [vmem:[%s1576 + $0xc4] sm:$0xf]
      %v1603 = vld [vmem:[%s1576 + $0xc8] sm:$0x3]
      %v1604 = vld [vmem:[%s1576 + $0xd8] sm:$0xc]
      %v1605 = vld [vmem:[%s1576 + $0xdc] sm:$0xf]
      %v1606 = vld [vmem:[%s1576 + $0xe0] sm:$0x3]
      %v1607 = vld [vmem:[%s1576 + $0xf0] sm:$0xc]
      %v1608 = vld [vmem:[%s1576 + $0xf4] sm:$0xf]
      %v1609 = vld [vmem:[%s1576 + $0xf8] sm:$0x3]
      %v1610 = vld [vmem:[%s1576 + $0x108] sm:$0xc]
      %v1611 = vld [vmem:[%s1576 + $0x10c] sm:$0xf]
      %v1612 = vld [vmem:[%s1576 + $0x110] sm:$0x3]
      %v1613 = vld [vmem:[%s1576 + $0x120] sm:$0xc]
      %v1614 = vld [vmem:[%s1576 + $0x124] sm:$0xf]
      %v1615 = vld [vmem:[%s1576 + $0x128] sm:$0x3]
      %v1616 = vld [vmem:[%s1576 + $0x138] sm:$0xc]
      %v1617 = vld [vmem:[%s1576 + $0x13c] sm:$0xf]
      %v1618 = vld [vmem:[%s1576 + $0x140] sm:$0x3]
      %v1619 = vld [vmem:[%s1576 + $0x150] sm:$0xc]
      %v1620 = vld [vmem:[%s1576 + $0x154] sm:$0xf]
      %v1621 = vld [vmem:[%s1576 + $0x158] sm:$0x3]
      %v1622 = vld [vmem:[%s1576 + $0x168] sm:$0xc]
      %v1623 = vld [vmem:[%s1576 + $0x16c] sm:$0xf]
      %v1624 = vld [vmem:[%s1576 + $0x170] sm:$0x3]
      %v1673 = vrot.slane %v1577, 6
      %v1674 = vrot.slane %v1673, 4
      %v1675 = vrot.slane %v1578, 6
      %v1676 = vsel %vm804, %v1674, %v1675
      %v1677 = vrot.slane %v1675, 4
      %v1678 = vrot.slane %v1579, 6
      %v1679 = vsel %vm804, %v1677, %v1678
      %v1680 = vrot.slane %v1580, 6
      %v1681 = vrot.slane %v1680, 4
      %v1682 = vrot.slane %v1581, 6
      %v1683 = vsel %vm804, %v1681, %v1682
      %v1684 = vrot.slane %v1682, 4
      %v1685 = vrot.slane %v1582, 6
      %v1686 = vsel %vm804, %v1684, %v1685
      %v1687 = vrot.slane %v1583, 6
      %v1688 = vrot.slane %v1687, 4
      %v1689 = vrot.slane %v1584, 6
      %v1690 = vsel %vm804, %v1688, %v1689
      %v1691 = vrot.slane %v1689, 4
      %v1692 = vrot.slane %v1585, 6
      %v1693 = vsel %vm804, %v1691, %v1692
      %v1694 = vrot.slane %v1586, 6
      %v1695 = vrot.slane %v1694, 4
      %v1696 = vrot.slane %v1587, 6
      %v1697 = vsel %vm804, %v1695, %v1696
      %v1698 = vrot.slane %v1696, 4
      %v1699 = vrot.slane %v1588, 6
      %v1700 = vsel %vm804, %v1698, %v1699
      %v1701 = vrot.slane %v1589, 6
      %v1702 = vrot.slane %v1701, 4
      %v1703 = vrot.slane %v1590, 6
      %v1704 = vsel %vm804, %v1702, %v1703
      %v1705 = vrot.slane %v1703, 4
      %v1706 = vrot.slane %v1591, 6
      %v1707 = vsel %vm804, %v1705, %v1706
      %v1708 = vrot.slane %v1592, 6
      %v1709 = vrot.slane %v1708, 4
      %v1710 = vrot.slane %v1593, 6
      %v1711 = vsel %vm804, %v1709, %v1710
      %v1712 = vrot.slane %v1710, 4
      %v1713 = vrot.slane %v1594, 6
      %v1714 = vsel %vm804, %v1712, %v1713
      %v1715 = vrot.slane %v1595, 6
      %v1716 = vrot.slane %v1715, 4
      %v1717 = vrot.slane %v1596, 6
      %v1718 = vsel %vm804, %v1716, %v1717
      %v1719 = vrot.slane %v1717, 4
      %v1720 = vrot.slane %v1597, 6
      %v1721 = vsel %vm804, %v1719, %v1720
      %v1722 = vrot.slane %v1598, 6
      %v1723 = vrot.slane %v1722, 4
      %v1724 = vrot.slane %v1599, 6
      %v1725 = vsel %vm804, %v1723, %v1724
      %v1726 = vrot.slane %v1724, 4
      %v1727 = vrot.slane %v1600, 6
      %v1728 = vsel %vm804, %v1726, %v1727
      %v1729 = vrot.slane %v1601, 6
      %v1730 = vrot.slane %v1729, 4
      %v1731 = vrot.slane %v1602, 6
      %v1732 = vsel %vm804, %v1730, %v1731
      %v1733 = vrot.slane %v1731, 4
      %v1734 = vrot.slane %v1603, 6
      %v1735 = vsel %vm804, %v1733, %v1734
      %v1736 = vrot.slane %v1604, 6
      %v1737 = vrot.slane %v1736, 4
      %v1738 = vrot.slane %v1605, 6
      %v1739 = vsel %vm804, %v1737, %v1738
      %v1740 = vrot.slane %v1738, 4
      %v1741 = vrot.slane %v1606, 6
      %v1742 = vsel %vm804, %v1740, %v1741
      %v1743 = vrot.slane %v1607, 6
      %v1744 = vrot.slane %v1743, 4
      %v1745 = vrot.slane %v1608, 6
      %v1746 = vsel %vm804, %v1744, %v1745
      %v1747 = vrot.slane %v1745, 4
      %v1748 = vrot.slane %v1609, 6
      %v1749 = vsel %vm804, %v1747, %v1748
      %v1750 = vrot.slane %v1610, 6
      %v1751 = vrot.slane %v1750, 4
      %v1752 = vrot.slane %v1611, 6
      %v1753 = vsel %vm804, %v1751, %v1752
      %v1754 = vrot.slane %v1752, 4
      %v1755 = vrot.slane %v1612, 6
      %v1756 = vsel %vm804, %v1754, %v1755
      %v1757 = vrot.slane %v1613, 6
      %v1758 = vrot.slane %v1757, 4
      %v1759 = vrot.slane %v1614, 6
      %v1760 = vsel %vm804, %v1758, %v1759
      %v1761 = vrot.slane %v1759, 4
      %v1762 = vrot.slane %v1615, 6
      %v1763 = vsel %vm804, %v1761, %v1762
      %v1764 = vrot.slane %v1616, 6
      %v1765 = vrot.slane %v1764, 4
      %v1766 = vrot.slane %v1617, 6
      %v1767 = vsel %vm804, %v1765, %v1766
      %v1768 = vrot.slane %v1766, 4
      %v1769 = vrot.slane %v1618, 6
      %v1770 = vsel %vm804, %v1768, %v1769
      %v1771 = vrot.slane %v1619, 6
      %v1772 = vrot.slane %v1771, 4
      %v1773 = vrot.slane %v1620, 6
      %v1774 = vsel %vm804, %v1772, %v1773
      %v1775 = vrot.slane %v1773, 4
      %v1776 = vrot.slane %v1621, 6
      %v1777 = vsel %vm804, %v1775, %v1776
      %v1778 = vrot.slane %v1622, 6
      %v1779 = vrot.slane %v1778, 4
      %v1780 = vrot.slane %v1623, 6
      %v1781 = vsel %vm804, %v1779, %v1780
      %v1782 = vrot.slane %v1780, 4
      %v1783 = vrot.slane %v1624, 6
      %v1784 = vsel %vm804, %v1782, %v1783
      %v1785 = vld [vmem:[%s1576 + $0x8] sm:$0xf]
      %v1786 = vld [vmem:[%s1576 + $0xc] sm:$0xf]
      %v1787 = vld [vmem:[%s1576 + $0x20] sm:$0xf]
      %v1788 = vld [vmem:[%s1576 + $0x24] sm:$0xf]
      %v1789 = vld [vmem:[%s1576 + $0x38] sm:$0xf]
      %v1790 = vld [vmem:[%s1576 + $0x3c] sm:$0xf]
      %v1791 = vld [vmem:[%s1576 + $0x50] sm:$0xf]
      %v1792 = vld [vmem:[%s1576 + $0x54] sm:$0xf]
      %v1793 = vld [vmem:[%s1576 + $0x68] sm:$0xf]
      %v1794 = vld [vmem:[%s1576 + $0x6c] sm:$0xf]
      %v1795 = vld [vmem:[%s1576 + $0x80] sm:$0xf]
      %v1796 = vld [vmem:[%s1576 + $0x84] sm:$0xf]
      %v1797 = vld [vmem:[%s1576 + $0x98] sm:$0xf]
      %v1798 = vld [vmem:[%s1576 + $0x9c] sm:$0xf]
      %v1799 = vld [vmem:[%s1576 + $0xb0] sm:$0xf]
      %v1800 = vld [vmem:[%s1576 + $0xb4] sm:$0xf]
      %v1801 = vld [vmem:[%s1576 + $0xc8] sm:$0xf]
      %v1802 = vld [vmem:[%s1576 + $0xcc] sm:$0xf]
      %v1803 = vld [vmem:[%s1576 + $0xe0] sm:$0xf]
      %v1804 = vld [vmem:[%s1576 + $0xe4] sm:$0xf]
      %v1805 = vld [vmem:[%s1576 + $0xf8] sm:$0xf]
      %v1806 = vld [vmem:[%s1576 + $0xfc] sm:$0xf]
      %v1807 = vld [vmem:[%s1576 + $0x110] sm:$0xf]
      %v1808 = vld [vmem:[%s1576 + $0x114] sm:$0xf]
      %v1809 = vld [vmem:[%s1576 + $0x128] sm:$0xf]
      %v1810 = vld [vmem:[%s1576 + $0x12c] sm:$0xf]
      %v1811 = vld [vmem:[%s1576 + $0x140] sm:$0xf]
      %v1812 = vld [vmem:[%s1576 + $0x144] sm:$0xf]
      %v1813 = vld [vmem:[%s1576 + $0x158] sm:$0xf]
      %v1814 = vld [vmem:[%s1576 + $0x15c] sm:$0xf]
      %v1815 = vld [vmem:[%s1576 + $0x170] sm:$0xf]
      %v1816 = vld [vmem:[%s1576 + $0x174] sm:$0xf]
      %v1817 = vld [vmem:[%s1576 + $0xc] sm:$0xc]
      %v1818 = vld [vmem:[%s1576 + $0x10] sm:$0xf]
      %v1819 = vld [vmem:[%s1576 + $0x14] sm:$0x3]
      %v1820 = vld [vmem:[%s1576 + $0x24] sm:$0xc]
      %v1821 = vld [vmem:[%s1576 + $0x28] sm:$0xf]
      %v1822 = vld [vmem:[%s1576 + $0x2c] sm:$0x3]
      %v1823 = vld [vmem:[%s1576 + $0x3c] sm:$0xc]
      %v1824 = vld [vmem:[%s1576 + $0x40] sm:$0xf]
      %v1825 = vld [vmem:[%s1576 + $0x44] sm:$0x3]
      %v1826 = vld [vmem:[%s1576 + $0x54] sm:$0xc]
      %v1827 = vld [vmem:[%s1576 + $0x58] sm:$0xf]
      %v1828 = vld [vmem:[%s1576 + $0x5c] sm:$0x3]
      %v1829 = vld [vmem:[%s1576 + $0x6c] sm:$0xc]
      %v1830 = vld [vmem:[%s1576 + $0x70] sm:$0xf]
      %v1831 = vld [vmem:[%s1576 + $0x74] sm:$0x3]
      %v1832 = vld [vmem:[%s1576 + $0x84] sm:$0xc]
      %v1833 = vld [vmem:[%s1576 + $0x88] sm:$0xf]
      %v1834 = vld [vmem:[%s1576 + $0x8c] sm:$0x3]
      %v1835 = vld [vmem:[%s1576 + $0x9c] sm:$0xc]
      %v1836 = vld [vmem:[%s1576 + $0xa0] sm:$0xf]
      %v1837 = vld [vmem:[%s1576 + $0xa4] sm:$0x3]
      %v1838 = vld [vmem:[%s1576 + $0xb4] sm:$0xc]
      %v1839 = vld [vmem:[%s1576 + $0xb8] sm:$0xf]
      %v1840 = vld [vmem:[%s1576 + $0xbc] sm:$0x3]
      %v1841 = vld [vmem:[%s1576 + $0xcc] sm:$0xc]
      %v1842 = vld [vmem:[%s1576 + $0xd0] sm:$0xf]
      %v1843 = vld [vmem:[%s1576 + $0xd4] sm:$0x3]
      %v1844 = vld [vmem:[%s1576 + $0xe4] sm:$0xc]
      %v1845 = vld [vmem:[%s1576 + $0xe8] sm:$0xf]
      %v1846 = vld [vmem:[%s1576 + $0xec] sm:$0x3]
      %v1847 = vld [vmem:[%s1576 + $0xfc] sm:$0xc]
      %v1848 = vld [vmem:[%s1576 + $0x100] sm:$0xf]
      %v1849 = vld [vmem:[%s1576 + $0x104] sm:$0x3]
      %v1850 = vld [vmem:[%s1576 + $0x114] sm:$0xc]
      %v1851 = vld [vmem:[%s1576 + $0x118] sm:$0xf]
      %v1852 = vld [vmem:[%s1576 + $0x11c] sm:$0x3]
      %v1853 = vld [vmem:[%s1576 + $0x12c] sm:$0xc]
      %v1854 = vld [vmem:[%s1576 + $0x130] sm:$0xf]
      %v1855 = vld [vmem:[%s1576 + $0x134] sm:$0x3]
      %v1856 = vld [vmem:[%s1576 + $0x144] sm:$0xc]
      %v1857 = vld [vmem:[%s1576 + $0x148] sm:$0xf]
      %v1858 = vld [vmem:[%s1576 + $0x14c] sm:$0x3]
      %v1859 = vld [vmem:[%s1576 + $0x15c] sm:$0xc]
      %v1860 = vld [vmem:[%s1576 + $0x160] sm:$0xf]
      %v1861 = vld [vmem:[%s1576 + $0x164] sm:$0x3]
      %v1862 = vld [vmem:[%s1576 + $0x174] sm:$0xc]
      %v1863 = vld [vmem:[%s1576 + $0x178] sm:$0xf]
      %v1864 = vld [vmem:[%s1576 + $0x17c] sm:$0x3]
      %v1913 = vrot.slane %v1817, 6
      %v1914 = vrot.slane %v1913, 4
      %v1915 = vrot.slane %v1818, 6
      %v1916 = vsel %vm804, %v1914, %v1915
      %v1917 = vrot.slane %v1915, 4
      %v1918 = vrot.slane %v1819, 6
      %v1919 = vsel %vm804, %v1917, %v1918
      %v1920 = vrot.slane %v1820, 6
      %v1921 = vrot.slane %v1920, 4
      %v1922 = vrot.slane %v1821, 6
      %v1923 = vsel %vm804, %v1921, %v1922
      %v1924 = vrot.slane %v1922, 4
      %v1925 = vrot.slane %v1822, 6
      %v1926 = vsel %vm804, %v1924, %v1925
      %v1927 = vrot.slane %v1823, 6
      %v1928 = vrot.slane %v1927, 4
      %v1929 = vrot.slane %v1824, 6
      %v1930 = vsel %vm804, %v1928, %v1929
      %v1931 = vrot.slane %v1929, 4
      %v1932 = vrot.slane %v1825, 6
      %v1933 = vsel %vm804, %v1931, %v1932
      %v1934 = vrot.slane %v1826, 6
      %v1935 = vrot.slane %v1934, 4
      %v1936 = vrot.slane %v1827, 6
      %v1937 = vsel %vm804, %v1935, %v1936
      %v1938 = vrot.slane %v1936, 4
      %v1939 = vrot.slane %v1828, 6
      %v1940 = vsel %vm804, %v1938, %v1939
      %v1941 = vrot.slane %v1829, 6
      %v1942 = vrot.slane %v1941, 4
      %v1943 = vrot.slane %v1830, 6
      %v1944 = vsel %vm804, %v1942, %v1943
      %v1945 = vrot.slane %v1943, 4
      %v1946 = vrot.slane %v1831, 6
      %v1947 = vsel %vm804, %v1945, %v1946
      %v1948 = vrot.slane %v1832, 6
      %v1949 = vrot.slane %v1948, 4
      %v1950 = vrot.slane %v1833, 6
      %v1951 = vsel %vm804, %v1949, %v1950
      %v1952 = vrot.slane %v1950, 4
      %v1953 = vrot.slane %v1834, 6
      %v1954 = vsel %vm804, %v1952, %v1953
      %v1955 = vrot.slane %v1835, 6
      %v1956 = vrot.slane %v1955, 4
      %v1957 = vrot.slane %v1836, 6
      %v1958 = vsel %vm804, %v1956, %v1957
      %v1959 = vrot.slane %v1957, 4
      %v1960 = vrot.slane %v1837, 6
      %v1961 = vsel %vm804, %v1959, %v1960
      %v1962 = vrot.slane %v1838, 6
      %v1963 = vrot.slane %v1962, 4
      %v1964 = vrot.slane %v1839, 6
      %v1965 = vsel %vm804, %v1963, %v1964
      %v1966 = vrot.slane %v1964, 4
      %v1967 = vrot.slane %v1840, 6
      %v1968 = vsel %vm804, %v1966, %v1967
      %v1969 = vrot.slane %v1841, 6
      %v1970 = vrot.slane %v1969, 4
      %v1971 = vrot.slane %v1842, 6
      %v1972 = vsel %vm804, %v1970, %v1971
      %v1973 = vrot.slane %v1971, 4
      %v1974 = vrot.slane %v1843, 6
      %v1975 = vsel %vm804, %v1973, %v1974
      %v1976 = vrot.slane %v1844, 6
      %v1977 = vrot.slane %v1976, 4
      %v1978 = vrot.slane %v1845, 6
      %v1979 = vsel %vm804, %v1977, %v1978
      %v1980 = vrot.slane %v1978, 4
      %v1981 = vrot.slane %v1846, 6
      %v1982 = vsel %vm804, %v1980, %v1981
      %v1983 = vrot.slane %v1847, 6
      %v1984 = vrot.slane %v1983, 4
      %v1985 = vrot.slane %v1848, 6
      %v1986 = vsel %vm804, %v1984, %v1985
      %v1987 = vrot.slane %v1985, 4
      %v1988 = vrot.slane %v1849, 6
      %v1989 = vsel %vm804, %v1987, %v1988
      %v1990 = vrot.slane %v1850, 6
      %v1991 = vrot.slane %v1990, 4
      %v1992 = vrot.slane %v1851, 6
      %v1993 = vsel %vm804, %v1991, %v1992
      %v1994 = vrot.slane %v1992, 4
      %v1995 = vrot.slane %v1852, 6
      %v1996 = vsel %vm804, %v1994, %v1995
      %v1997 = vrot.slane %v1853, 6
      %v1998 = vrot.slane %v1997, 4
      %v1999 = vrot.slane %v1854, 6
      %v2000 = vsel %vm804, %v1998, %v1999
      %v2001 = vrot.slane %v1999, 4
      %v2002 = vrot.slane %v1855, 6
      %v2003 = vsel %vm804, %v2001, %v2002
      %v2004 = vrot.slane %v1856, 6
      %v2005 = vrot.slane %v2004, 4
      %v2006 = vrot.slane %v1857, 6
      %v2007 = vsel %vm804, %v2005, %v2006
      %v2008 = vrot.slane %v2006, 4
      %v2009 = vrot.slane %v1858, 6
      %v2010 = vsel %vm804, %v2008, %v2009
      %v2011 = vrot.slane %v1859, 6
      %v2012 = vrot.slane %v2011, 4
      %v2013 = vrot.slane %v1860, 6
      %v2014 = vsel %vm804, %v2012, %v2013
      %v2015 = vrot.slane %v2013, 4
      %v2016 = vrot.slane %v1861, 6
      %v2017 = vsel %vm804, %v2015, %v2016
      %v2018 = vrot.slane %v1862, 6
      %v2019 = vrot.slane %v2018, 4
      %v2020 = vrot.slane %v1863, 6
      %v2021 = vsel %vm804, %v2019, %v2020
      %v2022 = vrot.slane %v2020, 4
      %v2023 = vrot.slane %v1864, 6
      %v2024 = vsel %vm804, %v2022, %v2023
      %v2025 = vunpack.c.l.b16 %v808
      %v2026 = vunpack.c.l.b16 %v811
      %v2027 = vunpack.c.l.b16 %v815
      %v2028 = vunpack.c.l.b16 %v818
      %v2029 = vunpack.c.l.b16 %v822
      %v2030 = vunpack.c.l.b16 %v825
      %v2031 = vunpack.c.l.b16 %v829
      %v2032 = vunpack.c.l.b16 %v832
      %v2033 = vunpack.c.l.b16 %v836
      %v2034 = vunpack.c.l.b16 %v839
      %v2035 = vunpack.c.l.b16 %v843
      %v2036 = vunpack.c.l.b16 %v846
      %v2037 = vunpack.c.l.b16 %v850
      %v2038 = vunpack.c.l.b16 %v853
      %v2039 = vunpack.c.l.b16 %v857
      %v2040 = vunpack.c.l.b16 %v860
      %v2041 = vunpack.c.l.b16 %v864
      %v2042 = vunpack.c.l.b16 %v867
      %v2043 = vunpack.c.l.b16 %v871
      %v2044 = vunpack.c.l.b16 %v874
      %v2045 = vunpack.c.l.b16 %v878
      %v2046 = vunpack.c.l.b16 %v881
      %v2047 = vunpack.c.l.b16 %v885
      %v2048 = vunpack.c.l.b16 %v888
      %v2049 = vunpack.c.l.b16 %v892
      %v2050 = vunpack.c.l.b16 %v895
      %v2051 = vunpack.c.l.b16 %v899
      %v2052 = vunpack.c.l.b16 %v902
      %v2053 = vunpack.c.l.b16 %v906
      %v2054 = vunpack.c.l.b16 %v909
      %v2055 = vunpack.c.l.b16 %v913
      %v2056 = vunpack.c.l.b16 %v916
      %v2057 = vpack.c.b16 %v2026, %v2025
      %v2058 = vpack.c.b16 %v2028, %v2027
      %v2059 = vpack.c.b16 %v2030, %v2029
      %v2060 = vpack.c.b16 %v2032, %v2031
      %v2061 = vpack.c.b16 %v2034, %v2033
      %v2062 = vpack.c.b16 %v2036, %v2035
      %v2063 = vpack.c.b16 %v2038, %v2037
      %v2064 = vpack.c.b16 %v2040, %v2039
      %v2065 = vpack.c.b16 %v2042, %v2041
      %v2066 = vpack.c.b16 %v2044, %v2043
      %v2067 = vpack.c.b16 %v2046, %v2045
      %v2068 = vpack.c.b16 %v2048, %v2047
      %v2069 = vpack.c.b16 %v2050, %v2049
      %v2070 = vpack.c.b16 %v2052, %v2051
      %v2071 = vpack.c.b16 %v2054, %v2053
      %v2072 = vpack.c.b16 %v2056, %v2055
      %v2105 = vunpack.c.l.b16 %v917
      %v2106 = vunpack.c.l.b16 %v918
      %v2107 = vunpack.c.l.b16 %v919
      %v2108 = vunpack.c.l.b16 %v920
      %v2109 = vunpack.c.l.b16 %v921
      %v2110 = vunpack.c.l.b16 %v922
      %v2111 = vunpack.c.l.b16 %v923
      %v2112 = vunpack.c.l.b16 %v924
      %v2113 = vunpack.c.l.b16 %v925
      %v2114 = vunpack.c.l.b16 %v926
      %v2115 = vunpack.c.l.b16 %v927
      %v2116 = vunpack.c.l.b16 %v928
      %v2117 = vunpack.c.l.b16 %v929
      %v2118 = vunpack.c.l.b16 %v930
      %v2119 = vunpack.c.l.b16 %v931
      %v2120 = vunpack.c.l.b16 %v932
      %v2121 = vunpack.c.l.b16 %v933
      %v2122 = vunpack.c.l.b16 %v934
      %v2123 = vunpack.c.l.b16 %v935
      %v2124 = vunpack.c.l.b16 %v936
      %v2125 = vunpack.c.l.b16 %v937
      %v2126 = vunpack.c.l.b16 %v938
      %v2127 = vunpack.c.l.b16 %v939
      %v2128 = vunpack.c.l.b16 %v940
      %v2129 = vunpack.c.l.b16 %v941
      %v2130 = vunpack.c.l.b16 %v942
      %v2131 = vunpack.c.l.b16 %v943
      %v2132 = vunpack.c.l.b16 %v944
      %v2133 = vunpack.c.l.b16 %v945
      %v2134 = vunpack.c.l.b16 %v946
      %v2135 = vunpack.c.l.b16 %v947
      %v2136 = vunpack.c.l.b16 %v948
      %v2137 = vpack.c.b16 %v2106, %v2105
      %v2138 = vpack.c.b16 %v2108, %v2107
      %v2139 = vpack.c.b16 %v2110, %v2109
      %v2140 = vpack.c.b16 %v2112, %v2111
      %v2141 = vpack.c.b16 %v2114, %v2113
      %v2142 = vpack.c.b16 %v2116, %v2115
      %v2143 = vpack.c.b16 %v2118, %v2117
      %v2144 = vpack.c.b16 %v2120, %v2119
      %v2145 = vpack.c.b16 %v2122, %v2121
      %v2146 = vpack.c.b16 %v2124, %v2123
      %v2147 = vpack.c.b16 %v2126, %v2125
      %v2148 = vpack.c.b16 %v2128, %v2127
      %v2149 = vpack.c.b16 %v2130, %v2129
      %v2150 = vpack.c.b16 %v2132, %v2131
      %v2151 = vpack.c.b16 %v2134, %v2133
      %v2152 = vpack.c.b16 %v2136, %v2135
      %2153 = vrot.lane.b32.xlu0 %v2137, 4
      %v2154 = vpop.permute.xlu0 %2153
      %2155 = vrot.lane.b32.xlu0 %v2138, 4
      %v2156 = vpop.permute.xlu0 %2155
      %2157 = vrot.lane.b32.xlu0 %v2139, 4
      %v2158 = vpop.permute.xlu0 %2157
      %2159 = vrot.lane.b32.xlu0 %v2140, 4
      %v2160 = vpop.permute.xlu0 %2159
      %2161 = vrot.lane.b32.xlu0 %v2141, 4
      %v2162 = vpop.permute.xlu0 %2161
      %2163 = vrot.lane.b32.xlu0 %v2142, 4
      %v2164 = vpop.permute.xlu0 %2163
      %2165 = vrot.lane.b32.xlu0 %v2143, 4
      %v2166 = vpop.permute.xlu0 %2165
      %2167 = vrot.lane.b32.xlu0 %v2144, 4
      %v2168 = vpop.permute.xlu0 %2167
      %2169 = vrot.lane.b32.xlu0 %v2145, 4
      %v2170 = vpop.permute.xlu0 %2169
      %2171 = vrot.lane.b32.xlu0 %v2146, 4
      %v2172 = vpop.permute.xlu0 %2171
      %2173 = vrot.lane.b32.xlu0 %v2147, 4
      %v2174 = vpop.permute.xlu0 %2173
      %2175 = vrot.lane.b32.xlu0 %v2148, 4
      %v2176 = vpop.permute.xlu0 %2175
      %2177 = vrot.lane.b32.xlu0 %v2149, 4
      %v2178 = vpop.permute.xlu0 %2177
      %2179 = vrot.lane.b32.xlu0 %v2150, 4
      %v2180 = vpop.permute.xlu0 %2179
      %2181 = vrot.lane.b32.xlu0 %v2151, 4
      %v2182 = vpop.permute.xlu0 %2181
      %2183 = vrot.lane.b32.xlu0 %v2152, 4
      %v2184 = vpop.permute.xlu0 %2183
      %v2185 = vunpack.c.l.b16 %v1048
      %v2186 = vunpack.c.l.b16 %v1051
      %v2187 = vunpack.c.l.b16 %v1055
      %v2188 = vunpack.c.l.b16 %v1058
      %v2189 = vunpack.c.l.b16 %v1062
      %v2190 = vunpack.c.l.b16 %v1065
      %v2191 = vunpack.c.l.b16 %v1069
      %v2192 = vunpack.c.l.b16 %v1072
      %v2193 = vunpack.c.l.b16 %v1076
      %v2194 = vunpack.c.l.b16 %v1079
      %v2195 = vunpack.c.l.b16 %v1083
      %v2196 = vunpack.c.l.b16 %v1086
      %v2197 = vunpack.c.l.b16 %v1090
      %v2198 = vunpack.c.l.b16 %v1093
      %v2199 = vunpack.c.l.b16 %v1097
      %v2200 = vunpack.c.l.b16 %v1100
      %v2201 = vunpack.c.l.b16 %v1104
      %v2202 = vunpack.c.l.b16 %v1107
      %v2203 = vunpack.c.l.b16 %v1111
      %v2204 = vunpack.c.l.b16 %v1114
      %v2205 = vunpack.c.l.b16 %v1118
      %v2206 = vunpack.c.l.b16 %v1121
      %v2207 = vunpack.c.l.b16 %v1125
      %v2208 = vunpack.c.l.b16 %v1128
      %v2209 = vunpack.c.l.b16 %v1132
      %v2210 = vunpack.c.l.b16 %v1135
      %v2211 = vunpack.c.l.b16 %v1139
      %v2212 = vunpack.c.l.b16 %v1142
      %v2213 = vunpack.c.l.b16 %v1146
      %v2214 = vunpack.c.l.b16 %v1149
      %v2215 = vunpack.c.l.b16 %v1153
      %v2216 = vunpack.c.l.b16 %v1156
      %v2217 = vpack.c.b16 %v2186, %v2185
      %v2218 = vpack.c.b16 %v2188, %v2187
      %v2219 = vpack.c.b16 %v2190, %v2189
      %v2220 = vpack.c.b16 %v2192, %v2191
      %v2221 = vpack.c.b16 %v2194, %v2193
      %v2222 = vpack.c.b16 %v2196, %v2195
      %v2223 = vpack.c.b16 %v2198, %v2197
      %v2224 = vpack.c.b16 %v2200, %v2199
      %v2225 = vpack.c.b16 %v2202, %v2201
      %v2226 = vpack.c.b16 %v2204, %v2203
      %v2227 = vpack.c.b16 %v2206, %v2205
      %v2228 = vpack.c.b16 %v2208, %v2207
      %v2229 = vpack.c.b16 %v2210, %v2209
      %v2230 = vpack.c.b16 %v2212, %v2211
      %v2231 = vpack.c.b16 %v2214, %v2213
      %v2232 = vpack.c.b16 %v2216, %v2215
      %2233 = vrot.lane.b32.xlu0 %v2217, 8
      %v2234 = vpop.permute.xlu0 %2233
      %2235 = vrot.lane.b32.xlu0 %v2218, 8
      %v2236 = vpop.permute.xlu0 %2235
      %2237 = vrot.lane.b32.xlu0 %v2219, 8
      %v2238 = vpop.permute.xlu0 %2237
      %2239 = vrot.lane.b32.xlu0 %v2220, 8
      %v2240 = vpop.permute.xlu0 %2239
      %2241 = vrot.lane.b32.xlu0 %v2221, 8
      %v2242 = vpop.permute.xlu0 %2241
      %2243 = vrot.lane.b32.xlu0 %v2222, 8
      %v2244 = vpop.permute.xlu0 %2243
      %2245 = vrot.lane.b32.xlu0 %v2223, 8
      %v2246 = vpop.permute.xlu0 %2245
      %2247 = vrot.lane.b32.xlu0 %v2224, 8
      %v2248 = vpop.permute.xlu0 %2247
      %2249 = vrot.lane.b32.xlu0 %v2225, 8
      %v2250 = vpop.permute.xlu0 %2249
      %2251 = vrot.lane.b32.xlu0 %v2226, 8
      %v2252 = vpop.permute.xlu0 %2251
      %2253 = vrot.lane.b32.xlu0 %v2227, 8
      %v2254 = vpop.permute.xlu0 %2253
      %2255 = vrot.lane.b32.xlu0 %v2228, 8
      %v2256 = vpop.permute.xlu0 %2255
      %2257 = vrot.lane.b32.xlu0 %v2229, 8
      %v2258 = vpop.permute.xlu0 %2257
      %2259 = vrot.lane.b32.xlu0 %v2230, 8
      %v2260 = vpop.permute.xlu0 %2259
      %2261 = vrot.lane.b32.xlu0 %v2231, 8
      %v2262 = vpop.permute.xlu0 %2261
      %2263 = vrot.lane.b32.xlu0 %v2232, 8
      %v2264 = vpop.permute.xlu0 %2263
      %v2265 = vunpack.c.l.b16 %v1256
      %v2266 = vunpack.c.l.b16 %v1259
      %v2267 = vunpack.c.l.b16 %v1263
      %v2268 = vunpack.c.l.b16 %v1266
      %v2269 = vunpack.c.l.b16 %v1270
      %v2270 = vunpack.c.l.b16 %v1273
      %v2271 = vunpack.c.l.b16 %v1277
      %v2272 = vunpack.c.l.b16 %v1280
      %v2273 = vunpack.c.l.b16 %v1284
      %v2274 = vunpack.c.l.b16 %v1287
      %v2275 = vunpack.c.l.b16 %v1291
      %v2276 = vunpack.c.l.b16 %v1294
      %v2277 = vunpack.c.l.b16 %v1298
      %v2278 = vunpack.c.l.b16 %v1301
      %v2279 = vunpack.c.l.b16 %v1305
      %v2280 = vunpack.c.l.b16 %v1308
      %v2281 = vunpack.c.l.b16 %v1312
      %v2282 = vunpack.c.l.b16 %v1315
      %v2283 = vunpack.c.l.b16 %v1319
      %v2284 = vunpack.c.l.b16 %v1322
      %v2285 = vunpack.c.l.b16 %v1326
      %v2286 = vunpack.c.l.b16 %v1329
      %v2287 = vunpack.c.l.b16 %v1333
      %v2288 = vunpack.c.l.b16 %v1336
      %v2289 = vunpack.c.l.b16 %v1340
      %v2290 = vunpack.c.l.b16 %v1343
      %v2291 = vunpack.c.l.b16 %v1347
      %v2292 = vunpack.c.l.b16 %v1350
      %v2293 = vunpack.c.l.b16 %v1354
      %v2294 = vunpack.c.l.b16 %v1357
      %v2295 = vunpack.c.l.b16 %v1361
      %v2296 = vunpack.c.l.b16 %v1364
      %v2297 = vpack.c.b16 %v2266, %v2265
      %v2298 = vpack.c.b16 %v2268, %v2267
      %v2299 = vpack.c.b16 %v2270, %v2269
      %v2300 = vpack.c.b16 %v2272, %v2271
      %v2301 = vpack.c.b16 %v2274, %v2273
      %v2302 = vpack.c.b16 %v2276, %v2275
      %v2303 = vpack.c.b16 %v2278, %v2277
      %v2304 = vpack.c.b16 %v2280, %v2279
      %v2305 = vpack.c.b16 %v2282, %v2281
      %v2306 = vpack.c.b16 %v2284, %v2283
      %v2307 = vpack.c.b16 %v2286, %v2285
      %v2308 = vpack.c.b16 %v2288, %v2287
      %v2309 = vpack.c.b16 %v2290, %v2289
      %v2310 = vpack.c.b16 %v2292, %v2291
      %v2311 = vpack.c.b16 %v2294, %v2293
      %v2312 = vpack.c.b16 %v2296, %v2295
      %2313 = vrot.lane.b32.xlu0 %v2297, 12
      %v2314 = vpop.permute.xlu0 %2313
      %2315 = vrot.lane.b32.xlu0 %v2298, 12
      %v2316 = vpop.permute.xlu0 %2315
      %2317 = vrot.lane.b32.xlu0 %v2299, 12
      %v2318 = vpop.permute.xlu0 %2317
      %2319 = vrot.lane.b32.xlu0 %v2300, 12
      %v2320 = vpop.permute.xlu0 %2319
      %2321 = vrot.lane.b32.xlu0 %v2301, 12
      %v2322 = vpop.permute.xlu0 %2321
      %2323 = vrot.lane.b32.xlu0 %v2302, 12
      %v2324 = vpop.permute.xlu0 %2323
      %2325 = vrot.lane.b32.xlu0 %v2303, 12
      %v2326 = vpop.permute.xlu0 %2325
      %2327 = vrot.lane.b32.xlu0 %v2304, 12
      %v2328 = vpop.permute.xlu0 %2327
      %2329 = vrot.lane.b32.xlu0 %v2305, 12
      %v2330 = vpop.permute.xlu0 %2329
      %2331 = vrot.lane.b32.xlu0 %v2306, 12
      %v2332 = vpop.permute.xlu0 %2331
      %2333 = vrot.lane.b32.xlu0 %v2307, 12
      %v2334 = vpop.permute.xlu0 %2333
      %2335 = vrot.lane.b32.xlu0 %v2308, 12
      %v2336 = vpop.permute.xlu0 %2335
      %2337 = vrot.lane.b32.xlu0 %v2309, 12
      %v2338 = vpop.permute.xlu0 %2337
      %2339 = vrot.lane.b32.xlu0 %v2310, 12
      %v2340 = vpop.permute.xlu0 %2339
      %2341 = vrot.lane.b32.xlu0 %v2311, 12
      %v2342 = vpop.permute.xlu0 %2341
      %2343 = vrot.lane.b32.xlu0 %v2312, 12
      %v2344 = vpop.permute.xlu0 %2343
      %v2345 = vunpack.c.l.b16 %v1464
      %v2346 = vunpack.c.l.b16 %v1467
      %v2347 = vunpack.c.l.b16 %v1471
      %v2348 = vunpack.c.l.b16 %v1474
      %v2349 = vunpack.c.l.b16 %v1478
      %v2350 = vunpack.c.l.b16 %v1481
      %v2351 = vunpack.c.l.b16 %v1485
      %v2352 = vunpack.c.l.b16 %v1488
      %v2353 = vunpack.c.l.b16 %v1492
      %v2354 = vunpack.c.l.b16 %v1495
      %v2355 = vunpack.c.l.b16 %v1499
      %v2356 = vunpack.c.l.b16 %v1502
      %v2357 = vunpack.c.l.b16 %v1506
      %v2358 = vunpack.c.l.b16 %v1509
      %v2359 = vunpack.c.l.b16 %v1513
      %v2360 = vunpack.c.l.b16 %v1516
      %v2361 = vunpack.c.l.b16 %v1520
      %v2362 = vunpack.c.l.b16 %v1523
      %v2363 = vunpack.c.l.b16 %v1527
      %v2364 = vunpack.c.l.b16 %v1530
      %v2365 = vunpack.c.l.b16 %v1534
      %v2366 = vunpack.c.l.b16 %v1537
      %v2367 = vunpack.c.l.b16 %v1541
      %v2368 = vunpack.c.l.b16 %v1544
      %v2369 = vunpack.c.l.b16 %v1548
      %v2370 = vunpack.c.l.b16 %v1551
      %v2371 = vunpack.c.l.b16 %v1555
      %v2372 = vunpack.c.l.b16 %v1558
      %v2373 = vunpack.c.l.b16 %v1562
      %v2374 = vunpack.c.l.b16 %v1565
      %v2375 = vunpack.c.l.b16 %v1569
      %v2376 = vunpack.c.l.b16 %v1572
      %v2377 = vpack.c.b16 %v2346, %v2345
      %v2378 = vpack.c.b16 %v2348, %v2347
      %v2379 = vpack.c.b16 %v2350, %v2349
      %v2380 = vpack.c.b16 %v2352, %v2351
      %v2381 = vpack.c.b16 %v2354, %v2353
      %v2382 = vpack.c.b16 %v2356, %v2355
      %v2383 = vpack.c.b16 %v2358, %v2357
      %v2384 = vpack.c.b16 %v2360, %v2359
      %v2385 = vpack.c.b16 %v2362, %v2361
      %v2386 = vpack.c.b16 %v2364, %v2363
      %v2387 = vpack.c.b16 %v2366, %v2365
      %v2388 = vpack.c.b16 %v2368, %v2367
      %v2389 = vpack.c.b16 %v2370, %v2369
      %v2390 = vpack.c.b16 %v2372, %v2371
      %v2391 = vpack.c.b16 %v2374, %v2373
      %v2392 = vpack.c.b16 %v2376, %v2375
      %2393 = vrot.lane.b32.xlu0 %v2377, 16
      %v2394 = vpop.permute.xlu0 %2393
      %2395 = vrot.lane.b32.xlu0 %v2378, 16
      %v2396 = vpop.permute.xlu0 %2395
      %2397 = vrot.lane.b32.xlu0 %v2379, 16
      %v2398 = vpop.permute.xlu0 %2397
      %2399 = vrot.lane.b32.xlu0 %v2380, 16
      %v2400 = vpop.permute.xlu0 %2399
      %2401 = vrot.lane.b32.xlu0 %v2381, 16
      %v2402 = vpop.permute.xlu0 %2401
      %2403 = vrot.lane.b32.xlu0 %v2382, 16
      %v2404 = vpop.permute.xlu0 %2403
      %2405 = vrot.lane.b32.xlu0 %v2383, 16
      %v2406 = vpop.permute.xlu0 %2405
      %2407 = vrot.lane.b32.xlu0 %v2384, 16
      %v2408 = vpop.permute.xlu0 %2407
      %2409 = vrot.lane.b32.xlu0 %v2385, 16
      %v2410 = vpop.permute.xlu0 %2409
      %2411 = vrot.lane.b32.xlu0 %v2386, 16
      %v2412 = vpop.permute.xlu0 %2411
      %2413 = vrot.lane.b32.xlu0 %v2387, 16
      %v2414 = vpop.permute.xlu0 %2413
      %2415 = vrot.lane.b32.xlu0 %v2388, 16
      %v2416 = vpop.permute.xlu0 %2415
      %2417 = vrot.lane.b32.xlu0 %v2389, 16
      %v2418 = vpop.permute.xlu0 %2417
      %2419 = vrot.lane.b32.xlu0 %v2390, 16
      %v2420 = vpop.permute.xlu0 %2419
      %2421 = vrot.lane.b32.xlu0 %v2391, 16
      %v2422 = vpop.permute.xlu0 %2421
      %2423 = vrot.lane.b32.xlu0 %v2392, 16
      %v2424 = vpop.permute.xlu0 %2423
      %v2425 = vunpack.c.l.b16 %v1676
      %v2426 = vunpack.c.l.b16 %v1679
      %v2427 = vunpack.c.l.b16 %v1683
      %v2428 = vunpack.c.l.b16 %v1686
      %v2429 = vunpack.c.l.b16 %v1690
      %v2430 = vunpack.c.l.b16 %v1693
      %v2431 = vunpack.c.l.b16 %v1697
      %v2432 = vunpack.c.l.b16 %v1700
      %v2433 = vunpack.c.l.b16 %v1704
      %v2434 = vunpack.c.l.b16 %v1707
      %v2435 = vunpack.c.l.b16 %v1711
      %v2436 = vunpack.c.l.b16 %v1714
      %v2437 = vunpack.c.l.b16 %v1718
      %v2438 = vunpack.c.l.b16 %v1721
      %v2439 = vunpack.c.l.b16 %v1725
      %v2440 = vunpack.c.l.b16 %v1728
      %v2441 = vunpack.c.l.b16 %v1732
      %v2442 = vunpack.c.l.b16 %v1735
      %v2443 = vunpack.c.l.b16 %v1739
      %v2444 = vunpack.c.l.b16 %v1742
      %v2445 = vunpack.c.l.b16 %v1746
      %v2446 = vunpack.c.l.b16 %v1749
      %v2447 = vunpack.c.l.b16 %v1753
      %v2448 = vunpack.c.l.b16 %v1756
      %v2449 = vunpack.c.l.b16 %v1760
      %v2450 = vunpack.c.l.b16 %v1763
      %v2451 = vunpack.c.l.b16 %v1767
      %v2452 = vunpack.c.l.b16 %v1770
      %v2453 = vunpack.c.l.b16 %v1774
      %v2454 = vunpack.c.l.b16 %v1777
      %v2455 = vunpack.c.l.b16 %v1781
      %v2456 = vunpack.c.l.b16 %v1784
      %v2457 = vpack.c.b16 %v2426, %v2425
      %v2458 = vpack.c.b16 %v2428, %v2427
      %v2459 = vpack.c.b16 %v2430, %v2429
      %v2460 = vpack.c.b16 %v2432, %v2431
      %v2461 = vpack.c.b16 %v2434, %v2433
      %v2462 = vpack.c.b16 %v2436, %v2435
      %v2463 = vpack.c.b16 %v2438, %v2437
      %v2464 = vpack.c.b16 %v2440, %v2439
      %v2465 = vpack.c.b16 %v2442, %v2441
      %v2466 = vpack.c.b16 %v2444, %v2443
      %v2467 = vpack.c.b16 %v2446, %v2445
      %v2468 = vpack.c.b16 %v2448, %v2447
      %v2469 = vpack.c.b16 %v2450, %v2449
      %v2470 = vpack.c.b16 %v2452, %v2451
      %v2471 = vpack.c.b16 %v2454, %v2453
      %v2472 = vpack.c.b16 %v2456, %v2455
      %2473 = vrot.lane.b32.xlu0 %v2457, 20
      %v2474 = vpop.permute.xlu0 %2473
      %2475 = vrot.lane.b32.xlu0 %v2458, 20
      %v2476 = vpop.permute.xlu0 %2475
      %2477 = vrot.lane.b32.xlu0 %v2459, 20
      %v2478 = vpop.permute.xlu0 %2477
      %2479 = vrot.lane.b32.xlu0 %v2460, 20
      %v2480 = vpop.permute.xlu0 %2479
      %2481 = vrot.lane.b32.xlu0 %v2461, 20
      %v2482 = vpop.permute.xlu0 %2481
      %2483 = vrot.lane.b32.xlu0 %v2462, 20
      %v2484 = vpop.permute.xlu0 %2483
      %2485 = vrot.lane.b32.xlu0 %v2463, 20
      %v2486 = vpop.permute.xlu0 %2485
      %2487 = vrot.lane.b32.xlu0 %v2464, 20
      %v2488 = vpop.permute.xlu0 %2487
      %2489 = vrot.lane.b32.xlu0 %v2465, 20
      %v2490 = vpop.permute.xlu0 %2489
      %2491 = vrot.lane.b32.xlu0 %v2466, 20
      %v2492 = vpop.permute.xlu0 %2491
      %2493 = vrot.lane.b32.xlu0 %v2467, 20
      %v2494 = vpop.permute.xlu0 %2493
      %2495 = vrot.lane.b32.xlu0 %v2468, 20
      %v2496 = vpop.permute.xlu0 %2495
      %2497 = vrot.lane.b32.xlu0 %v2469, 20
      %v2498 = vpop.permute.xlu0 %2497
      %2499 = vrot.lane.b32.xlu0 %v2470, 20
      %v2500 = vpop.permute.xlu0 %2499
      %2501 = vrot.lane.b32.xlu0 %v2471, 20
      %v2502 = vpop.permute.xlu0 %2501
      %2503 = vrot.lane.b32.xlu0 %v2472, 20
      %v2504 = vpop.permute.xlu0 %2503
      %v2537 = vunpack.c.l.b16 %v1785
      %v2538 = vunpack.c.l.b16 %v1786
      %v2539 = vunpack.c.l.b16 %v1787
      %v2540 = vunpack.c.l.b16 %v1788
      %v2541 = vunpack.c.l.b16 %v1789
      %v2542 = vunpack.c.l.b16 %v1790
      %v2543 = vunpack.c.l.b16 %v1791
      %v2544 = vunpack.c.l.b16 %v1792
      %v2545 = vunpack.c.l.b16 %v1793
      %v2546 = vunpack.c.l.b16 %v1794
      %v2547 = vunpack.c.l.b16 %v1795
      %v2548 = vunpack.c.l.b16 %v1796
      %v2549 = vunpack.c.l.b16 %v1797
      %v2550 = vunpack.c.l.b16 %v1798
      %v2551 = vunpack.c.l.b16 %v1799
      %v2552 = vunpack.c.l.b16 %v1800
      %v2553 = vunpack.c.l.b16 %v1801
      %v2554 = vunpack.c.l.b16 %v1802
      %v2555 = vunpack.c.l.b16 %v1803
      %v2556 = vunpack.c.l.b16 %v1804
      %v2557 = vunpack.c.l.b16 %v1805
      %v2558 = vunpack.c.l.b16 %v1806
      %v2559 = vunpack.c.l.b16 %v1807
      %v2560 = vunpack.c.l.b16 %v1808
      %v2561 = vunpack.c.l.b16 %v1809
      %v2562 = vunpack.c.l.b16 %v1810
      %v2563 = vunpack.c.l.b16 %v1811
      %v2564 = vunpack.c.l.b16 %v1812
      %v2565 = vunpack.c.l.b16 %v1813
      %v2566 = vunpack.c.l.b16 %v1814
      %v2567 = vunpack.c.l.b16 %v1815
      %v2568 = vunpack.c.l.b16 %v1816
      %v2569 = vpack.c.b16 %v2538, %v2537
      %v2570 = vpack.c.b16 %v2540, %v2539
      %v2571 = vpack.c.b16 %v2542, %v2541
      %v2572 = vpack.c.b16 %v2544, %v2543
      %v2573 = vpack.c.b16 %v2546, %v2545
      %v2574 = vpack.c.b16 %v2548, %v2547
      %v2575 = vpack.c.b16 %v2550, %v2549
      %v2576 = vpack.c.b16 %v2552, %v2551
      %v2577 = vpack.c.b16 %v2554, %v2553
      %v2578 = vpack.c.b16 %v2556, %v2555
      %v2579 = vpack.c.b16 %v2558, %v2557
      %v2580 = vpack.c.b16 %v2560, %v2559
      %v2581 = vpack.c.b16 %v2562, %v2561
      %v2582 = vpack.c.b16 %v2564, %v2563
      %v2583 = vpack.c.b16 %v2566, %v2565
      %v2584 = vpack.c.b16 %v2568, %v2567
      %2585 = vrot.lane.b32.xlu0 %v2569, 24
      %v2586 = vpop.permute.xlu0 %2585
      %2587 = vrot.lane.b32.xlu0 %v2570, 24
      %v2588 = vpop.permute.xlu0 %2587
      %2589 = vrot.lane.b32.xlu0 %v2571, 24
      %v2590 = vpop.permute.xlu0 %2589
      %2591 = vrot.lane.b32.xlu0 %v2572, 24
      %v2592 = vpop.permute.xlu0 %2591
      %2593 = vrot.lane.b32.xlu0 %v2573, 24
      %v2594 = vpop.permute.xlu0 %2593
      %2595 = vrot.lane.b32.xlu0 %v2574, 24
      %v2596 = vpop.permute.xlu0 %2595
      %2597 = vrot.lane.b32.xlu0 %v2575, 24
      %v2598 = vpop.permute.xlu0 %2597
      %2599 = vrot.lane.b32.xlu0 %v2576, 24
      %v2600 = vpop.permute.xlu0 %2599
      %2601 = vrot.lane.b32.xlu0 %v2577, 24
      %v2602 = vpop.permute.xlu0 %2601
      %2603 = vrot.lane.b32.xlu0 %v2578, 24
      %v2604 = vpop.permute.xlu0 %2603
      %2605 = vrot.lane.b32.xlu0 %v2579, 24
      %v2606 = vpop.permute.xlu0 %2605
      %2607 = vrot.lane.b32.xlu0 %v2580, 24
      %v2608 = vpop.permute.xlu0 %2607
      %2609 = vrot.lane.b32.xlu0 %v2581, 24
      %v2610 = vpop.permute.xlu0 %2609
      %2611 = vrot.lane.b32.xlu0 %v2582, 24
      %v2612 = vpop.permute.xlu0 %2611
      %2613 = vrot.lane.b32.xlu0 %v2583, 24
      %v2614 = vpop.permute.xlu0 %2613
      %2615 = vrot.lane.b32.xlu0 %v2584, 24
      %v2616 = vpop.permute.xlu0 %2615
      %v2617 = vunpack.c.l.b16 %v1916
      %v2618 = vunpack.c.l.b16 %v1919
      %v2619 = vunpack.c.l.b16 %v1923
      %v2620 = vunpack.c.l.b16 %v1926
      %v2621 = vunpack.c.l.b16 %v1930
      %v2622 = vunpack.c.l.b16 %v1933
      %v2623 = vunpack.c.l.b16 %v1937
      %v2624 = vunpack.c.l.b16 %v1940
      %v2625 = vunpack.c.l.b16 %v1944
      %v2626 = vunpack.c.l.b16 %v1947
      %v2627 = vunpack.c.l.b16 %v1951
      %v2628 = vunpack.c.l.b16 %v1954
      %v2629 = vunpack.c.l.b16 %v1958
      %v2630 = vunpack.c.l.b16 %v1961
      %v2631 = vunpack.c.l.b16 %v1965
      %v2632 = vunpack.c.l.b16 %v1968
      %v2633 = vunpack.c.l.b16 %v1972
      %v2634 = vunpack.c.l.b16 %v1975
      %v2635 = vunpack.c.l.b16 %v1979
      %v2636 = vunpack.c.l.b16 %v1982
      %v2637 = vunpack.c.l.b16 %v1986
      %v2638 = vunpack.c.l.b16 %v1989
      %v2639 = vunpack.c.l.b16 %v1993
      %v2640 = vunpack.c.l.b16 %v1996
      %v2641 = vunpack.c.l.b16 %v2000
      %v2642 = vunpack.c.l.b16 %v2003
      %v2643 = vunpack.c.l.b16 %v2007
      %v2644 = vunpack.c.l.b16 %v2010
      %v2645 = vunpack.c.l.b16 %v2014
      %v2646 = vunpack.c.l.b16 %v2017
      %v2647 = vunpack.c.l.b16 %v2021
      %v2648 = vunpack.c.l.b16 %v2024
      %v2649 = vpack.c.b16 %v2618, %v2617
      %v2650 = vpack.c.b16 %v2620, %v2619
      %v2651 = vpack.c.b16 %v2622, %v2621
      %v2652 = vpack.c.b16 %v2624, %v2623
      %v2653 = vpack.c.b16 %v2626, %v2625
      %v2654 = vpack.c.b16 %v2628, %v2627
      %v2655 = vpack.c.b16 %v2630, %v2629
      %v2656 = vpack.c.b16 %v2632, %v2631
      %v2657 = vpack.c.b16 %v2634, %v2633
      %v2658 = vpack.c.b16 %v2636, %v2635
      %v2659 = vpack.c.b16 %v2638, %v2637
      %v2660 = vpack.c.b16 %v2640, %v2639
      %v2661 = vpack.c.b16 %v2642, %v2641
      %v2662 = vpack.c.b16 %v2644, %v2643
      %v2663 = vpack.c.b16 %v2646, %v2645
      %v2664 = vpack.c.b16 %v2648, %v2647
      %2665 = vrot.lane.b32.xlu0 %v2649, 28
      %v2666 = vpop.permute.xlu0 %2665
      %2667 = vrot.lane.b32.xlu0 %v2650, 28
      %v2668 = vpop.permute.xlu0 %2667
      %2669 = vrot.lane.b32.xlu0 %v2651, 28
      %v2670 = vpop.permute.xlu0 %2669
      %2671 = vrot.lane.b32.xlu0 %v2652, 28
      %v2672 = vpop.permute.xlu0 %2671
      %2673 = vrot.lane.b32.xlu0 %v2653, 28
      %v2674 = vpop.permute.xlu0 %2673
      %2675 = vrot.lane.b32.xlu0 %v2654, 28
      %v2676 = vpop.permute.xlu0 %2675
      %2677 = vrot.lane.b32.xlu0 %v2655, 28
      %v2678 = vpop.permute.xlu0 %2677
      %2679 = vrot.lane.b32.xlu0 %v2656, 28
      %v2680 = vpop.permute.xlu0 %2679
      %2681 = vrot.lane.b32.xlu0 %v2657, 28
      %v2682 = vpop.permute.xlu0 %2681
      %2683 = vrot.lane.b32.xlu0 %v2658, 28
      %v2684 = vpop.permute.xlu0 %2683
      %2685 = vrot.lane.b32.xlu0 %v2659, 28
      %v2686 = vpop.permute.xlu0 %2685
      %2687 = vrot.lane.b32.xlu0 %v2660, 28
      %v2688 = vpop.permute.xlu0 %2687
      %2689 = vrot.lane.b32.xlu0 %v2661, 28
      %v2690 = vpop.permute.xlu0 %2689
      %2691 = vrot.lane.b32.xlu0 %v2662, 28
      %v2692 = vpop.permute.xlu0 %2691
      %2693 = vrot.lane.b32.xlu0 %v2663, 28
      %v2694 = vpop.permute.xlu0 %2693
      %2695 = vrot.lane.b32.xlu0 %v2664, 28
      %v2696 = vpop.permute.xlu0 %2695
      %v2699 = vsel %vm488, %v2057, %v2154
      %v2702 = vsel %vm488, %v2058, %v2156
      %v2705 = vsel %vm488, %v2059, %v2158
      %v2708 = vsel %vm488, %v2060, %v2160
      %v2711 = vsel %vm488, %v2061, %v2162
      %v2714 = vsel %vm488, %v2062, %v2164
      %v2717 = vsel %vm488, %v2063, %v2166
      %v2720 = vsel %vm488, %v2064, %v2168
      %v2723 = vsel %vm488, %v2065, %v2170
      %v2726 = vsel %vm488, %v2066, %v2172
      %v2729 = vsel %vm488, %v2067, %v2174
      %v2732 = vsel %vm488, %v2068, %v2176
      %v2735 = vsel %vm488, %v2069, %v2178
      %v2738 = vsel %vm488, %v2070, %v2180
      %v2741 = vsel %vm488, %v2071, %v2182
      %v2744 = vsel %vm488, %v2072, %v2184
      %vm2745 = vcmask 64512
      %v2747 = vsel %vm2745, %v2699, %v2234
      %v2749 = vsel %vm2745, %v2702, %v2236
      %v2751 = vsel %vm2745, %v2705, %v2238
      %v2753 = vsel %vm2745, %v2708, %v2240
      %v2755 = vsel %vm2745, %v2711, %v2242
      %v2757 = vsel %vm2745, %v2714, %v2244
      %v2759 = vsel %vm2745, %v2717, %v2246
      %v2761 = vsel %vm2745, %v2720, %v2248
      %v2763 = vsel %vm2745, %v2723, %v2250
      %v2765 = vsel %vm2745, %v2726, %v2252
      %v2767 = vsel %vm2745, %v2729, %v2254
      %v2769 = vsel %vm2745, %v2732, %v2256
      %v2771 = vsel %vm2745, %v2735, %v2258
      %v2773 = vsel %vm2745, %v2738, %v2260
      %v2775 = vsel %vm2745, %v2741, %v2262
      %v2777 = vsel %vm2745, %v2744, %v2264
      %vm2778 = vcmask 97280
      %v2780 = vsel %vm2778, %v2747, %v2314
      %v2782 = vsel %vm2778, %v2749, %v2316
      %v2784 = vsel %vm2778, %v2751, %v2318
      %v2786 = vsel %vm2778, %v2753, %v2320
      %v2788 = vsel %vm2778, %v2755, %v2322
      %v2790 = vsel %vm2778, %v2757, %v2324
      %v2792 = vsel %vm2778, %v2759, %v2326
      %v2794 = vsel %vm2778, %v2761, %v2328
      %v2796 = vsel %vm2778, %v2763, %v2330
      %v2798 = vsel %vm2778, %v2765, %v2332
      %v2800 = vsel %vm2778, %v2767, %v2334
      %v2802 = vsel %vm2778, %v2769, %v2336
      %v2804 = vsel %vm2778, %v2771, %v2338
      %v2806 = vsel %vm2778, %v2773, %v2340
      %v2808 = vsel %vm2778, %v2775, %v2342
      %v2810 = vsel %vm2778, %v2777, %v2344
      %vm2811 = vcmask 130048
      %v2813 = vsel %vm2811, %v2780, %v2394
      %v2815 = vsel %vm2811, %v2782, %v2396
      %v2817 = vsel %vm2811, %v2784, %v2398
      %v2819 = vsel %vm2811, %v2786, %v2400
      %v2821 = vsel %vm2811, %v2788, %v2402
      %v2823 = vsel %vm2811, %v2790, %v2404
      %v2825 = vsel %vm2811, %v2792, %v2406
      %v2827 = vsel %vm2811, %v2794, %v2408
      %v2829 = vsel %vm2811, %v2796, %v2410
      %v2831 = vsel %vm2811, %v2798, %v2412
      %v2833 = vsel %vm2811, %v2800, %v2414
      %v2835 = vsel %vm2811, %v2802, %v2416
      %v2837 = vsel %vm2811, %v2804, %v2418
      %v2839 = vsel %vm2811, %v2806, %v2420
      %v2841 = vsel %vm2811, %v2808, %v2422
      %v2843 = vsel %vm2811, %v2810, %v2424
      %vm2844 = vcmask 162816
      %v2846 = vsel %vm2844, %v2813, %v2474
      %v2848 = vsel %vm2844, %v2815, %v2476
      %v2850 = vsel %vm2844, %v2817, %v2478
      %v2852 = vsel %vm2844, %v2819, %v2480
      %v2854 = vsel %vm2844, %v2821, %v2482
      %v2856 = vsel %vm2844, %v2823, %v2484
      %v2858 = vsel %vm2844, %v2825, %v2486
      %v2860 = vsel %vm2844, %v2827, %v2488
      %v2862 = vsel %vm2844, %v2829, %v2490
      %v2864 = vsel %vm2844, %v2831, %v2492
      %v2866 = vsel %vm2844, %v2833, %v2494
      %v2868 = vsel %vm2844, %v2835, %v2496
      %v2870 = vsel %vm2844, %v2837, %v2498
      %v2872 = vsel %vm2844, %v2839, %v2500
      %v2874 = vsel %vm2844, %v2841, %v2502
      %v2876 = vsel %vm2844, %v2843, %v2504
      %vm2877 = vcmask 195584
      %v2879 = vsel %vm2877, %v2846, %v2586
      %v2881 = vsel %vm2877, %v2848, %v2588
      %v2883 = vsel %vm2877, %v2850, %v2590
      %v2885 = vsel %vm2877, %v2852, %v2592
      %v2887 = vsel %vm2877, %v2854, %v2594
      %v2889 = vsel %vm2877, %v2856, %v2596
      %v2891 = vsel %vm2877, %v2858, %v2598
      %v2893 = vsel %vm2877, %v2860, %v2600
      %v2895 = vsel %vm2877, %v2862, %v2602
      %v2897 = vsel %vm2877, %v2864, %v2604
      %v2899 = vsel %vm2877, %v2866, %v2606
      %v2901 = vsel %vm2877, %v2868, %v2608
      %v2903 = vsel %vm2877, %v2870, %v2610
      %v2905 = vsel %vm2877, %v2872, %v2612
      %v2907 = vsel %vm2877, %v2874, %v2614
      %v2909 = vsel %vm2877, %v2876, %v2616
      %vm2910 = vcmask 228352
      %v2912 = vsel %vm2910, %v2879, %v2666
      %v2914 = vsel %vm2910, %v2881, %v2668
      %v2916 = vsel %vm2910, %v2883, %v2670
      %v2918 = vsel %vm2910, %v2885, %v2672
      %v2920 = vsel %vm2910, %v2887, %v2674
      %v2922 = vsel %vm2910, %v2889, %v2676
      %v2924 = vsel %vm2910, %v2891, %v2678
      %v2926 = vsel %vm2910, %v2893, %v2680
      %v2928 = vsel %vm2910, %v2895, %v2682
      %v2930 = vsel %vm2910, %v2897, %v2684
      %v2932 = vsel %vm2910, %v2899, %v2686
      %v2934 = vsel %vm2910, %v2901, %v2688
      %v2936 = vsel %vm2910, %v2903, %v2690
      %v2938 = vsel %vm2910, %v2905, %v2692
      %v2940 = vsel %vm2910, %v2907, %v2694
      %v2942 = vsel %vm2910, %v2909, %v2696
      %v2943 = vld [vmem:[%s3] sm:$0xf]
      %v2944 = vld [vmem:[%s3 + $0x4] sm:$0xf]
      %v2945 = vld [vmem:[%s3 + $0x8] sm:$0xf]
      %v2946 = vld [vmem:[%s3 + $0xc] sm:$0xf]
      %v2951 = vunpack.c.l.b16 %v2943
      %v2952 = vunpack.c.l.b16 %v2944
      %v2953 = vunpack.c.l.b16 %v2945
      %v2954 = vunpack.c.l.b16 %v2946
      %v2955 = vpack.c.b16 %v2952, %v2951
      %v2956 = vpack.c.b16 %v2954, %v2953
      %vm2959 = vcmask 261120
      %v2960 = vsel %vm2959, %v2912, 0
      %v2962 = vsel %vm2959, %v2914, 0
      %v2964 = vsel %vm2959, %v2916, 0
      %v2966 = vsel %vm2959, %v2918, 0
      %v2968 = vsel %vm2959, %v2920, 0
      %v2970 = vsel %vm2959, %v2922, 0
      %v2972 = vsel %vm2959, %v2924, 0
      %v2974 = vsel %vm2959, %v2926, 0
      %v2976 = vsel %vm2959, %v2928, 0
      %v2978 = vsel %vm2959, %v2930, 0
      %v2980 = vsel %vm2959, %v2932, 0
      %v2982 = vsel %vm2959, %v2934, 0
      %v2984 = vsel %vm2959, %v2936, 0
      %v2986 = vsel %vm2959, %v2938, 0
      %v2988 = vsel %vm2959, %v2940, 0
      %v2990 = vsel %vm2959, %v2942, 0
      %2992 = vmatprep.subr.bf16.mxu0 0
      %2993 = vmatpush1.bf16.msra.mxu0 0
      %2994 = vmatprep.subr.bf16.mxu0 0
      %2995 = vmatpush1.bf16.msra.mxu0 0
      %2996 = vmatprep.subr.bf16.mxu0 0
      %2997 = vmatpush1.bf16.msra.mxu0 0
      %2998 = vmatprep.subr.bf16.mxu0 0
      %2999 = vmatpush1.bf16.msra.mxu0 0
      %3000 = vmatprep.subr.bf16.mxu0 0
      %3001 = vmatpush1.bf16.msra.mxu0 0
      %3002 = vmatprep.subr.bf16.mxu0 0
      %3003 = vmatpush1.bf16.msra.mxu0 0
      %3004 = vmatprep.subr.bf16.mxu0 0
      %3005 = vmatpush1.bf16.msra.mxu0 %v2956
      %3006 = vmatprep.subr.bf16.mxu0 0
      %3007 = vmatpush1.bf16.msra.mxu0 %v2955
      %3008 = vmatprep.subr.bf16.mxu0 0
      %3009 = vmatpush2.bf16.msra.mxu0 0
      %3010 = vmatprep.subr.bf16.mxu0 0
      %3011 = vmatpush2.bf16.msra.mxu0 0
      %3012 = vmatprep.subr.bf16.mxu0 0
      %3013 = vmatpush2.bf16.msra.mxu0 0
      %3014 = vmatprep.subr.bf16.mxu0 0
      %3015 = vmatpush2.bf16.msra.mxu0 0
      %3016 = vmatprep.subr.bf16.mxu0 0
      %3017 = vmatpush2.bf16.msra.mxu0 0
      %3018 = vmatprep.subr.bf16.mxu0 0
      %3019 = vmatpush2.bf16.msra.mxu0 0
      %3020 = vmatprep.subr.bf16.mxu0 0
      %3021 = vmatpush2.bf16.msra.mxu0 0
      %3022 = vmatprep.subr.bf16.mxu0 0
      %3023 = vmatpush2.bf16.msra.mxu0 0
      %3024 = vmatprep.mubr.bf16.mxu0 0
      %3025 = vmatmul.mubr.bf16.gmra.mxu0 %v2960
      %v3026 = vpop.f32.mrf.mxu0
      %v3027 = vadd.f32 0.0, %v3026
      %v3028 = vpop.f32.mrf.mxu0
      %v3029 = vpop.f32.mrf.mxu0
      %v3030 = vadd.f32 0.0, %v3029
      %v3031 = vpop.f32.mrf.mxu0
      %3032 = vmatprep.mubr.bf16.mxu0 0
      %3033 = vmatmul.mubr.bf16.gmra.mxu0 %v2962
      %v3034 = vpop.f32.mrf.mxu0
      %v3035 = vadd.f32 0.0, %v3034
      %v3036 = vpop.f32.mrf.mxu0
      %v3037 = vpop.f32.mrf.mxu0
      %v3038 = vadd.f32 0.0, %v3037
      %v3039 = vpop.f32.mrf.mxu0
      %3040 = vmatprep.mubr.bf16.mxu0 0
      %3041 = vmatmul.mubr.bf16.gmra.mxu0 %v2964
      %v3042 = vpop.f32.mrf.mxu0
      %v3043 = vadd.f32 0.0, %v3042
      %v3044 = vpop.f32.mrf.mxu0
      %v3045 = vpop.f32.mrf.mxu0
      %v3046 = vadd.f32 0.0, %v3045
      %v3047 = vpop.f32.mrf.mxu0
      %3048 = vmatprep.mubr.bf16.mxu0 0
      %3049 = vmatmul.mubr.bf16.gmra.mxu0 %v2966
      %v3050 = vpop.f32.mrf.mxu0
      %v3051 = vadd.f32 0.0, %v3050
      %v3052 = vpop.f32.mrf.mxu0
      %v3053 = vpop.f32.mrf.mxu0
      %v3054 = vadd.f32 0.0, %v3053
      %v3055 = vpop.f32.mrf.mxu0
      %3056 = vmatprep.mubr.bf16.mxu0 0
      %3057 = vmatmul.mubr.bf16.gmra.mxu0 %v2968
      %v3058 = vpop.f32.mrf.mxu0
      %v3059 = vadd.f32 0.0, %v3058
      %v3060 = vpop.f32.mrf.mxu0
      %v3061 = vpop.f32.mrf.mxu0
      %v3062 = vadd.f32 0.0, %v3061
      %v3063 = vpop.f32.mrf.mxu0
      %3064 = vmatprep.mubr.bf16.mxu0 0
      %3065 = vmatmul.mubr.bf16.gmra.mxu0 %v2970
      %v3066 = vpop.f32.mrf.mxu0
      %v3067 = vadd.f32 0.0, %v3066
      %v3068 = vpop.f32.mrf.mxu0
      %v3069 = vpop.f32.mrf.mxu0
      %v3070 = vadd.f32 0.0, %v3069
      %v3071 = vpop.f32.mrf.mxu0
      %3072 = vmatprep.mubr.bf16.mxu0 0
      %3073 = vmatmul.mubr.bf16.gmra.mxu0 %v2972
      %v3074 = vpop.f32.mrf.mxu0
      %v3075 = vadd.f32 0.0, %v3074
      %v3076 = vpop.f32.mrf.mxu0
      %v3077 = vpop.f32.mrf.mxu0
      %v3078 = vadd.f32 0.0, %v3077
      %v3079 = vpop.f32.mrf.mxu0
      %3080 = vmatprep.mubr.bf16.mxu0 0
      %3081 = vmatmul.mubr.bf16.gmra.mxu0 %v2974
      %v3082 = vpop.f32.mrf.mxu0
      %v3083 = vadd.f32 0.0, %v3082
      %v3084 = vpop.f32.mrf.mxu0
      %v3085 = vpop.f32.mrf.mxu0
      %v3086 = vadd.f32 0.0, %v3085
      %v3087 = vpop.f32.mrf.mxu0
      %3088 = vmatprep.mubr.bf16.mxu0 0
      %3089 = vmatmul.mubr.bf16.gmra.mxu0 %v2976
      %v3090 = vpop.f32.mrf.mxu0
      %v3091 = vadd.f32 0.0, %v3090
      %v3092 = vpop.f32.mrf.mxu0
      %v3093 = vpop.f32.mrf.mxu0
      %v3094 = vadd.f32 0.0, %v3093
      %v3095 = vpop.f32.mrf.mxu0
      %3096 = vmatprep.mubr.bf16.mxu0 0
      %3097 = vmatmul.mubr.bf16.gmra.mxu0 %v2978
      %v3098 = vpop.f32.mrf.mxu0
      %v3099 = vadd.f32 0.0, %v3098
      %v3100 = vpop.f32.mrf.mxu0
      %v3101 = vpop.f32.mrf.mxu0
      %v3102 = vadd.f32 0.0, %v3101
      %v3103 = vpop.f32.mrf.mxu0
      %3104 = vmatprep.mubr.bf16.mxu0 0
      %3105 = vmatmul.mubr.bf16.gmra.mxu0 %v2980
      %v3106 = vpop.f32.mrf.mxu0
      %v3107 = vadd.f32 0.0, %v3106
      %v3108 = vpop.f32.mrf.mxu0
      %v3109 = vpop.f32.mrf.mxu0
      %v3110 = vadd.f32 0.0, %v3109
      %v3111 = vpop.f32.mrf.mxu0
      %3112 = vmatprep.mubr.bf16.mxu0 0
      %3113 = vmatmul.mubr.bf16.gmra.mxu0 %v2982
      %v3114 = vpop.f32.mrf.mxu0
      %v3115 = vadd.f32 0.0, %v3114
      %v3116 = vpop.f32.mrf.mxu0
      %v3117 = vpop.f32.mrf.mxu0
      %v3118 = vadd.f32 0.0, %v3117
      %v3119 = vpop.f32.mrf.mxu0
      %3120 = vmatprep.mubr.bf16.mxu0 0
      %3121 = vmatmul.mubr.bf16.gmra.mxu0 %v2984
      %v3122 = vpop.f32.mrf.mxu0
      %v3123 = vadd.f32 0.0, %v3122
      %v3124 = vpop.f32.mrf.mxu0
      %v3125 = vpop.f32.mrf.mxu0
      %v3126 = vadd.f32 0.0, %v3125
      %v3127 = vpop.f32.mrf.mxu0
      %3128 = vmatprep.mubr.bf16.mxu0 0
      %3129 = vmatmul.mubr.bf16.gmra.mxu0 %v2986
      %v3130 = vpop.f32.mrf.mxu0
      %v3131 = vadd.f32 0.0, %v3130
      %v3132 = vpop.f32.mrf.mxu0
      %v3133 = vpop.f32.mrf.mxu0
      %v3134 = vadd.f32 0.0, %v3133
      %v3135 = vpop.f32.mrf.mxu0
      %3136 = vmatprep.mubr.bf16.mxu0 0
      %3137 = vmatmul.mubr.bf16.gmra.mxu0 %v2988
      %v3138 = vpop.f32.mrf.mxu0
      %v3139 = vadd.f32 0.0, %v3138
      %v3140 = vpop.f32.mrf.mxu0
      %v3141 = vpop.f32.mrf.mxu0
      %v3142 = vadd.f32 0.0, %v3141
      %v3143 = vpop.f32.mrf.mxu0
      %3144 = vmatprep.mubr.bf16.mxu0 0
      %3145 = vmatmul.mubr.bf16.gmra.mxu0 %v2990
      %v3146 = vpop.f32.mrf.mxu0
      %v3147 = vadd.f32 0.0, %v3146
      %v3148 = vpop.f32.mrf.mxu0
      %v3149 = vpop.f32.mrf.mxu0
      %v3150 = vadd.f32 0.0, %v3149
      %v3151 = vpop.f32.mrf.mxu0
      %3152 = vdwg.mxu0
      %3185 = vrot.lane.b32.xlu0 %v3027, 32
      %v3186 = vpop.permute.xlu0 %3185
      %3187 = vrot.lane.b32.xlu0 %v3030, 32
      %v3188 = vpop.permute.xlu0 %3187
      %3189 = vrot.lane.b32.xlu0 %v3035, 32
      %v3190 = vpop.permute.xlu0 %3189
      %3191 = vrot.lane.b32.xlu0 %v3038, 32
      %v3192 = vpop.permute.xlu0 %3191
      %3193 = vrot.lane.b32.xlu0 %v3043, 32
      %v3194 = vpop.permute.xlu0 %3193
      %3195 = vrot.lane.b32.xlu0 %v3046, 32
      %v3196 = vpop.permute.xlu0 %3195
      %3197 = vrot.lane.b32.xlu0 %v3051, 32
      %v3198 = vpop.permute.xlu0 %3197
      %3199 = vrot.lane.b32.xlu0 %v3054, 32
      %v3200 = vpop.permute.xlu0 %3199
      %3201 = vrot.lane.b32.xlu0 %v3059, 32
      %v3202 = vpop.permute.xlu0 %3201
      %3203 = vrot.lane.b32.xlu0 %v3062, 32
      %v3204 = vpop.permute.xlu0 %3203
      %3205 = vrot.lane.b32.xlu0 %v3067, 32
      %v3206 = vpop.permute.xlu0 %3205
      %3207 = vrot.lane.b32.xlu0 %v3070, 32
      %v3208 = vpop.permute.xlu0 %3207
      %3209 = vrot.lane.b32.xlu0 %v3075, 32
      %v3210 = vpop.permute.xlu0 %3209
      %3211 = vrot.lane.b32.xlu0 %v3078, 32
      %v3212 = vpop.permute.xlu0 %3211
      %3213 = vrot.lane.b32.xlu0 %v3083, 32
      %v3214 = vpop.permute.xlu0 %3213
      %3215 = vrot.lane.b32.xlu0 %v3086, 32
      %v3216 = vpop.permute.xlu0 %3215
      %3217 = vrot.lane.b32.xlu0 %v3091, 32
      %v3218 = vpop.permute.xlu0 %3217
      %3219 = vrot.lane.b32.xlu0 %v3094, 32
      %v3220 = vpop.permute.xlu0 %3219
      %3221 = vrot.lane.b32.xlu0 %v3099, 32
      %v3222 = vpop.permute.xlu0 %3221
      %3223 = vrot.lane.b32.xlu0 %v3102, 32
      %v3224 = vpop.permute.xlu0 %3223
      %3225 = vrot.lane.b32.xlu0 %v3107, 32
      %v3226 = vpop.permute.xlu0 %3225
      %3227 = vrot.lane.b32.xlu0 %v3110, 32
      %v3228 = vpop.permute.xlu0 %3227
      %3229 = vrot.lane.b32.xlu0 %v3115, 32
      %v3230 = vpop.permute.xlu0 %3229
      %3231 = vrot.lane.b32.xlu0 %v3118, 32
      %v3232 = vpop.permute.xlu0 %3231
      %3233 = vrot.lane.b32.xlu0 %v3123, 32
      %v3234 = vpop.permute.xlu0 %3233
      %3235 = vrot.lane.b32.xlu0 %v3126, 32
      %v3236 = vpop.permute.xlu0 %3235
      %3237 = vrot.lane.b32.xlu0 %v3131, 32
      %v3238 = vpop.permute.xlu0 %3237
      %3239 = vrot.lane.b32.xlu0 %v3134, 32
      %v3240 = vpop.permute.xlu0 %3239
      %3241 = vrot.lane.b32.xlu0 %v3139, 32
      %v3242 = vpop.permute.xlu0 %3241
      %3243 = vrot.lane.b32.xlu0 %v3142, 32
      %v3244 = vpop.permute.xlu0 %3243
      %3245 = vrot.lane.b32.xlu0 %v3147, 32
      %v3246 = vpop.permute.xlu0 %3245
      %3247 = vrot.lane.b32.xlu0 %v3150, 32
      %v3248 = vpop.permute.xlu0 %3247
      %v3281 = vadd.f32 %v576, %v3186
      %v3282 = vadd.f32 %v579, %v3188
      %v3283 = vadd.f32 %v584, %v3190
      %v3284 = vadd.f32 %v587, %v3192
      %v3285 = vadd.f32 %v592, %v3194
      %v3286 = vadd.f32 %v595, %v3196
      %v3287 = vadd.f32 %v600, %v3198
      %v3288 = vadd.f32 %v603, %v3200
      %v3289 = vadd.f32 %v608, %v3202
      %v3290 = vadd.f32 %v611, %v3204
      %v3291 = vadd.f32 %v616, %v3206
      %v3292 = vadd.f32 %v619, %v3208
      %v3293 = vadd.f32 %v624, %v3210
      %v3294 = vadd.f32 %v627, %v3212
      %v3295 = vadd.f32 %v632, %v3214
      %v3296 = vadd.f32 %v635, %v3216
      %v3297 = vadd.f32 %v640, %v3218
      %v3298 = vadd.f32 %v643, %v3220
      %v3299 = vadd.f32 %v648, %v3222
      %v3300 = vadd.f32 %v651, %v3224
      %v3301 = vadd.f32 %v656, %v3226
      %v3302 = vadd.f32 %v659, %v3228
      %v3303 = vadd.f32 %v664, %v3230
      %v3304 = vadd.f32 %v667, %v3232
      %v3305 = vadd.f32 %v672, %v3234
      %v3306 = vadd.f32 %v675, %v3236
      %v3307 = vadd.f32 %v680, %v3238
      %v3308 = vadd.f32 %v683, %v3240
      %v3309 = vadd.f32 %v688, %v3242
      %v3310 = vadd.f32 %v691, %v3244
      %v3311 = vadd.f32 %v696, %v3246
      %v3312 = vadd.f32 %v699, %v3248
      %v3313 = vsel %vm2959, %v576, %v3281
      %v3314 = vsel %vm2959, %v579, %v3282
      %v3315 = vsel %vm2959, %v584, %v3283
      %v3316 = vsel %vm2959, %v587, %v3284
      %v3317 = vsel %vm2959, %v592, %v3285
      %v3318 = vsel %vm2959, %v595, %v3286
      %v3319 = vsel %vm2959, %v600, %v3287
      %v3320 = vsel %vm2959, %v603, %v3288
      %v3321 = vsel %vm2959, %v608, %v3289
      %v3322 = vsel %vm2959, %v611, %v3290
      %v3323 = vsel %vm2959, %v616, %v3291
      %v3324 = vsel %vm2959, %v619, %v3292
      %v3325 = vsel %vm2959, %v624, %v3293
      %v3326 = vsel %vm2959, %v627, %v3294
      %v3327 = vsel %vm2959, %v632, %v3295
      %v3328 = vsel %vm2959, %v635, %v3296
      %v3329 = vsel %vm2959, %v640, %v3297
      %v3330 = vsel %vm2959, %v643, %v3298
      %v3331 = vsel %vm2959, %v648, %v3299
      %v3332 = vsel %vm2959, %v651, %v3300
      %v3333 = vsel %vm2959, %v656, %v3301
      %v3334 = vsel %vm2959, %v659, %v3302
      %v3335 = vsel %vm2959, %v664, %v3303
      %v3336 = vsel %vm2959, %v667, %v3304
      %v3337 = vsel %vm2959, %v672, %v3305
      %v3338 = vsel %vm2959, %v675, %v3306
      %v3339 = vsel %vm2959, %v680, %v3307
      %v3340 = vsel %vm2959, %v683, %v3308
      %v3341 = vsel %vm2959, %v688, %v3309
      %v3342 = vsel %vm2959, %v691, %v3310
      %v3343 = vsel %vm2959, %v696, %v3311
      %v3344 = vsel %vm2959, %v699, %v3312
      %vm3345 = vcmask 523264
      %v3346 = vsel %vm3345, %v3313, %v576
      %v3347 = vsel %vm3345, %v3314, %v579
      %v3348 = vsel %vm3345, %v3315, %v584
      %v3349 = vsel %vm3345, %v3316, %v587
      %v3350 = vsel %vm3345, %v3317, %v592
      %v3351 = vsel %vm3345, %v3318, %v595
      %v3352 = vsel %vm3345, %v3319, %v600
      %v3353 = vsel %vm3345, %v3320, %v603
      %v3354 = vsel %vm3345, %v3321, %v608
      %v3355 = vsel %vm3345, %v3322, %v611
      %v3356 = vsel %vm3345, %v3323, %v616
      %v3357 = vsel %vm3345, %v3324, %v619
      %v3358 = vsel %vm3345, %v3325, %v624
      %v3359 = vsel %vm3345, %v3326, %v627
      %v3360 = vsel %vm3345, %v3327, %v632
      %v3361 = vsel %vm3345, %v3328, %v635
      %v3362 = vsel %vm3345, %v3329, %v640
      %v3363 = vsel %vm3345, %v3330, %v643
      %v3364 = vsel %vm3345, %v3331, %v648
      %v3365 = vsel %vm3345, %v3332, %v651
      %v3366 = vsel %vm3345, %v3333, %v656
      %v3367 = vsel %vm3345, %v3334, %v659
      %v3368 = vsel %vm3345, %v3335, %v664
      %v3369 = vsel %vm3345, %v3336, %v667
      %v3370 = vsel %vm3345, %v3337, %v672
      %v3371 = vsel %vm3345, %v3338, %v675
      %v3372 = vsel %vm3345, %v3339, %v680
      %v3373 = vsel %vm3345, %v3340, %v683
      %v3374 = vsel %vm3345, %v3341, %v688
      %v3375 = vsel %vm3345, %v3342, %v691
      %v3376 = vsel %vm3345, %v3343, %v696
      %v3377 = vsel %vm3345, %v3344, %v699
      %vm3378 = vcmask 785408
      %v3379 = vsel %vm3378, %v3346, %v576
      %v3380 = vsel %vm3378, %v3347, %v579
      %v3381 = vsel %vm3378, %v3348, %v584
      %v3382 = vsel %vm3378, %v3349, %v587
      %v3383 = vsel %vm3378, %v3350, %v592
      %v3384 = vsel %vm3378, %v3351, %v595
      %v3385 = vsel %vm3378, %v3352, %v600
      %v3386 = vsel %vm3378, %v3353, %v603
      %v3387 = vsel %vm3378, %v3354, %v608
      %v3388 = vsel %vm3378, %v3355, %v611
      %v3389 = vsel %vm3378, %v3356, %v616
      %v3390 = vsel %vm3378, %v3357, %v619
      %v3391 = vsel %vm3378, %v3358, %v624
      %v3392 = vsel %vm3378, %v3359, %v627
      %v3393 = vsel %vm3378, %v3360, %v632
      %v3394 = vsel %vm3378, %v3361, %v635
      %v3395 = vsel %vm3378, %v3362, %v640
      %v3396 = vsel %vm3378, %v3363, %v643
      %v3397 = vsel %vm3378, %v3364, %v648
      %v3398 = vsel %vm3378, %v3365, %v651
      %v3399 = vsel %vm3378, %v3366, %v656
      %v3400 = vsel %vm3378, %v3367, %v659
      %v3401 = vsel %vm3378, %v3368, %v664
      %v3402 = vsel %vm3378, %v3369, %v667
      %v3403 = vsel %vm3378, %v3370, %v672
      %v3404 = vsel %vm3378, %v3371, %v675
      %v3405 = vsel %vm3378, %v3372, %v680
      %v3406 = vsel %vm3378, %v3373, %v683
      %v3407 = vsel %vm3378, %v3374, %v688
      %v3408 = vsel %vm3378, %v3375, %v691
      %v3409 = vsel %vm3378, %v3376, %v696
      %v3410 = vsel %vm3378, %v3377, %v699
      %v3411 = vld [vmem:[%s4] sm:$0x1]
      %v3413 = vlaneseq
      %v3414 = vshrl.u32 %v3413, 7
      %v3415 = vsub.s32 0, %v3414
      %v3416 = vrot.slane %v3411, %v3415
      %v3418 = vadd.f32 %v3379, %v3416
      %v3419 = vadd.f32 %v3380, %v3416
      %v3420 = vadd.f32 %v3381, %v3416
      %v3421 = vadd.f32 %v3382, %v3416
      %v3422 = vadd.f32 %v3383, %v3416
      %v3423 = vadd.f32 %v3384, %v3416
      %v3424 = vadd.f32 %v3385, %v3416
      %v3425 = vadd.f32 %v3386, %v3416
      %v3426 = vadd.f32 %v3387, %v3416
      %v3427 = vadd.f32 %v3388, %v3416
      %v3428 = vadd.f32 %v3389, %v3416
      %v3429 = vadd.f32 %v3390, %v3416
      %v3430 = vadd.f32 %v3391, %v3416
      %v3431 = vadd.f32 %v3392, %v3416
      %v3432 = vadd.f32 %v3393, %v3416
      %v3433 = vadd.f32 %v3394, %v3416
      %v3434 = vadd.f32 %v3395, %v3416
      %v3435 = vadd.f32 %v3396, %v3416
      %v3436 = vadd.f32 %v3397, %v3416
      %v3437 = vadd.f32 %v3398, %v3416
      %v3438 = vadd.f32 %v3399, %v3416
      %v3439 = vadd.f32 %v3400, %v3416
      %v3440 = vadd.f32 %v3401, %v3416
      %v3441 = vadd.f32 %v3402, %v3416
      %v3442 = vadd.f32 %v3403, %v3416
      %v3443 = vadd.f32 %v3404, %v3416
      %v3444 = vadd.f32 %v3405, %v3416
      %v3445 = vadd.f32 %v3406, %v3416
      %v3446 = vadd.f32 %v3407, %v3416
      %v3447 = vadd.f32 %v3408, %v3416
      %v3448 = vadd.f32 %v3409, %v3416
      %v3449 = vadd.f32 %v3410, %v3416
      %v3450 = vmax.f32 %v3418, 0.0
      %v3451 = vmax.f32 %v3419, 0.0
      %v3452 = vmax.f32 %v3420, 0.0
      %v3453 = vmax.f32 %v3421, 0.0
      %v3454 = vmax.f32 %v3422, 0.0
      %v3455 = vmax.f32 %v3423, 0.0
      %v3456 = vmax.f32 %v3424, 0.0
      %v3457 = vmax.f32 %v3425, 0.0
      %v3458 = vmax.f32 %v3426, 0.0
      %v3459 = vmax.f32 %v3427, 0.0
      %v3460 = vmax.f32 %v3428, 0.0
      %v3461 = vmax.f32 %v3429, 0.0
      %v3462 = vmax.f32 %v3430, 0.0
      %v3463 = vmax.f32 %v3431, 0.0
      %v3464 = vmax.f32 %v3432, 0.0
      %v3465 = vmax.f32 %v3433, 0.0
      %v3466 = vmax.f32 %v3434, 0.0
      %v3467 = vmax.f32 %v3435, 0.0
      %v3468 = vmax.f32 %v3436, 0.0
      %v3469 = vmax.f32 %v3437, 0.0
      %v3470 = vmax.f32 %v3438, 0.0
      %v3471 = vmax.f32 %v3439, 0.0
      %v3472 = vmax.f32 %v3440, 0.0
      %v3473 = vmax.f32 %v3441, 0.0
      %v3474 = vmax.f32 %v3442, 0.0
      %v3475 = vmax.f32 %v3443, 0.0
      %v3476 = vmax.f32 %v3444, 0.0
      %v3477 = vmax.f32 %v3445, 0.0
      %v3478 = vmax.f32 %v3446, 0.0
      %v3479 = vmax.f32 %v3447, 0.0
      %v3480 = vmax.f32 %v3448, 0.0
      %v3481 = vmax.f32 %v3449, 0.0
      %v3482 = vld [vmem:[%s347] sm:$0x1]
      %v3484 = vlaneseq
      %v3485 = vshrl.u32 %v3484, 7
      %v3486 = vsub.s32 0, %v3485
      %v3487 = vrot.slane %v3482, %v3486
      %3521 = vrot.lane.b32.xlu0 %v3450, 32
      %v3522 = vpop.permute.xlu0 %3521
      %3523 = vrot.lane.b32.xlu0 %v3451, 32
      %v3524 = vpop.permute.xlu0 %3523
      %3525 = vrot.lane.b32.xlu0 %v3452, 32
      %v3526 = vpop.permute.xlu0 %3525
      %3527 = vrot.lane.b32.xlu0 %v3453, 32
      %v3528 = vpop.permute.xlu0 %3527
      %3529 = vrot.lane.b32.xlu0 %v3454, 32
      %v3530 = vpop.permute.xlu0 %3529
      %3531 = vrot.lane.b32.xlu0 %v3455, 32
      %v3532 = vpop.permute.xlu0 %3531
      %3533 = vrot.lane.b32.xlu0 %v3456, 32
      %v3534 = vpop.permute.xlu0 %3533
      %3535 = vrot.lane.b32.xlu0 %v3457, 32
      %v3536 = vpop.permute.xlu0 %3535
      %3537 = vrot.lane.b32.xlu0 %v3458, 32
      %v3538 = vpop.permute.xlu0 %3537
      %3539 = vrot.lane.b32.xlu0 %v3459, 32
      %v3540 = vpop.permute.xlu0 %3539
      %3541 = vrot.lane.b32.xlu0 %v3460, 32
      %v3542 = vpop.permute.xlu0 %3541
      %3543 = vrot.lane.b32.xlu0 %v3461, 32
      %v3544 = vpop.permute.xlu0 %3543
      %3545 = vrot.lane.b32.xlu0 %v3462, 32
      %v3546 = vpop.permute.xlu0 %3545
      %3547 = vrot.lane.b32.xlu0 %v3463, 32
      %v3548 = vpop.permute.xlu0 %3547
      %3549 = vrot.lane.b32.xlu0 %v3464, 32
      %v3550 = vpop.permute.xlu0 %3549
      %3551 = vrot.lane.b32.xlu0 %v3465, 32
      %v3552 = vpop.permute.xlu0 %3551
      %3553 = vrot.lane.b32.xlu0 %v3466, 32
      %v3554 = vpop.permute.xlu0 %3553
      %3555 = vrot.lane.b32.xlu0 %v3467, 32
      %v3556 = vpop.permute.xlu0 %3555
      %3557 = vrot.lane.b32.xlu0 %v3468, 32
      %v3558 = vpop.permute.xlu0 %3557
      %3559 = vrot.lane.b32.xlu0 %v3469, 32
      %v3560 = vpop.permute.xlu0 %3559
      %3561 = vrot.lane.b32.xlu0 %v3470, 32
      %v3562 = vpop.permute.xlu0 %3561
      %3563 = vrot.lane.b32.xlu0 %v3471, 32
      %v3564 = vpop.permute.xlu0 %3563
      %3565 = vrot.lane.b32.xlu0 %v3472, 32
      %v3566 = vpop.permute.xlu0 %3565
      %3567 = vrot.lane.b32.xlu0 %v3473, 32
      %v3568 = vpop.permute.xlu0 %3567
      %3569 = vrot.lane.b32.xlu0 %v3474, 32
      %v3570 = vpop.permute.xlu0 %3569
      %3571 = vrot.lane.b32.xlu0 %v3475, 32
      %v3572 = vpop.permute.xlu0 %3571
      %3573 = vrot.lane.b32.xlu0 %v3476, 32
      %v3574 = vpop.permute.xlu0 %3573
      %3575 = vrot.lane.b32.xlu0 %v3477, 32
      %v3576 = vpop.permute.xlu0 %3575
      %3577 = vrot.lane.b32.xlu0 %v3478, 32
      %v3578 = vpop.permute.xlu0 %3577
      %3579 = vrot.lane.b32.xlu0 %v3479, 32
      %v3580 = vpop.permute.xlu0 %3579
      %3581 = vrot.lane.b32.xlu0 %v3480, 32
      %v3582 = vpop.permute.xlu0 %3581
      %3583 = vrot.lane.b32.xlu0 %v3481, 32
      %v3584 = vpop.permute.xlu0 %3583
      %v3617 = vsel %vm2959, %v3487, %v3522
      %v3618 = vsel %vm2959, %v3487, %v3524
      %v3619 = vsel %vm2959, %v3487, %v3526
      %v3620 = vsel %vm2959, %v3487, %v3528
      %v3621 = vsel %vm2959, %v3487, %v3530
      %v3622 = vsel %vm2959, %v3487, %v3532
      %v3623 = vsel %vm2959, %v3487, %v3534
      %v3624 = vsel %vm2959, %v3487, %v3536
      %v3625 = vsel %vm2959, %v3487, %v3538
      %v3626 = vsel %vm2959, %v3487, %v3540
      %v3627 = vsel %vm2959, %v3487, %v3542
      %v3628 = vsel %vm2959, %v3487, %v3544
      %v3629 = vsel %vm2959, %v3487, %v3546
      %v3630 = vsel %vm2959, %v3487, %v3548
      %v3631 = vsel %vm2959, %v3487, %v3550
      %v3632 = vsel %vm2959, %v3487, %v3552
      %v3633 = vsel %vm2959, %v3487, %v3554
      %v3634 = vsel %vm2959, %v3487, %v3556
      %v3635 = vsel %vm2959, %v3487, %v3558
      %v3636 = vsel %vm2959, %v3487, %v3560
      %v3637 = vsel %vm2959, %v3487, %v3562
      %v3638 = vsel %vm2959, %v3487, %v3564
      %v3639 = vsel %vm2959, %v3487, %v3566
      %v3640 = vsel %vm2959, %v3487, %v3568
      %v3641 = vsel %vm2959, %v3487, %v3570
      %v3642 = vsel %vm2959, %v3487, %v3572
      %v3643 = vsel %vm2959, %v3487, %v3574
      %v3644 = vsel %vm2959, %v3487, %v3576
      %v3645 = vsel %vm2959, %v3487, %v3578
      %v3646 = vsel %vm2959, %v3487, %v3580
      %v3647 = vsel %vm2959, %v3487, %v3582
      %v3648 = vsel %vm2959, %v3487, %v3584
      %v3649 = vpack.c.bf16 %v3618, %v3617
      %v3650 = vpack.c.bf16 %v3524, %v3522
      %v3651 = vpack.c.bf16 %v3620, %v3619
      %v3652 = vpack.c.bf16 %v3528, %v3526
      %v3653 = vpack.c.bf16 %v3622, %v3621
      %v3654 = vpack.c.bf16 %v3532, %v3530
      %v3655 = vpack.c.bf16 %v3624, %v3623
      %v3656 = vpack.c.bf16 %v3536, %v3534
      %v3657 = vpack.c.bf16 %v3626, %v3625
      %v3658 = vpack.c.bf16 %v3540, %v3538
      %v3659 = vpack.c.bf16 %v3628, %v3627
      %v3660 = vpack.c.bf16 %v3544, %v3542
      %v3661 = vpack.c.bf16 %v3630, %v3629
      %v3662 = vpack.c.bf16 %v3548, %v3546
      %v3663 = vpack.c.bf16 %v3632, %v3631
      %v3664 = vpack.c.bf16 %v3552, %v3550
      %v3665 = vpack.c.bf16 %v3634, %v3633
      %v3666 = vpack.c.bf16 %v3556, %v3554
      %v3667 = vpack.c.bf16 %v3636, %v3635
      %v3668 = vpack.c.bf16 %v3560, %v3558
      %v3669 = vpack.c.bf16 %v3638, %v3637
      %v3670 = vpack.c.bf16 %v3564, %v3562
      %v3671 = vpack.c.bf16 %v3640, %v3639
      %v3672 = vpack.c.bf16 %v3568, %v3566
      %v3673 = vpack.c.bf16 %v3642, %v3641
      %v3674 = vpack.c.bf16 %v3572, %v3570
      %v3675 = vpack.c.bf16 %v3644, %v3643
      %v3676 = vpack.c.bf16 %v3576, %v3574
      %v3677 = vpack.c.bf16 %v3646, %v3645
      %v3678 = vpack.c.bf16 %v3580, %v3578
      %v3679 = vpack.c.bf16 %v3648, %v3647
      %v3680 = vpack.c.bf16 %v3584, %v3582
      %v3713 = vunpack.c.l.b16 %v3649
      %v3714 = vunpack.c.l.b16 %v3650
      %v3715 = vunpack.c.h.b16 %v3649
      %v3716 = vunpack.c.h.b16 %v3650
      %v3717 = vunpack.c.l.b16 %v3651
      %v3718 = vunpack.c.l.b16 %v3652
      %v3719 = vunpack.c.h.b16 %v3651
      %v3720 = vunpack.c.h.b16 %v3652
      %v3721 = vunpack.c.l.b16 %v3653
      %v3722 = vunpack.c.l.b16 %v3654
      %v3723 = vunpack.c.h.b16 %v3653
      %v3724 = vunpack.c.h.b16 %v3654
      %v3725 = vunpack.c.l.b16 %v3655
      %v3726 = vunpack.c.l.b16 %v3656
      %v3727 = vunpack.c.h.b16 %v3655
      %v3728 = vunpack.c.h.b16 %v3656
      %v3729 = vunpack.c.l.b16 %v3657
      %v3730 = vunpack.c.l.b16 %v3658
      %v3731 = vunpack.c.h.b16 %v3657
      %v3732 = vunpack.c.h.b16 %v3658
      %v3733 = vunpack.c.l.b16 %v3659
      %v3734 = vunpack.c.l.b16 %v3660
      %v3735 = vunpack.c.h.b16 %v3659
      %v3736 = vunpack.c.h.b16 %v3660
      %v3737 = vunpack.c.l.b16 %v3661
      %v3738 = vunpack.c.l.b16 %v3662
      %v3739 = vunpack.c.h.b16 %v3661
      %v3740 = vunpack.c.h.b16 %v3662
      %v3741 = vunpack.c.l.b16 %v3663
      %v3742 = vunpack.c.l.b16 %v3664
      %v3743 = vunpack.c.h.b16 %v3663
      %v3744 = vunpack.c.h.b16 %v3664
      %v3745 = vunpack.c.l.b16 %v3665
      %v3746 = vunpack.c.l.b16 %v3666
      %v3747 = vunpack.c.h.b16 %v3665
      %v3748 = vunpack.c.h.b16 %v3666
      %v3749 = vunpack.c.l.b16 %v3667
      %v3750 = vunpack.c.l.b16 %v3668
      %v3751 = vunpack.c.h.b16 %v3667
      %v3752 = vunpack.c.h.b16 %v3668
      %v3753 = vunpack.c.l.b16 %v3669
      %v3754 = vunpack.c.l.b16 %v3670
      %v3755 = vunpack.c.h.b16 %v3669
      %v3756 = vunpack.c.h.b16 %v3670
      %v3757 = vunpack.c.l.b16 %v3671
      %v3758 = vunpack.c.l.b16 %v3672
      %v3759 = vunpack.c.h.b16 %v3671
      %v3760 = vunpack.c.h.b16 %v3672
      %v3761 = vunpack.c.l.b16 %v3673
      %v3762 = vunpack.c.l.b16 %v3674
      %v3763 = vunpack.c.h.b16 %v3673
      %v3764 = vunpack.c.h.b16 %v3674
      %v3765 = vunpack.c.l.b16 %v3675
      %v3766 = vunpack.c.l.b16 %v3676
      %v3767 = vunpack.c.h.b16 %v3675
      %v3768 = vunpack.c.h.b16 %v3676
      %v3769 = vunpack.c.l.b16 %v3677
      %v3770 = vunpack.c.l.b16 %v3678
      %v3771 = vunpack.c.h.b16 %v3677
      %v3772 = vunpack.c.h.b16 %v3678
      %v3773 = vunpack.c.l.b16 %v3679
      %v3774 = vunpack.c.l.b16 %v3680
      %v3775 = vunpack.c.h.b16 %v3679
      %v3776 = vunpack.c.h.b16 %v3680
      %v3777 = vpack.c.b16 %v3714, %v3713
      %v3778 = vpack.c.b16 %v3716, %v3715
      %v3779 = vpack.c.b16 %v3718, %v3717
      %v3780 = vpack.c.b16 %v3720, %v3719
      %v3781 = vpack.c.b16 %v3722, %v3721
      %v3782 = vpack.c.b16 %v3724, %v3723
      %v3783 = vpack.c.b16 %v3726, %v3725
      %v3784 = vpack.c.b16 %v3728, %v3727
      %v3785 = vpack.c.b16 %v3730, %v3729
      %v3786 = vpack.c.b16 %v3732, %v3731
      %v3787 = vpack.c.b16 %v3734, %v3733
      %v3788 = vpack.c.b16 %v3736, %v3735
      %v3789 = vpack.c.b16 %v3738, %v3737
      %v3790 = vpack.c.b16 %v3740, %v3739
      %v3791 = vpack.c.b16 %v3742, %v3741
      %v3792 = vpack.c.b16 %v3744, %v3743
      %v3793 = vpack.c.b16 %v3746, %v3745
      %v3794 = vpack.c.b16 %v3748, %v3747
      %v3795 = vpack.c.b16 %v3750, %v3749
      %v3796 = vpack.c.b16 %v3752, %v3751
      %v3797 = vpack.c.b16 %v3754, %v3753
      %v3798 = vpack.c.b16 %v3756, %v3755
      %v3799 = vpack.c.b16 %v3758, %v3757
      %v3800 = vpack.c.b16 %v3760, %v3759
      %v3801 = vpack.c.b16 %v3762, %v3761
      %v3802 = vpack.c.b16 %v3764, %v3763
      %v3803 = vpack.c.b16 %v3766, %v3765
      %v3804 = vpack.c.b16 %v3768, %v3767
      %v3805 = vpack.c.b16 %v3770, %v3769
      %v3806 = vpack.c.b16 %v3772, %v3771
      %v3807 = vpack.c.b16 %v3774, %v3773
      %v3808 = vpack.c.b16 %v3776, %v3775
      %vm3841 = vcmask 1043456
      %vm3842 = vcmask 261124
      %vm3843 = vmor %vm3842, %vm3841
      %3844 = vst.msk [vmem:[%s357] sm:$0xff] %vm3843, %v3777
      %3845 = vst.msk [vmem:[%s357 + $0x8] sm:$0xff] %vm3843, %v3778
      %3846 = vst.msk [vmem:[%s357 + $0x10] sm:$0xff] %vm3843, %v3779
      %3847 = vst.msk [vmem:[%s357 + $0x18] sm:$0xff] %vm3843, %v3780
      %3848 = vst.msk [vmem:[%s357 + $0x20] sm:$0xff] %vm3843, %v3781
      %3849 = vst.msk [vmem:[%s357 + $0x28] sm:$0xff] %vm3843, %v3782
      %3850 = vst.msk [vmem:[%s357 + $0x30] sm:$0xff] %vm3843, %v3783
      %3851 = vst.msk [vmem:[%s357 + $0x38] sm:$0xff] %vm3843, %v3784
      %3852 = vst.msk [vmem:[%s357 + $0x40] sm:$0xff] %vm3843, %v3785
      %3853 = vst.msk [vmem:[%s357 + $0x48] sm:$0xff] %vm3843, %v3786
      %3854 = vst.msk [vmem:[%s357 + $0x50] sm:$0xff] %vm3843, %v3787
      %3855 = vst.msk [vmem:[%s357 + $0x58] sm:$0xff] %vm3843, %v3788
      %3856 = vst.msk [vmem:[%s357 + $0x60] sm:$0xff] %vm3843, %v3789
      %3857 = vst.msk [vmem:[%s357 + $0x68] sm:$0xff] %vm3843, %v3790
      %3858 = vst.msk [vmem:[%s357 + $0x70] sm:$0xff] %vm3843, %v3791
      %3859 = vst.msk [vmem:[%s357 + $0x78] sm:$0xff] %vm3843, %v3792
      %3860 = vst.msk [vmem:[%s357 + $0x80] sm:$0xff] %vm3843, %v3793
      %3861 = vst.msk [vmem:[%s357 + $0x88] sm:$0xff] %vm3843, %v3794
      %3862 = vst.msk [vmem:[%s357 + $0x90] sm:$0xff] %vm3843, %v3795
      %3863 = vst.msk [vmem:[%s357 + $0x98] sm:$0xff] %vm3843, %v3796
      %3864 = vst.msk [vmem:[%s357 + $0xa0] sm:$0xff] %vm3843, %v3797
      %3865 = vst.msk [vmem:[%s357 + $0xa8] sm:$0xff] %vm3843, %v3798
      %3866 = vst.msk [vmem:[%s357 + $0xb0] sm:$0xff] %vm3843, %v3799
      %3867 = vst.msk [vmem:[%s357 + $0xb8] sm:$0xff] %vm3843, %v3800
      %3868 = vst.msk [vmem:[%s357 + $0xc0] sm:$0xff] %vm3843, %v3801
      %3869 = vst.msk [vmem:[%s357 + $0xc8] sm:$0xff] %vm3843, %v3802
      %3870 = vst.msk [vmem:[%s357 + $0xd0] sm:$0xff] %vm3843, %v3803
      %3871 = vst.msk [vmem:[%s357 + $0xd8] sm:$0xff] %vm3843, %v3804
      %3872 = vst.msk [vmem:[%s357 + $0xe0] sm:$0xff] %vm3843, %v3805
      %3873 = vst.msk [vmem:[%s357 + $0xe8] sm:$0xff] %vm3843, %v3806
      %3874 = vst.msk [vmem:[%s357 + $0xf0] sm:$0xff] %vm3843, %v3807
      %3875 = vst.msk [vmem:[%s357 + $0xf8] sm:$0xff] %vm3843, %v3808
      %v3876 = vpack.c.bf16 %v3451, %v3450
      %v3877 = vpack.c.bf16 %v3453, %v3452
      %v3878 = vpack.c.bf16 %v3455, %v3454
      %v3879 = vpack.c.bf16 %v3457, %v3456
      %v3880 = vpack.c.bf16 %v3459, %v3458
      %v3881 = vpack.c.bf16 %v3461, %v3460
      %v3882 = vpack.c.bf16 %v3463, %v3462
      %v3883 = vpack.c.bf16 %v3465, %v3464
      %v3884 = vpack.c.bf16 %v3467, %v3466
      %v3885 = vpack.c.bf16 %v3469, %v3468
      %v3886 = vpack.c.bf16 %v3471, %v3470
      %v3887 = vpack.c.bf16 %v3473, %v3472
      %v3888 = vpack.c.bf16 %v3475, %v3474
      %v3889 = vpack.c.bf16 %v3477, %v3476
      %v3890 = vpack.c.bf16 %v3479, %v3478
      %v3891 = vpack.c.bf16 %v3481, %v3480
      %v3892 = vld [vmem:[%s5] sm:$0xf]
      %v3893 = vld [vmem:[%s5 + $0x4] sm:$0xf]
      %v3894 = vld [vmem:[%s5 + $0x8] sm:$0xf]
      %v3895 = vld [vmem:[%s5 + $0xc] sm:$0xf]
      %3912 = vrot.lane.b32.xlu0 %v3876, 96
      %v3913 = vpop.permute.xlu0 %3912
      %3914 = vrot.lane.b32.xlu0 %v3877, 96
      %v3915 = vpop.permute.xlu0 %3914
      %3916 = vrot.lane.b32.xlu0 %v3878, 96
      %v3917 = vpop.permute.xlu0 %3916
      %3918 = vrot.lane.b32.xlu0 %v3879, 96
      %v3919 = vpop.permute.xlu0 %3918
      %3920 = vrot.lane.b32.xlu0 %v3880, 96
      %v3921 = vpop.permute.xlu0 %3920
      %3922 = vrot.lane.b32.xlu0 %v3881, 96
      %v3923 = vpop.permute.xlu0 %3922
      %3924 = vrot.lane.b32.xlu0 %v3882, 96
      %v3925 = vpop.permute.xlu0 %3924
      %3926 = vrot.lane.b32.xlu0 %v3883, 96
      %v3927 = vpop.permute.xlu0 %3926
      %3928 = vrot.lane.b32.xlu0 %v3884, 96
      %v3929 = vpop.permute.xlu0 %3928
      %3930 = vrot.lane.b32.xlu0 %v3885, 96
      %v3931 = vpop.permute.xlu0 %3930
      %3932 = vrot.lane.b32.xlu0 %v3886, 96
      %v3933 = vpop.permute.xlu0 %3932
      %3934 = vrot.lane.b32.xlu0 %v3887, 96
      %v3935 = vpop.permute.xlu0 %3934
      %3936 = vrot.lane.b32.xlu0 %v3888, 96
      %v3937 = vpop.permute.xlu0 %3936
      %3938 = vrot.lane.b32.xlu0 %v3889, 96
      %v3939 = vpop.permute.xlu0 %3938
      %3940 = vrot.lane.b32.xlu0 %v3890, 96
      %v3941 = vpop.permute.xlu0 %3940
      %3942 = vrot.lane.b32.xlu0 %v3891, 96
      %v3943 = vpop.permute.xlu0 %3942
      %v3948 = vunpack.c.l.b16 %v3892
      %v3949 = vunpack.c.l.b16 %v3893
      %v3950 = vunpack.c.l.b16 %v3894
      %v3951 = vunpack.c.l.b16 %v3895
      %v3952 = vpack.c.b16 %v3949, %v3948
      %v3953 = vpack.c.b16 %v3951, %v3950
      %v3957 = vsel %vm2959, %v3913, 0
      %v3960 = vsel %vm2959, %v3915, 0
      %v3963 = vsel %vm2959, %v3917, 0
      %v3966 = vsel %vm2959, %v3919, 0
      %v3969 = vsel %vm2959, %v3921, 0
      %v3972 = vsel %vm2959, %v3923, 0
      %v3975 = vsel %vm2959, %v3925, 0
      %v3978 = vsel %vm2959, %v3927, 0
      %v3981 = vsel %vm2959, %v3929, 0
      %v3984 = vsel %vm2959, %v3931, 0
      %v3987 = vsel %vm2959, %v3933, 0
      %v3990 = vsel %vm2959, %v3935, 0
      %v3993 = vsel %vm2959, %v3937, 0
      %v3996 = vsel %vm2959, %v3939, 0
      %v3999 = vsel %vm2959, %v3941, 0
      %v4002 = vsel %vm2959, %v3943, 0
      %4004 = vmatprep.subr.bf16.mxu0 0
      %4005 = vmatpush1.bf16.msra.mxu0 0
      %4006 = vmatprep.subr.bf16.mxu0 0
      %4007 = vmatpush1.bf16.msra.mxu0 0
      %4008 = vmatprep.subr.bf16.mxu0 0
      %4009 = vmatpush1.bf16.msra.mxu0 0
      %4010 = vmatprep.subr.bf16.mxu0 0
      %4011 = vmatpush1.bf16.msra.mxu0 0
      %4012 = vmatprep.subr.bf16.mxu0 0
      %4013 = vmatpush1.bf16.msra.mxu0 0
      %4014 = vmatprep.subr.bf16.mxu0 0
      %4015 = vmatpush1.bf16.msra.mxu0 0
      %4016 = vmatprep.subr.bf16.mxu0 0
      %4017 = vmatpush1.bf16.msra.mxu0 %v3953
      %4018 = vmatprep.subr.bf16.mxu0 0
      %4019 = vmatpush1.bf16.msra.mxu0 %v3952
      %4020 = vmatprep.subr.bf16.mxu0 0
      %4021 = vmatpush2.bf16.msra.mxu0 0
      %4022 = vmatprep.subr.bf16.mxu0 0
      %4023 = vmatpush2.bf16.msra.mxu0 0
      %4024 = vmatprep.subr.bf16.mxu0 0
      %4025 = vmatpush2.bf16.msra.mxu0 0
      %4026 = vmatprep.subr.bf16.mxu0 0
      %4027 = vmatpush2.bf16.msra.mxu0 0
      %4028 = vmatprep.subr.bf16.mxu0 0
      %4029 = vmatpush2.bf16.msra.mxu0 0
      %4030 = vmatprep.subr.bf16.mxu0 0
      %4031 = vmatpush2.bf16.msra.mxu0 0
      %4032 = vmatprep.subr.bf16.mxu0 0
      %4033 = vmatpush2.bf16.msra.mxu0 0
      %4034 = vmatprep.subr.bf16.mxu0 0
      %4035 = vmatpush2.bf16.msra.mxu0 0
      %4036 = vmatprep.mubr.bf16.mxu0 0
      %4037 = vmatmul.mubr.bf16.gmra.mxu0 %v3957
      %v4038 = vpop.f32.mrf.mxu0
      %v4039 = vadd.f32 0.0, %v4038
      %v4040 = vpop.f32.mrf.mxu0
      %v4041 = vpop.f32.mrf.mxu0
      %v4042 = vadd.f32 0.0, %v4041
      %v4043 = vpop.f32.mrf.mxu0
      %4044 = vmatprep.mubr.bf16.mxu0 0
      %4045 = vmatmul.mubr.bf16.gmra.mxu0 %v3960
      %v4046 = vpop.f32.mrf.mxu0
      %v4047 = vadd.f32 0.0, %v4046
      %v4048 = vpop.f32.mrf.mxu0
      %v4049 = vpop.f32.mrf.mxu0
      %v4050 = vadd.f32 0.0, %v4049
      %v4051 = vpop.f32.mrf.mxu0
      %4052 = vmatprep.mubr.bf16.mxu0 0
      %4053 = vmatmul.mubr.bf16.gmra.mxu0 %v3963
      %v4054 = vpop.f32.mrf.mxu0
      %v4055 = vadd.f32 0.0, %v4054
      %v4056 = vpop.f32.mrf.mxu0
      %v4057 = vpop.f32.mrf.mxu0
      %v4058 = vadd.f32 0.0, %v4057
      %v4059 = vpop.f32.mrf.mxu0
      %4060 = vmatprep.mubr.bf16.mxu0 0
      %4061 = vmatmul.mubr.bf16.gmra.mxu0 %v3966
      %v4062 = vpop.f32.mrf.mxu0
      %v4063 = vadd.f32 0.0, %v4062
      %v4064 = vpop.f32.mrf.mxu0
      %v4065 = vpop.f32.mrf.mxu0
      %v4066 = vadd.f32 0.0, %v4065
      %v4067 = vpop.f32.mrf.mxu0
      %4068 = vmatprep.mubr.bf16.mxu0 0
      %4069 = vmatmul.mubr.bf16.gmra.mxu0 %v3969
      %v4070 = vpop.f32.mrf.mxu0
      %v4071 = vadd.f32 0.0, %v4070
      %v4072 = vpop.f32.mrf.mxu0
      %v4073 = vpop.f32.mrf.mxu0
      %v4074 = vadd.f32 0.0, %v4073
      %v4075 = vpop.f32.mrf.mxu0
      %4076 = vmatprep.mubr.bf16.mxu0 0
      %4077 = vmatmul.mubr.bf16.gmra.mxu0 %v3972
      %v4078 = vpop.f32.mrf.mxu0
      %v4079 = vadd.f32 0.0, %v4078
      %v4080 = vpop.f32.mrf.mxu0
      %v4081 = vpop.f32.mrf.mxu0
      %v4082 = vadd.f32 0.0, %v4081
      %v4083 = vpop.f32.mrf.mxu0
      %4084 = vmatprep.mubr.bf16.mxu0 0
      %4085 = vmatmul.mubr.bf16.gmra.mxu0 %v3975
      %v4086 = vpop.f32.mrf.mxu0
      %v4087 = vadd.f32 0.0, %v4086
      %v4088 = vpop.f32.mrf.mxu0
      %v4089 = vpop.f32.mrf.mxu0
      %v4090 = vadd.f32 0.0, %v4089
      %v4091 = vpop.f32.mrf.mxu0
      %4092 = vmatprep.mubr.bf16.mxu0 0
      %4093 = vmatmul.mubr.bf16.gmra.mxu0 %v3978
      %v4094 = vpop.f32.mrf.mxu0
      %v4095 = vadd.f32 0.0, %v4094
      %v4096 = vpop.f32.mrf.mxu0
      %v4097 = vpop.f32.mrf.mxu0
      %v4098 = vadd.f32 0.0, %v4097
      %v4099 = vpop.f32.mrf.mxu0
      %4100 = vmatprep.mubr.bf16.mxu0 0
      %4101 = vmatmul.mubr.bf16.gmra.mxu0 %v3981
      %v4102 = vpop.f32.mrf.mxu0
      %v4103 = vadd.f32 0.0, %v4102
      %v4104 = vpop.f32.mrf.mxu0
      %v4105 = vpop.f32.mrf.mxu0
      %v4106 = vadd.f32 0.0, %v4105
      %v4107 = vpop.f32.mrf.mxu0
      %4108 = vmatprep.mubr.bf16.mxu0 0
      %4109 = vmatmul.mubr.bf16.gmra.mxu0 %v3984
      %v4110 = vpop.f32.mrf.mxu0
      %v4111 = vadd.f32 0.0, %v4110
      %v4112 = vpop.f32.mrf.mxu0
      %v4113 = vpop.f32.mrf.mxu0
      %v4114 = vadd.f32 0.0, %v4113
      %v4115 = vpop.f32.mrf.mxu0
      %4116 = vmatprep.mubr.bf16.mxu0 0
      %4117 = vmatmul.mubr.bf16.gmra.mxu0 %v3987
      %v4118 = vpop.f32.mrf.mxu0
      %v4119 = vadd.f32 0.0, %v4118
      %v4120 = vpop.f32.mrf.mxu0
      %v4121 = vpop.f32.mrf.mxu0
      %v4122 = vadd.f32 0.0, %v4121
      %v4123 = vpop.f32.mrf.mxu0
      %4124 = vmatprep.mubr.bf16.mxu0 0
      %4125 = vmatmul.mubr.bf16.gmra.mxu0 %v3990
      %v4126 = vpop.f32.mrf.mxu0
      %v4127 = vadd.f32 0.0, %v4126
      %v4128 = vpop.f32.mrf.mxu0
      %v4129 = vpop.f32.mrf.mxu0
      %v4130 = vadd.f32 0.0, %v4129
      %v4131 = vpop.f32.mrf.mxu0
      %4132 = vmatprep.mubr.bf16.mxu0 0
      %4133 = vmatmul.mubr.bf16.gmra.mxu0 %v3993
      %v4134 = vpop.f32.mrf.mxu0
      %v4135 = vadd.f32 0.0, %v4134
      %v4136 = vpop.f32.mrf.mxu0
      %v4137 = vpop.f32.mrf.mxu0
      %v4138 = vadd.f32 0.0, %v4137
      %v4139 = vpop.f32.mrf.mxu0
      %4140 = vmatprep.mubr.bf16.mxu0 0
      %4141 = vmatmul.mubr.bf16.gmra.mxu0 %v3996
      %v4142 = vpop.f32.mrf.mxu0
      %v4143 = vadd.f32 0.0, %v4142
      %v4144 = vpop.f32.mrf.mxu0
      %v4145 = vpop.f32.mrf.mxu0
      %v4146 = vadd.f32 0.0, %v4145
      %v4147 = vpop.f32.mrf.mxu0
      %4148 = vmatprep.mubr.bf16.mxu0 0
      %4149 = vmatmul.mubr.bf16.gmra.mxu0 %v3999
      %v4150 = vpop.f32.mrf.mxu0
      %v4151 = vadd.f32 0.0, %v4150
      %v4152 = vpop.f32.mrf.mxu0
      %v4153 = vpop.f32.mrf.mxu0
      %v4154 = vadd.f32 0.0, %v4153
      %v4155 = vpop.f32.mrf.mxu0
      %4156 = vmatprep.mubr.bf16.mxu0 0
      %4157 = vmatmul.mubr.bf16.gmra.mxu0 %v4002
      %v4158 = vpop.f32.mrf.mxu0
      %v4159 = vadd.f32 0.0, %v4158
      %v4160 = vpop.f32.mrf.mxu0
      %v4161 = vpop.f32.mrf.mxu0
      %v4162 = vadd.f32 0.0, %v4161
      %v4163 = vpop.f32.mrf.mxu0
      %4164 = vdwg.mxu0
      %s4165 = scalar_lea.vmem %s5, 16
      %v4166 = vld [vmem:[%s4165] sm:$0xf]
      %v4167 = vld [vmem:[%s4165 + $0x4] sm:$0xf]
      %v4168 = vld [vmem:[%s4165 + $0x8] sm:$0xf]
      %v4169 = vld [vmem:[%s4165 + $0xc] sm:$0xf]
      %4170 = vrot.lane.b32.xlu0 %v3876, 64
      %v4171 = vpop.permute.xlu0 %4170
      %4172 = vrot.lane.b32.xlu0 %v3877, 64
      %v4173 = vpop.permute.xlu0 %4172
      %4174 = vrot.lane.b32.xlu0 %v3878, 64
      %v4175 = vpop.permute.xlu0 %4174
      %4176 = vrot.lane.b32.xlu0 %v3879, 64
      %v4177 = vpop.permute.xlu0 %4176
      %4178 = vrot.lane.b32.xlu0 %v3880, 64
      %v4179 = vpop.permute.xlu0 %4178
      %4180 = vrot.lane.b32.xlu0 %v3881, 64
      %v4181 = vpop.permute.xlu0 %4180
      %4182 = vrot.lane.b32.xlu0 %v3882, 64
      %v4183 = vpop.permute.xlu0 %4182
      %4184 = vrot.lane.b32.xlu0 %v3883, 64
      %v4185 = vpop.permute.xlu0 %4184
      %4186 = vrot.lane.b32.xlu0 %v3884, 64
      %v4187 = vpop.permute.xlu0 %4186
      %4188 = vrot.lane.b32.xlu0 %v3885, 64
      %v4189 = vpop.permute.xlu0 %4188
      %4190 = vrot.lane.b32.xlu0 %v3886, 64
      %v4191 = vpop.permute.xlu0 %4190
      %4192 = vrot.lane.b32.xlu0 %v3887, 64
      %v4193 = vpop.permute.xlu0 %4192
      %4194 = vrot.lane.b32.xlu0 %v3888, 64
      %v4195 = vpop.permute.xlu0 %4194
      %4196 = vrot.lane.b32.xlu0 %v3889, 64
      %v4197 = vpop.permute.xlu0 %4196
      %4198 = vrot.lane.b32.xlu0 %v3890, 64
      %v4199 = vpop.permute.xlu0 %4198
      %4200 = vrot.lane.b32.xlu0 %v3891, 64
      %v4201 = vpop.permute.xlu0 %4200
      %v4206 = vunpack.c.l.b16 %v4166
      %v4207 = vunpack.c.l.b16 %v4167
      %v4208 = vunpack.c.l.b16 %v4168
      %v4209 = vunpack.c.l.b16 %v4169
      %v4210 = vpack.c.b16 %v4207, %v4206
      %v4211 = vpack.c.b16 %v4209, %v4208
      %v4215 = vsel %vm2959, %v4171, 0
      %v4218 = vsel %vm2959, %v4173, 0
      %v4221 = vsel %vm2959, %v4175, 0
      %v4224 = vsel %vm2959, %v4177, 0
      %v4227 = vsel %vm2959, %v4179, 0
      %v4230 = vsel %vm2959, %v4181, 0
      %v4233 = vsel %vm2959, %v4183, 0
      %v4236 = vsel %vm2959, %v4185, 0
      %v4239 = vsel %vm2959, %v4187, 0
      %v4242 = vsel %vm2959, %v4189, 0
      %v4245 = vsel %vm2959, %v4191, 0
      %v4248 = vsel %vm2959, %v4193, 0
      %v4251 = vsel %vm2959, %v4195, 0
      %v4254 = vsel %vm2959, %v4197, 0
      %v4257 = vsel %vm2959, %v4199, 0
      %v4260 = vsel %vm2959, %v4201, 0
      %4262 = vmatprep.subr.bf16.mxu0 0
      %4263 = vmatpush1.bf16.msra.mxu0 0
      %4264 = vmatprep.subr.bf16.mxu0 0
      %4265 = vmatpush1.bf16.msra.mxu0 0
      %4266 = vmatprep.subr.bf16.mxu0 0
      %4267 = vmatpush1.bf16.msra.mxu0 0
      %4268 = vmatprep.subr.bf16.mxu0 0
      %4269 = vmatpush1.bf16.msra.mxu0 0
      %4270 = vmatprep.subr.bf16.mxu0 0
      %4271 = vmatpush1.bf16.msra.mxu0 0
      %4272 = vmatprep.subr.bf16.mxu0 0
      %4273 = vmatpush1.bf16.msra.mxu0 0
      %4274 = vmatprep.subr.bf16.mxu0 0
      %4275 = vmatpush1.bf16.msra.mxu0 %v4211
      %4276 = vmatprep.subr.bf16.mxu0 0
      %4277 = vmatpush1.bf16.msra.mxu0 %v4210
      %4278 = vmatprep.subr.bf16.mxu0 0
      %4279 = vmatpush2.bf16.msra.mxu0 0
      %4280 = vmatprep.subr.bf16.mxu0 0
      %4281 = vmatpush2.bf16.msra.mxu0 0
      %4282 = vmatprep.subr.bf16.mxu0 0
      %4283 = vmatpush2.bf16.msra.mxu0 0
      %4284 = vmatprep.subr.bf16.mxu0 0
      %4285 = vmatpush2.bf16.msra.mxu0 0
      %4286 = vmatprep.subr.bf16.mxu0 0
      %4287 = vmatpush2.bf16.msra.mxu0 0
      %4288 = vmatprep.subr.bf16.mxu0 0
      %4289 = vmatpush2.bf16.msra.mxu0 0
      %4290 = vmatprep.subr.bf16.mxu0 0
      %4291 = vmatpush2.bf16.msra.mxu0 0
      %4292 = vmatprep.subr.bf16.mxu0 0
      %4293 = vmatpush2.bf16.msra.mxu0 0
      %4294 = vmatprep.mubr.bf16.mxu0 0
      %4295 = vmatmul.mubr.bf16.gmra.mxu0 %v4215
      %v4296 = vpop.f32.mrf.mxu0
      %v4297 = vadd.f32 0.0, %v4296
      %v4298 = vpop.f32.mrf.mxu0
      %v4299 = vpop.f32.mrf.mxu0
      %v4300 = vadd.f32 0.0, %v4299
      %v4301 = vpop.f32.mrf.mxu0
      %4302 = vmatprep.mubr.bf16.mxu0 0
      %4303 = vmatmul.mubr.bf16.gmra.mxu0 %v4218
      %v4304 = vpop.f32.mrf.mxu0
      %v4305 = vadd.f32 0.0, %v4304
      %v4306 = vpop.f32.mrf.mxu0
      %v4307 = vpop.f32.mrf.mxu0
      %v4308 = vadd.f32 0.0, %v4307
      %v4309 = vpop.f32.mrf.mxu0
      %4310 = vmatprep.mubr.bf16.mxu0 0
      %4311 = vmatmul.mubr.bf16.gmra.mxu0 %v4221
      %v4312 = vpop.f32.mrf.mxu0
      %v4313 = vadd.f32 0.0, %v4312
      %v4314 = vpop.f32.mrf.mxu0
      %v4315 = vpop.f32.mrf.mxu0
      %v4316 = vadd.f32 0.0, %v4315
      %v4317 = vpop.f32.mrf.mxu0
      %4318 = vmatprep.mubr.bf16.mxu0 0
      %4319 = vmatmul.mubr.bf16.gmra.mxu0 %v4224
      %v4320 = vpop.f32.mrf.mxu0
      %v4321 = vadd.f32 0.0, %v4320
      %v4322 = vpop.f32.mrf.mxu0
      %v4323 = vpop.f32.mrf.mxu0
      %v4324 = vadd.f32 0.0, %v4323
      %v4325 = vpop.f32.mrf.mxu0
      %4326 = vmatprep.mubr.bf16.mxu0 0
      %4327 = vmatmul.mubr.bf16.gmra.mxu0 %v4227
      %v4328 = vpop.f32.mrf.mxu0
      %v4329 = vadd.f32 0.0, %v4328
      %v4330 = vpop.f32.mrf.mxu0
      %v4331 = vpop.f32.mrf.mxu0
      %v4332 = vadd.f32 0.0, %v4331
      %v4333 = vpop.f32.mrf.mxu0
      %4334 = vmatprep.mubr.bf16.mxu0 0
      %4335 = vmatmul.mubr.bf16.gmra.mxu0 %v4230
      %v4336 = vpop.f32.mrf.mxu0
      %v4337 = vadd.f32 0.0, %v4336
      %v4338 = vpop.f32.mrf.mxu0
      %v4339 = vpop.f32.mrf.mxu0
      %v4340 = vadd.f32 0.0, %v4339
      %v4341 = vpop.f32.mrf.mxu0
      %4342 = vmatprep.mubr.bf16.mxu0 0
      %4343 = vmatmul.mubr.bf16.gmra.mxu0 %v4233
      %v4344 = vpop.f32.mrf.mxu0
      %v4345 = vadd.f32 0.0, %v4344
      %v4346 = vpop.f32.mrf.mxu0
      %v4347 = vpop.f32.mrf.mxu0
      %v4348 = vadd.f32 0.0, %v4347
      %v4349 = vpop.f32.mrf.mxu0
      %4350 = vmatprep.mubr.bf16.mxu0 0
      %4351 = vmatmul.mubr.bf16.gmra.mxu0 %v4236
      %v4352 = vpop.f32.mrf.mxu0
      %v4353 = vadd.f32 0.0, %v4352
      %v4354 = vpop.f32.mrf.mxu0
      %v4355 = vpop.f32.mrf.mxu0
      %v4356 = vadd.f32 0.0, %v4355
      %v4357 = vpop.f32.mrf.mxu0
      %4358 = vmatprep.mubr.bf16.mxu0 0
      %4359 = vmatmul.mubr.bf16.gmra.mxu0 %v4239
      %v4360 = vpop.f32.mrf.mxu0
      %v4361 = vadd.f32 0.0, %v4360
      %v4362 = vpop.f32.mrf.mxu0
      %v4363 = vpop.f32.mrf.mxu0
      %v4364 = vadd.f32 0.0, %v4363
      %v4365 = vpop.f32.mrf.mxu0
      %4366 = vmatprep.mubr.bf16.mxu0 0
      %4367 = vmatmul.mubr.bf16.gmra.mxu0 %v4242
      %v4368 = vpop.f32.mrf.mxu0
      %v4369 = vadd.f32 0.0, %v4368
      %v4370 = vpop.f32.mrf.mxu0
      %v4371 = vpop.f32.mrf.mxu0
      %v4372 = vadd.f32 0.0, %v4371
      %v4373 = vpop.f32.mrf.mxu0
      %4374 = vmatprep.mubr.bf16.mxu0 0
      %4375 = vmatmul.mubr.bf16.gmra.mxu0 %v4245
      %v4376 = vpop.f32.mrf.mxu0
      %v4377 = vadd.f32 0.0, %v4376
      %v4378 = vpop.f32.mrf.mxu0
      %v4379 = vpop.f32.mrf.mxu0
      %v4380 = vadd.f32 0.0, %v4379
      %v4381 = vpop.f32.mrf.mxu0
      %4382 = vmatprep.mubr.bf16.mxu0 0
      %4383 = vmatmul.mubr.bf16.gmra.mxu0 %v4248
      %v4384 = vpop.f32.mrf.mxu0
      %v4385 = vadd.f32 0.0, %v4384
      %v4386 = vpop.f32.mrf.mxu0
      %v4387 = vpop.f32.mrf.mxu0
      %v4388 = vadd.f32 0.0, %v4387
      %v4389 = vpop.f32.mrf.mxu0
      %4390 = vmatprep.mubr.bf16.mxu0 0
      %4391 = vmatmul.mubr.bf16.gmra.mxu0 %v4251
      %v4392 = vpop.f32.mrf.mxu0
      %v4393 = vadd.f32 0.0, %v4392
      %v4394 = vpop.f32.mrf.mxu0
      %v4395 = vpop.f32.mrf.mxu0
      %v4396 = vadd.f32 0.0, %v4395
      %v4397 = vpop.f32.mrf.mxu0
      %4398 = vmatprep.mubr.bf16.mxu0 0
      %4399 = vmatmul.mubr.bf16.gmra.mxu0 %v4254
      %v4400 = vpop.f32.mrf.mxu0
      %v4401 = vadd.f32 0.0, %v4400
      %v4402 = vpop.f32.mrf.mxu0
      %v4403 = vpop.f32.mrf.mxu0
      %v4404 = vadd.f32 0.0, %v4403
      %v4405 = vpop.f32.mrf.mxu0
      %4406 = vmatprep.mubr.bf16.mxu0 0
      %4407 = vmatmul.mubr.bf16.gmra.mxu0 %v4257
      %v4408 = vpop.f32.mrf.mxu0
      %v4409 = vadd.f32 0.0, %v4408
      %v4410 = vpop.f32.mrf.mxu0
      %v4411 = vpop.f32.mrf.mxu0
      %v4412 = vadd.f32 0.0, %v4411
      %v4413 = vpop.f32.mrf.mxu0
      %4414 = vmatprep.mubr.bf16.mxu0 0
      %4415 = vmatmul.mubr.bf16.gmra.mxu0 %v4260
      %v4416 = vpop.f32.mrf.mxu0
      %v4417 = vadd.f32 0.0, %v4416
      %v4418 = vpop.f32.mrf.mxu0
      %v4419 = vpop.f32.mrf.mxu0
      %v4420 = vadd.f32 0.0, %v4419
      %v4421 = vpop.f32.mrf.mxu0
      %4422 = vdwg.mxu0
      %s4423 = scalar_lea.vmem %s5, 32
      %v4424 = vld [vmem:[%s4423] sm:$0xf]
      %v4425 = vld [vmem:[%s4423 + $0x4] sm:$0xf]
      %v4426 = vld [vmem:[%s4423 + $0x8] sm:$0xf]
      %v4427 = vld [vmem:[%s4423 + $0xc] sm:$0xf]
      %4428 = vrot.lane.b32.xlu0 %v3876, 32
      %v4429 = vpop.permute.xlu0 %4428
      %4430 = vrot.lane.b32.xlu0 %v3877, 32
      %v4431 = vpop.permute.xlu0 %4430
      %4432 = vrot.lane.b32.xlu0 %v3878, 32
      %v4433 = vpop.permute.xlu0 %4432
      %4434 = vrot.lane.b32.xlu0 %v3879, 32
      %v4435 = vpop.permute.xlu0 %4434
      %4436 = vrot.lane.b32.xlu0 %v3880, 32
      %v4437 = vpop.permute.xlu0 %4436
      %4438 = vrot.lane.b32.xlu0 %v3881, 32
      %v4439 = vpop.permute.xlu0 %4438
      %4440 = vrot.lane.b32.xlu0 %v3882, 32
      %v4441 = vpop.permute.xlu0 %4440
      %4442 = vrot.lane.b32.xlu0 %v3883, 32
      %v4443 = vpop.permute.xlu0 %4442
      %4444 = vrot.lane.b32.xlu0 %v3884, 32
      %v4445 = vpop.permute.xlu0 %4444
      %4446 = vrot.lane.b32.xlu0 %v3885, 32
      %v4447 = vpop.permute.xlu0 %4446
      %4448 = vrot.lane.b32.xlu0 %v3886, 32
      %v4449 = vpop.permute.xlu0 %4448
      %4450 = vrot.lane.b32.xlu0 %v3887, 32
      %v4451 = vpop.permute.xlu0 %4450
      %4452 = vrot.lane.b32.xlu0 %v3888, 32
      %v4453 = vpop.permute.xlu0 %4452
      %4454 = vrot.lane.b32.xlu0 %v3889, 32
      %v4455 = vpop.permute.xlu0 %4454
      %4456 = vrot.lane.b32.xlu0 %v3890, 32
      %v4457 = vpop.permute.xlu0 %4456
      %4458 = vrot.lane.b32.xlu0 %v3891, 32
      %v4459 = vpop.permute.xlu0 %4458
      %v4464 = vunpack.c.l.b16 %v4424
      %v4465 = vunpack.c.l.b16 %v4425
      %v4466 = vunpack.c.l.b16 %v4426
      %v4467 = vunpack.c.l.b16 %v4427
      %v4468 = vpack.c.b16 %v4465, %v4464
      %v4469 = vpack.c.b16 %v4467, %v4466
      %v4473 = vsel %vm2959, %v4429, 0
      %v4476 = vsel %vm2959, %v4431, 0
      %v4479 = vsel %vm2959, %v4433, 0
      %v4482 = vsel %vm2959, %v4435, 0
      %v4485 = vsel %vm2959, %v4437, 0
      %v4488 = vsel %vm2959, %v4439, 0
      %v4491 = vsel %vm2959, %v4441, 0
      %v4494 = vsel %vm2959, %v4443, 0
      %v4497 = vsel %vm2959, %v4445, 0
      %v4500 = vsel %vm2959, %v4447, 0
      %v4503 = vsel %vm2959, %v4449, 0
      %v4506 = vsel %vm2959, %v4451, 0
      %v4509 = vsel %vm2959, %v4453, 0
      %v4512 = vsel %vm2959, %v4455, 0
      %v4515 = vsel %vm2959, %v4457, 0
      %v4518 = vsel %vm2959, %v4459, 0
      %4520 = vmatprep.subr.bf16.mxu0 0
      %4521 = vmatpush1.bf16.msra.mxu0 0
      %4522 = vmatprep.subr.bf16.mxu0 0
      %4523 = vmatpush1.bf16.msra.mxu0 0
      %4524 = vmatprep.subr.bf16.mxu0 0
      %4525 = vmatpush1.bf16.msra.mxu0 0
      %4526 = vmatprep.subr.bf16.mxu0 0
      %4527 = vmatpush1.bf16.msra.mxu0 0
      %4528 = vmatprep.subr.bf16.mxu0 0
      %4529 = vmatpush1.bf16.msra.mxu0 0
      %4530 = vmatprep.subr.bf16.mxu0 0
      %4531 = vmatpush1.bf16.msra.mxu0 0
      %4532 = vmatprep.subr.bf16.mxu0 0
      %4533 = vmatpush1.bf16.msra.mxu0 %v4469
      %4534 = vmatprep.subr.bf16.mxu0 0
      %4535 = vmatpush1.bf16.msra.mxu0 %v4468
      %4536 = vmatprep.subr.bf16.mxu0 0
      %4537 = vmatpush2.bf16.msra.mxu0 0
      %4538 = vmatprep.subr.bf16.mxu0 0
      %4539 = vmatpush2.bf16.msra.mxu0 0
      %4540 = vmatprep.subr.bf16.mxu0 0
      %4541 = vmatpush2.bf16.msra.mxu0 0
      %4542 = vmatprep.subr.bf16.mxu0 0
      %4543 = vmatpush2.bf16.msra.mxu0 0
      %4544 = vmatprep.subr.bf16.mxu0 0
      %4545 = vmatpush2.bf16.msra.mxu0 0
      %4546 = vmatprep.subr.bf16.mxu0 0
      %4547 = vmatpush2.bf16.msra.mxu0 0
      %4548 = vmatprep.subr.bf16.mxu0 0
      %4549 = vmatpush2.bf16.msra.mxu0 0
      %4550 = vmatprep.subr.bf16.mxu0 0
      %4551 = vmatpush2.bf16.msra.mxu0 0
      %4552 = vmatprep.mubr.bf16.mxu0 0
      %4553 = vmatmul.mubr.bf16.gmra.mxu0 %v4473
      %v4554 = vpop.f32.mrf.mxu0
      %v4555 = vadd.f32 0.0, %v4554
      %v4556 = vpop.f32.mrf.mxu0
      %v4557 = vpop.f32.mrf.mxu0
      %v4558 = vadd.f32 0.0, %v4557
      %v4559 = vpop.f32.mrf.mxu0
      %4560 = vmatprep.mubr.bf16.mxu0 0
      %4561 = vmatmul.mubr.bf16.gmra.mxu0 %v4476
      %v4562 = vpop.f32.mrf.mxu0
      %v4563 = vadd.f32 0.0, %v4562
      %v4564 = vpop.f32.mrf.mxu0
      %v4565 = vpop.f32.mrf.mxu0
      %v4566 = vadd.f32 0.0, %v4565
      %v4567 = vpop.f32.mrf.mxu0
      %4568 = vmatprep.mubr.bf16.mxu0 0
      %4569 = vmatmul.mubr.bf16.gmra.mxu0 %v4479
      %v4570 = vpop.f32.mrf.mxu0
      %v4571 = vadd.f32 0.0, %v4570
      %v4572 = vpop.f32.mrf.mxu0
      %v4573 = vpop.f32.mrf.mxu0
      %v4574 = vadd.f32 0.0, %v4573
      %v4575 = vpop.f32.mrf.mxu0
      %4576 = vmatprep.mubr.bf16.mxu0 0
      %4577 = vmatmul.mubr.bf16.gmra.mxu0 %v4482
      %v4578 = vpop.f32.mrf.mxu0
      %v4579 = vadd.f32 0.0, %v4578
      %v4580 = vpop.f32.mrf.mxu0
      %v4581 = vpop.f32.mrf.mxu0
      %v4582 = vadd.f32 0.0, %v4581
      %v4583 = vpop.f32.mrf.mxu0
      %4584 = vmatprep.mubr.bf16.mxu0 0
      %4585 = vmatmul.mubr.bf16.gmra.mxu0 %v4485
      %v4586 = vpop.f32.mrf.mxu0
      %v4587 = vadd.f32 0.0, %v4586
      %v4588 = vpop.f32.mrf.mxu0
      %v4589 = vpop.f32.mrf.mxu0
      %v4590 = vadd.f32 0.0, %v4589
      %v4591 = vpop.f32.mrf.mxu0
      %4592 = vmatprep.mubr.bf16.mxu0 0
      %4593 = vmatmul.mubr.bf16.gmra.mxu0 %v4488
      %v4594 = vpop.f32.mrf.mxu0
      %v4595 = vadd.f32 0.0, %v4594
      %v4596 = vpop.f32.mrf.mxu0
      %v4597 = vpop.f32.mrf.mxu0
      %v4598 = vadd.f32 0.0, %v4597
      %v4599 = vpop.f32.mrf.mxu0
      %4600 = vmatprep.mubr.bf16.mxu0 0
      %4601 = vmatmul.mubr.bf16.gmra.mxu0 %v4491
      %v4602 = vpop.f32.mrf.mxu0
      %v4603 = vadd.f32 0.0, %v4602
      %v4604 = vpop.f32.mrf.mxu0
      %v4605 = vpop.f32.mrf.mxu0
      %v4606 = vadd.f32 0.0, %v4605
      %v4607 = vpop.f32.mrf.mxu0
      %4608 = vmatprep.mubr.bf16.mxu0 0
      %4609 = vmatmul.mubr.bf16.gmra.mxu0 %v4494
      %v4610 = vpop.f32.mrf.mxu0
      %v4611 = vadd.f32 0.0, %v4610
      %v4612 = vpop.f32.mrf.mxu0
      %v4613 = vpop.f32.mrf.mxu0
      %v4614 = vadd.f32 0.0, %v4613
      %v4615 = vpop.f32.mrf.mxu0
      %4616 = vmatprep.mubr.bf16.mxu0 0
      %4617 = vmatmul.mubr.bf16.gmra.mxu0 %v4497
      %v4618 = vpop.f32.mrf.mxu0
      %v4619 = vadd.f32 0.0, %v4618
      %v4620 = vpop.f32.mrf.mxu0
      %v4621 = vpop.f32.mrf.mxu0
      %v4622 = vadd.f32 0.0, %v4621
      %v4623 = vpop.f32.mrf.mxu0
      %4624 = vmatprep.mubr.bf16.mxu0 0
      %4625 = vmatmul.mubr.bf16.gmra.mxu0 %v4500
      %v4626 = vpop.f32.mrf.mxu0
      %v4627 = vadd.f32 0.0, %v4626
      %v4628 = vpop.f32.mrf.mxu0
      %v4629 = vpop.f32.mrf.mxu0
      %v4630 = vadd.f32 0.0, %v4629
      %v4631 = vpop.f32.mrf.mxu0
      %4632 = vmatprep.mubr.bf16.mxu0 0
      %4633 = vmatmul.mubr.bf16.gmra.mxu0 %v4503
      %v4634 = vpop.f32.mrf.mxu0
      %v4635 = vadd.f32 0.0, %v4634
      %v4636 = vpop.f32.mrf.mxu0
      %v4637 = vpop.f32.mrf.mxu0
      %v4638 = vadd.f32 0.0, %v4637
      %v4639 = vpop.f32.mrf.mxu0
      %4640 = vmatprep.mubr.bf16.mxu0 0
      %4641 = vmatmul.mubr.bf16.gmra.mxu0 %v4506
      %v4642 = vpop.f32.mrf.mxu0
      %v4643 = vadd.f32 0.0, %v4642
      %v4644 = vpop.f32.mrf.mxu0
      %v4645 = vpop.f32.mrf.mxu0
      %v4646 = vadd.f32 0.0, %v4645
      %v4647 = vpop.f32.mrf.mxu0
      %4648 = vmatprep.mubr.bf16.mxu0 0
      %4649 = vmatmul.mubr.bf16.gmra.mxu0 %v4509
      %v4650 = vpop.f32.mrf.mxu0
      %v4651 = vadd.f32 0.0, %v4650
      %v4652 = vpop.f32.mrf.mxu0
      %v4653 = vpop.f32.mrf.mxu0
      %v4654 = vadd.f32 0.0, %v4653
      %v4655 = vpop.f32.mrf.mxu0
      %4656 = vmatprep.mubr.bf16.mxu0 0
      %4657 = vmatmul.mubr.bf16.gmra.mxu0 %v4512
      %v4658 = vpop.f32.mrf.mxu0
      %v4659 = vadd.f32 0.0, %v4658
      %v4660 = vpop.f32.mrf.mxu0
      %v4661 = vpop.f32.mrf.mxu0
      %v4662 = vadd.f32 0.0, %v4661
      %v4663 = vpop.f32.mrf.mxu0
      %4664 = vmatprep.mubr.bf16.mxu0 0
      %4665 = vmatmul.mubr.bf16.gmra.mxu0 %v4515
      %v4666 = vpop.f32.mrf.mxu0
      %v4667 = vadd.f32 0.0, %v4666
      %v4668 = vpop.f32.mrf.mxu0
      %v4669 = vpop.f32.mrf.mxu0
      %v4670 = vadd.f32 0.0, %v4669
      %v4671 = vpop.f32.mrf.mxu0
      %4672 = vmatprep.mubr.bf16.mxu0 0
      %4673 = vmatmul.mubr.bf16.gmra.mxu0 %v4518
      %v4674 = vpop.f32.mrf.mxu0
      %v4675 = vadd.f32 0.0, %v4674
      %v4676 = vpop.f32.mrf.mxu0
      %v4677 = vpop.f32.mrf.mxu0
      %v4678 = vadd.f32 0.0, %v4677
      %v4679 = vpop.f32.mrf.mxu0
      %4680 = vdwg.mxu0
      %4713 = vrot.lane.b32.xlu0 %v4297, 16
      %v4714 = vpop.permute.xlu0 %4713
      %4715 = vrot.lane.b32.xlu0 %v4300, 16
      %v4716 = vpop.permute.xlu0 %4715
      %4717 = vrot.lane.b32.xlu0 %v4305, 16
      %v4718 = vpop.permute.xlu0 %4717
      %4719 = vrot.lane.b32.xlu0 %v4308, 16
      %v4720 = vpop.permute.xlu0 %4719
      %4721 = vrot.lane.b32.xlu0 %v4313, 16
      %v4722 = vpop.permute.xlu0 %4721
      %4723 = vrot.lane.b32.xlu0 %v4316, 16
      %v4724 = vpop.permute.xlu0 %4723
      %4725 = vrot.lane.b32.xlu0 %v4321, 16
      %v4726 = vpop.permute.xlu0 %4725
      %4727 = vrot.lane.b32.xlu0 %v4324, 16
      %v4728 = vpop.permute.xlu0 %4727
      %4729 = vrot.lane.b32.xlu0 %v4329, 16
      %v4730 = vpop.permute.xlu0 %4729
      %4731 = vrot.lane.b32.xlu0 %v4332, 16
      %v4732 = vpop.permute.xlu0 %4731
      %4733 = vrot.lane.b32.xlu0 %v4337, 16
      %v4734 = vpop.permute.xlu0 %4733
      %4735 = vrot.lane.b32.xlu0 %v4340, 16
      %v4736 = vpop.permute.xlu0 %4735
      %4737 = vrot.lane.b32.xlu0 %v4345, 16
      %v4738 = vpop.permute.xlu0 %4737
      %4739 = vrot.lane.b32.xlu0 %v4348, 16
      %v4740 = vpop.permute.xlu0 %4739
      %4741 = vrot.lane.b32.xlu0 %v4353, 16
      %v4742 = vpop.permute.xlu0 %4741
      %4743 = vrot.lane.b32.xlu0 %v4356, 16
      %v4744 = vpop.permute.xlu0 %4743
      %4745 = vrot.lane.b32.xlu0 %v4361, 16
      %v4746 = vpop.permute.xlu0 %4745
      %4747 = vrot.lane.b32.xlu0 %v4364, 16
      %v4748 = vpop.permute.xlu0 %4747
      %4749 = vrot.lane.b32.xlu0 %v4369, 16
      %v4750 = vpop.permute.xlu0 %4749
      %4751 = vrot.lane.b32.xlu0 %v4372, 16
      %v4752 = vpop.permute.xlu0 %4751
      %4753 = vrot.lane.b32.xlu0 %v4377, 16
      %v4754 = vpop.permute.xlu0 %4753
      %4755 = vrot.lane.b32.xlu0 %v4380, 16
      %v4756 = vpop.permute.xlu0 %4755
      %4757 = vrot.lane.b32.xlu0 %v4385, 16
      %v4758 = vpop.permute.xlu0 %4757
      %4759 = vrot.lane.b32.xlu0 %v4388, 16
      %v4760 = vpop.permute.xlu0 %4759
      %4761 = vrot.lane.b32.xlu0 %v4393, 16
      %v4762 = vpop.permute.xlu0 %4761
      %4763 = vrot.lane.b32.xlu0 %v4396, 16
      %v4764 = vpop.permute.xlu0 %4763
      %4765 = vrot.lane.b32.xlu0 %v4401, 16
      %v4766 = vpop.permute.xlu0 %4765
      %4767 = vrot.lane.b32.xlu0 %v4404, 16
      %v4768 = vpop.permute.xlu0 %4767
      %4769 = vrot.lane.b32.xlu0 %v4409, 16
      %v4770 = vpop.permute.xlu0 %4769
      %4771 = vrot.lane.b32.xlu0 %v4412, 16
      %v4772 = vpop.permute.xlu0 %4771
      %4773 = vrot.lane.b32.xlu0 %v4417, 16
      %v4774 = vpop.permute.xlu0 %4773
      %4775 = vrot.lane.b32.xlu0 %v4420, 16
      %v4776 = vpop.permute.xlu0 %4775
      %4841 = vrot.lane.b32.xlu0 %v4555, 32
      %v4842 = vpop.permute.xlu0 %4841
      %4843 = vrot.lane.b32.xlu0 %v4558, 32
      %v4844 = vpop.permute.xlu0 %4843
      %4845 = vrot.lane.b32.xlu0 %v4563, 32
      %v4846 = vpop.permute.xlu0 %4845
      %4847 = vrot.lane.b32.xlu0 %v4566, 32
      %v4848 = vpop.permute.xlu0 %4847
      %4849 = vrot.lane.b32.xlu0 %v4571, 32
      %v4850 = vpop.permute.xlu0 %4849
      %4851 = vrot.lane.b32.xlu0 %v4574, 32
      %v4852 = vpop.permute.xlu0 %4851
      %4853 = vrot.lane.b32.xlu0 %v4579, 32
      %v4854 = vpop.permute.xlu0 %4853
      %4855 = vrot.lane.b32.xlu0 %v4582, 32
      %v4856 = vpop.permute.xlu0 %4855
      %4857 = vrot.lane.b32.xlu0 %v4587, 32
      %v4858 = vpop.permute.xlu0 %4857
      %4859 = vrot.lane.b32.xlu0 %v4590, 32
      %v4860 = vpop.permute.xlu0 %4859
      %4861 = vrot.lane.b32.xlu0 %v4595, 32
      %v4862 = vpop.permute.xlu0 %4861
      %4863 = vrot.lane.b32.xlu0 %v4598, 32
      %v4864 = vpop.permute.xlu0 %4863
      %4865 = vrot.lane.b32.xlu0 %v4603, 32
      %v4866 = vpop.permute.xlu0 %4865
      %4867 = vrot.lane.b32.xlu0 %v4606, 32
      %v4868 = vpop.permute.xlu0 %4867
      %4869 = vrot.lane.b32.xlu0 %v4611, 32
      %v4870 = vpop.permute.xlu0 %4869
      %4871 = vrot.lane.b32.xlu0 %v4614, 32
      %v4872 = vpop.permute.xlu0 %4871
      %4873 = vrot.lane.b32.xlu0 %v4619, 32
      %v4874 = vpop.permute.xlu0 %4873
      %4875 = vrot.lane.b32.xlu0 %v4622, 32
      %v4876 = vpop.permute.xlu0 %4875
      %4877 = vrot.lane.b32.xlu0 %v4627, 32
      %v4878 = vpop.permute.xlu0 %4877
      %4879 = vrot.lane.b32.xlu0 %v4630, 32
      %v4880 = vpop.permute.xlu0 %4879
      %4881 = vrot.lane.b32.xlu0 %v4635, 32
      %v4882 = vpop.permute.xlu0 %4881
      %4883 = vrot.lane.b32.xlu0 %v4638, 32
      %v4884 = vpop.permute.xlu0 %4883
      %4885 = vrot.lane.b32.xlu0 %v4643, 32
      %v4886 = vpop.permute.xlu0 %4885
      %4887 = vrot.lane.b32.xlu0 %v4646, 32
      %v4888 = vpop.permute.xlu0 %4887
      %4889 = vrot.lane.b32.xlu0 %v4651, 32
      %v4890 = vpop.permute.xlu0 %4889
      %4891 = vrot.lane.b32.xlu0 %v4654, 32
      %v4892 = vpop.permute.xlu0 %4891
      %4893 = vrot.lane.b32.xlu0 %v4659, 32
      %v4894 = vpop.permute.xlu0 %4893
      %4895 = vrot.lane.b32.xlu0 %v4662, 32
      %v4896 = vpop.permute.xlu0 %4895
      %4897 = vrot.lane.b32.xlu0 %v4667, 32
      %v4898 = vpop.permute.xlu0 %4897
      %4899 = vrot.lane.b32.xlu0 %v4670, 32
      %v4900 = vpop.permute.xlu0 %4899
      %4901 = vrot.lane.b32.xlu0 %v4675, 32
      %v4902 = vpop.permute.xlu0 %4901
      %4903 = vrot.lane.b32.xlu0 %v4678, 32
      %v4904 = vpop.permute.xlu0 %4903
      %v4937 = vsel %vm2811, %v4039, %v4714
      %v4938 = vsel %vm2811, %v4042, %v4716
      %v4939 = vsel %vm2811, %v4047, %v4718
      %v4940 = vsel %vm2811, %v4050, %v4720
      %v4941 = vsel %vm2811, %v4055, %v4722
      %v4942 = vsel %vm2811, %v4058, %v4724
      %v4943 = vsel %vm2811, %v4063, %v4726
      %v4944 = vsel %vm2811, %v4066, %v4728
      %v4945 = vsel %vm2811, %v4071, %v4730
      %v4946 = vsel %vm2811, %v4074, %v4732
      %v4947 = vsel %vm2811, %v4079, %v4734
      %v4948 = vsel %vm2811, %v4082, %v4736
      %v4949 = vsel %vm2811, %v4087, %v4738
      %v4950 = vsel %vm2811, %v4090, %v4740
      %v4951 = vsel %vm2811, %v4095, %v4742
      %v4952 = vsel %vm2811, %v4098, %v4744
      %v4953 = vsel %vm2811, %v4103, %v4746
      %v4954 = vsel %vm2811, %v4106, %v4748
      %v4955 = vsel %vm2811, %v4111, %v4750
      %v4956 = vsel %vm2811, %v4114, %v4752
      %v4957 = vsel %vm2811, %v4119, %v4754
      %v4958 = vsel %vm2811, %v4122, %v4756
      %v4959 = vsel %vm2811, %v4127, %v4758
      %v4960 = vsel %vm2811, %v4130, %v4760
      %v4961 = vsel %vm2811, %v4135, %v4762
      %v4962 = vsel %vm2811, %v4138, %v4764
      %v4963 = vsel %vm2811, %v4143, %v4766
      %v4964 = vsel %vm2811, %v4146, %v4768
      %v4965 = vsel %vm2811, %v4151, %v4770
      %v4966 = vsel %vm2811, %v4154, %v4772
      %v4967 = vsel %vm2811, %v4159, %v4774
      %v4968 = vsel %vm2811, %v4162, %v4776
      %v4969 = vsel %vm2959, %v4937, %v4842
      %v4970 = vsel %vm2959, %v4938, %v4844
      %v4971 = vsel %vm2959, %v4939, %v4846
      %v4972 = vsel %vm2959, %v4940, %v4848
      %v4973 = vsel %vm2959, %v4941, %v4850
      %v4974 = vsel %vm2959, %v4942, %v4852
      %v4975 = vsel %vm2959, %v4943, %v4854
      %v4976 = vsel %vm2959, %v4944, %v4856
      %v4977 = vsel %vm2959, %v4945, %v4858
      %v4978 = vsel %vm2959, %v4946, %v4860
      %v4979 = vsel %vm2959, %v4947, %v4862
      %v4980 = vsel %vm2959, %v4948, %v4864
      %v4981 = vsel %vm2959, %v4949, %v4866
      %v4982 = vsel %vm2959, %v4950, %v4868
      %v4983 = vsel %vm2959, %v4951, %v4870
      %v4984 = vsel %vm2959, %v4952, %v4872
      %v4985 = vsel %vm2959, %v4953, %v4874
      %v4986 = vsel %vm2959, %v4954, %v4876
      %v4987 = vsel %vm2959, %v4955, %v4878
      %v4988 = vsel %vm2959, %v4956, %v4880
      %v4989 = vsel %vm2959, %v4957, %v4882
      %v4990 = vsel %vm2959, %v4958, %v4884
      %v4991 = vsel %vm2959, %v4959, %v4886
      %v4992 = vsel %vm2959, %v4960, %v4888
      %v4993 = vsel %vm2959, %v4961, %v4890
      %v4994 = vsel %vm2959, %v4962, %v4892
      %v4995 = vsel %vm2959, %v4963, %v4894
      %v4996 = vsel %vm2959, %v4964, %v4896
      %v4997 = vsel %vm2959, %v4965, %v4898
      %v4998 = vsel %vm2959, %v4966, %v4900
      %v4999 = vsel %vm2959, %v4967, %v4902
      %v5000 = vsel %vm2959, %v4968, %v4904
      %v5001 = vld [vmem:[%s6] sm:$0x1]
      %v5003 = vlaneseq
      %v5004 = vshrl.u32 %v5003, 7
      %v5005 = vsub.s32 0, %v5004
      %v5006 = vrot.slane %v5001, %v5005
      %v5008 = vadd.f32 %v4969, %v5006
      %v5009 = vadd.f32 %v4970, %v5006
      %v5010 = vadd.f32 %v4971, %v5006
      %v5011 = vadd.f32 %v4972, %v5006
      %v5012 = vadd.f32 %v4973, %v5006
      %v5013 = vadd.f32 %v4974, %v5006
      %v5014 = vadd.f32 %v4975, %v5006
      %v5015 = vadd.f32 %v4976, %v5006
      %v5016 = vadd.f32 %v4977, %v5006
      %v5017 = vadd.f32 %v4978, %v5006
      %v5018 = vadd.f32 %v4979, %v5006
      %v5019 = vadd.f32 %v4980, %v5006
      %v5020 = vadd.f32 %v4981, %v5006
      %v5021 = vadd.f32 %v4982, %v5006
      %v5022 = vadd.f32 %v4983, %v5006
      %v5023 = vadd.f32 %v4984, %v5006
      %v5024 = vadd.f32 %v4985, %v5006
      %v5025 = vadd.f32 %v4986, %v5006
      %v5026 = vadd.f32 %v4987, %v5006
      %v5027 = vadd.f32 %v4988, %v5006
      %v5028 = vadd.f32 %v4989, %v5006
      %v5029 = vadd.f32 %v4990, %v5006
      %v5030 = vadd.f32 %v4991, %v5006
      %v5031 = vadd.f32 %v4992, %v5006
      %v5032 = vadd.f32 %v4993, %v5006
      %v5033 = vadd.f32 %v4994, %v5006
      %v5034 = vadd.f32 %v4995, %v5006
      %v5035 = vadd.f32 %v4996, %v5006
      %v5036 = vadd.f32 %v4997, %v5006
      %v5037 = vadd.f32 %v4998, %v5006
      %v5038 = vadd.f32 %v4999, %v5006
      %v5039 = vadd.f32 %v5000, %v5006
      %v5040 = vmax.f32 %v5008, 0.0
      %v5041 = vmax.f32 %v5009, 0.0
      %v5042 = vmax.f32 %v5010, 0.0
      %v5043 = vmax.f32 %v5011, 0.0
      %v5044 = vmax.f32 %v5012, 0.0
      %v5045 = vmax.f32 %v5013, 0.0
      %v5046 = vmax.f32 %v5014, 0.0
      %v5047 = vmax.f32 %v5015, 0.0
      %v5048 = vmax.f32 %v5016, 0.0
      %v5049 = vmax.f32 %v5017, 0.0
      %v5050 = vmax.f32 %v5018, 0.0
      %v5051 = vmax.f32 %v5019, 0.0
      %v5052 = vmax.f32 %v5020, 0.0
      %v5053 = vmax.f32 %v5021, 0.0
      %v5054 = vmax.f32 %v5022, 0.0
      %v5055 = vmax.f32 %v5023, 0.0
      %v5056 = vmax.f32 %v5024, 0.0
      %v5057 = vmax.f32 %v5025, 0.0
      %v5058 = vmax.f32 %v5026, 0.0
      %v5059 = vmax.f32 %v5027, 0.0
      %v5060 = vmax.f32 %v5028, 0.0
      %v5061 = vmax.f32 %v5029, 0.0
      %v5062 = vmax.f32 %v5030, 0.0
      %v5063 = vmax.f32 %v5031, 0.0
      %v5064 = vmax.f32 %v5032, 0.0
      %v5065 = vmax.f32 %v5033, 0.0
      %v5066 = vmax.f32 %v5034, 0.0
      %v5067 = vmax.f32 %v5035, 0.0
      %v5068 = vmax.f32 %v5036, 0.0
      %v5069 = vmax.f32 %v5037, 0.0
      %v5070 = vmax.f32 %v5038, 0.0
      %v5071 = vmax.f32 %v5039, 0.0
      %v5072 = vpack.c.bf16 %v5041, %v5040
      %v5073 = vpack.c.bf16 %v5043, %v5042
      %v5074 = vpack.c.bf16 %v5045, %v5044
      %v5075 = vpack.c.bf16 %v5047, %v5046
      %v5076 = vpack.c.bf16 %v5049, %v5048
      %v5077 = vpack.c.bf16 %v5051, %v5050
      %v5078 = vpack.c.bf16 %v5053, %v5052
      %v5079 = vpack.c.bf16 %v5055, %v5054
      %v5080 = vpack.c.bf16 %v5057, %v5056
      %v5081 = vpack.c.bf16 %v5059, %v5058
      %v5082 = vpack.c.bf16 %v5061, %v5060
      %v5083 = vpack.c.bf16 %v5063, %v5062
      %v5084 = vpack.c.bf16 %v5065, %v5064
      %v5085 = vpack.c.bf16 %v5067, %v5066
      %v5086 = vpack.c.bf16 %v5069, %v5068
      %v5087 = vpack.c.bf16 %v5071, %v5070
      %v5104 = vunpack.c.l.b16 %v5072
      %v5105 = vunpack.c.h.b16 %v5072
      %v5106 = vunpack.c.l.b16 %v5073
      %v5107 = vunpack.c.h.b16 %v5073
      %v5108 = vunpack.c.l.b16 %v5074
      %v5109 = vunpack.c.h.b16 %v5074
      %v5110 = vunpack.c.l.b16 %v5075
      %v5111 = vunpack.c.h.b16 %v5075
      %v5112 = vunpack.c.l.b16 %v5076
      %v5113 = vunpack.c.h.b16 %v5076
      %v5114 = vunpack.c.l.b16 %v5077
      %v5115 = vunpack.c.h.b16 %v5077
      %v5116 = vunpack.c.l.b16 %v5078
      %v5117 = vunpack.c.h.b16 %v5078
      %v5118 = vunpack.c.l.b16 %v5079
      %v5119 = vunpack.c.h.b16 %v5079
      %v5120 = vunpack.c.l.b16 %v5080
      %v5121 = vunpack.c.h.b16 %v5080
      %v5122 = vunpack.c.l.b16 %v5081
      %v5123 = vunpack.c.h.b16 %v5081
      %v5124 = vunpack.c.l.b16 %v5082
      %v5125 = vunpack.c.h.b16 %v5082
      %v5126 = vunpack.c.l.b16 %v5083
      %v5127 = vunpack.c.h.b16 %v5083
      %v5128 = vunpack.c.l.b16 %v5084
      %v5129 = vunpack.c.h.b16 %v5084
      %v5130 = vunpack.c.l.b16 %v5085
      %v5131 = vunpack.c.h.b16 %v5085
      %v5132 = vunpack.c.l.b16 %v5086
      %v5133 = vunpack.c.h.b16 %v5086
      %v5134 = vunpack.c.l.b16 %v5087
      %v5135 = vunpack.c.h.b16 %v5087
      %v5136 = vpack.c.b16 %v5104, %v5104
      %v5137 = vpack.c.b16 %v5105, %v5105
      %v5138 = vpack.c.b16 %v5106, %v5106
      %v5139 = vpack.c.b16 %v5107, %v5107
      %v5140 = vpack.c.b16 %v5108, %v5108
      %v5141 = vpack.c.b16 %v5109, %v5109
      %v5142 = vpack.c.b16 %v5110, %v5110
      %v5143 = vpack.c.b16 %v5111, %v5111
      %v5144 = vpack.c.b16 %v5112, %v5112
      %v5145 = vpack.c.b16 %v5113, %v5113
      %v5146 = vpack.c.b16 %v5114, %v5114
      %v5147 = vpack.c.b16 %v5115, %v5115
      %v5148 = vpack.c.b16 %v5116, %v5116
      %v5149 = vpack.c.b16 %v5117, %v5117
      %v5150 = vpack.c.b16 %v5118, %v5118
      %v5151 = vpack.c.b16 %v5119, %v5119
      %v5152 = vpack.c.b16 %v5120, %v5120
      %v5153 = vpack.c.b16 %v5121, %v5121
      %v5154 = vpack.c.b16 %v5122, %v5122
      %v5155 = vpack.c.b16 %v5123, %v5123
      %v5156 = vpack.c.b16 %v5124, %v5124
      %v5157 = vpack.c.b16 %v5125, %v5125
      %v5158 = vpack.c.b16 %v5126, %v5126
      %v5159 = vpack.c.b16 %v5127, %v5127
      %v5160 = vpack.c.b16 %v5128, %v5128
      %v5161 = vpack.c.b16 %v5129, %v5129
      %v5162 = vpack.c.b16 %v5130, %v5130
      %v5163 = vpack.c.b16 %v5131, %v5131
      %v5164 = vpack.c.b16 %v5132, %v5132
      %v5165 = vpack.c.b16 %v5133, %v5133
      %v5166 = vpack.c.b16 %v5134, %v5134
      %v5167 = vpack.c.b16 %v5135, %v5135
      %vm5200 = vcmask 388096
      %5201 = vst.msk [vmem:[%s367] sm:$0xf] %vm5200, %v5136
      %5202 = vst.msk [vmem:[%s367 + $0x4] sm:$0xf] %vm5200, %v5137
      %5203 = vst.msk [vmem:[%s367 + $0x8] sm:$0xf] %vm5200, %v5138
      %5204 = vst.msk [vmem:[%s367 + $0xc] sm:$0xf] %vm5200, %v5139
      %5205 = vst.msk [vmem:[%s367 + $0x10] sm:$0xf] %vm5200, %v5140
      %5206 = vst.msk [vmem:[%s367 + $0x14] sm:$0xf] %vm5200, %v5141
      %5207 = vst.msk [vmem:[%s367 + $0x18] sm:$0xf] %vm5200, %v5142
      %5208 = vst.msk [vmem:[%s367 + $0x1c] sm:$0xf] %vm5200, %v5143
      %5209 = vst.msk [vmem:[%s367 + $0x20] sm:$0xf] %vm5200, %v5144
      %5210 = vst.msk [vmem:[%s367 + $0x24] sm:$0xf] %vm5200, %v5145
      %5211 = vst.msk [vmem:[%s367 + $0x28] sm:$0xf] %vm5200, %v5146
      %5212 = vst.msk [vmem:[%s367 + $0x2c] sm:$0xf] %vm5200, %v5147
      %5213 = vst.msk [vmem:[%s367 + $0x30] sm:$0xf] %vm5200, %v5148
      %5214 = vst.msk [vmem:[%s367 + $0x34] sm:$0xf] %vm5200, %v5149
      %5215 = vst.msk [vmem:[%s367 + $0x38] sm:$0xf] %vm5200, %v5150
      %5216 = vst.msk [vmem:[%s367 + $0x3c] sm:$0xf] %vm5200, %v5151
      %5217 = vst.msk [vmem:[%s367 + $0x40] sm:$0xf] %vm5200, %v5152
      %5218 = vst.msk [vmem:[%s367 + $0x44] sm:$0xf] %vm5200, %v5153
      %5219 = vst.msk [vmem:[%s367 + $0x48] sm:$0xf] %vm5200, %v5154
      %5220 = vst.msk [vmem:[%s367 + $0x4c] sm:$0xf] %vm5200, %v5155
      %5221 = vst.msk [vmem:[%s367 + $0x50] sm:$0xf] %vm5200, %v5156
      %5222 = vst.msk [vmem:[%s367 + $0x54] sm:$0xf] %vm5200, %v5157
      %5223 = vst.msk [vmem:[%s367 + $0x58] sm:$0xf] %vm5200, %v5158
      %5224 = vst.msk [vmem:[%s367 + $0x5c] sm:$0xf] %vm5200, %v5159
      %5225 = vst.msk [vmem:[%s367 + $0x60] sm:$0xf] %vm5200, %v5160
      %5226 = vst.msk [vmem:[%s367 + $0x64] sm:$0xf] %vm5200, %v5161
      %5227 = vst.msk [vmem:[%s367 + $0x68] sm:$0xf] %vm5200, %v5162
      %5228 = vst.msk [vmem:[%s367 + $0x6c] sm:$0xf] %vm5200, %v5163
      %5229 = vst.msk [vmem:[%s367 + $0x70] sm:$0xf] %vm5200, %v5164
      %5230 = vst.msk [vmem:[%s367 + $0x74] sm:$0xf] %vm5200, %v5165
      %5231 = vst.msk [vmem:[%s367 + $0x78] sm:$0xf] %vm5200, %v5166
      %5232 = vst.msk [vmem:[%s367 + $0x7c] sm:$0xf] %vm5200, %v5167
      %s5233 = smul.u32 32, %s25
      %p5234 = scmp.lt.s32.totalorder %s24, 1
      %s5235 = scalar_select %p5234, %s24, 1
      %p5236 = scmp.lt.s32.totalorder %s5233, 31
      %s5237 = scalar_select %p5236, %s5233, 31
      %s5238 = smul.addr %s5237, 2
      %s5239 = smul.addr %s5235, 64
      %s5240 = sadd.s32 %s5238, %s5239
      %s5241 = smul.addr %s5240, 4
      %s5242 = scalar_lea.vmem %s7, %s5241
      %s5243 = smul.u32 32, %s25
      %p5244 = scmp.lt.s32.totalorder %s24, 1
      %s5245 = scalar_select %p5244, %s24, 1
      %p5246 = scmp.lt.s32.totalorder %s5243, 31
      %s5247 = scalar_select %p5246, %s5243, 31
      %s5248 = smul.addr %s5245, 32
      %s5249 = sadd.s32 %s5247, %s5248
      %s5250 = smul.addr %s5249, 4
      %s5251 = scalar_lea.vmem %s8, %s5250
      // Predicated region
      $region49: #{tpu_custom_call.1} parent=47 // pred_check
        %p5252 = pneg %p209
      $region50: #{tpu_custom_call.1} parent=47 // pred_check_branch
        %5254 = sbr.rel (%p5252) target = $region52
      $region51: #{tpu_custom_call.1} parent=47 // pred_region
        %s5255 = smul.u32 32, %s25
      $region52: #{tpu_custom_call.1} parent=47 // pred_fallthru
        _
      // Predicated region
      $region53: #{tpu_custom_call.1} parent=47 // pred_check
        %p5256 = pneg %p237
      $region54: #{tpu_custom_call.1} parent=47 // pred_check_branch
        %5258 = sbr.rel (%p5256) target = $region56
      $region55: #{tpu_custom_call.1} parent=47 // pred_region
        %s5259 = smul.u32 32, %s25
      $region56: #{tpu_custom_call.1} parent=47 // pred_fallthru
        _
    $region48: #{tpu_custom_call.1} parent=5 // pred_fallthru
      _
    %p5260 = scmp.le.s32.totalorder 2, %s15
    // Predicated region
    $region57: #{tpu_custom_call.1} parent=5 // pred_check
      %p5261 = pneg %p5260
    $region58: #{tpu_custom_call.1} parent=5 // pred_check_branch
      %5263 = sbr.rel (%p5261) target = $region60
    $region59: #{tpu_custom_call.1} parent=5 // pred_region
      %s5264 = ssub.s32 %s15, 2
      // Predicated region
      $region61: #{tpu_custom_call.1} parent=59 // pred_check
        %p5265 = pneg %p215
      $region62: #{tpu_custom_call.1} parent=59 // pred_check_branch
        %5267 = sbr.rel (%p5265) target = $region64
      $region63: #{tpu_custom_call.1} parent=59 // pred_region
        %s5268 = smul.u32 32, %s27
        %p5269 = scmp.lt.s32.totalorder %s26, 1
        %s5270 = scalar_select %p5269, %s26, 1
        %p5271 = scmp.lt.s32.totalorder %s5268, 31
        %s5272 = scalar_select %p5271, %s5268, 31
        %s5273 = smul.addr %s5272, 2
        %s5274 = smul.addr %s5270, 64
        %s5275 = sadd.s32 %s5273, %s5274
        %s5276 = smul.addr %s5275, 4
        %s5277 = scalar_lea.vmem %s7, %s5276
      $region64: #{tpu_custom_call.1} parent=59 // pred_fallthru
        _
      // Predicated region
      $region65: #{tpu_custom_call.1} parent=59 // pred_check
        %p5278 = pneg %p243
      $region66: #{tpu_custom_call.1} parent=59 // pred_check_branch
        %5280 = sbr.rel (%p5278) target = $region68
      $region67: #{tpu_custom_call.1} parent=59 // pred_region
        %s5281 = smul.u32 32, %s27
        %p5282 = scmp.lt.s32.totalorder %s26, 1
        %s5283 = scalar_select %p5282, %s26, 1
        %p5284 = scmp.lt.s32.totalorder %s5281, 31
        %s5285 = scalar_select %p5284, %s5281, 31
        %s5286 = smul.addr %s5283, 32
        %s5287 = sadd.s32 %s5285, %s5286
        %s5288 = smul.addr %s5287, 4
        %s5289 = scalar_lea.vmem %s8, %s5288
      $region68: #{tpu_custom_call.1} parent=59 // pred_fallthru
        _
    $region60: #{tpu_custom_call.1} parent=5 // pred_fallthru
      _
  $region6: #{tpu_custom_call.1} parent=0 // loop_footer
    %s19 = sadd.s32 1, %s15
  $region7: #{tpu_custom_call.1} parent=0 // loop_footer_branch
    %14 = sbr.rel target = $region3
  $region8: #{tpu_custom_call.1} parent=0 // loop_exit
    _

</llo_original>
